<compile_context>
chip_gen: v6e
topology: v6e:2x2x1
jax: 0.10.0
libtpu: 0.0.40
codegen_flags: <defaults>
</compile_context>

<pallas_src>
import jax
import jax.numpy as jnp
import numpy as np
from jax import lax
from jax.experimental import pallas as pl
from jax.experimental.pallas import tpu as pltpu


def _round_up(x, m):
    return ((x + m - 1) // m) * m


def _proj_chunk_rows(H, W):
    """Rows per projection chunk (static): bounds the (rows*W, D) f32 transient."""
    target_spatial_rows = 128
    th = max(1, min(H, target_spatial_rows // max(W, 1)))
    while H % th:               # keep it a divisor of H so the pl.loop tiles exactly
        th -= 1
    return th


def cc_kernel(x_ref, w_ref, b_ref, gamma_ref, o_ref, qkv_ref):
    """Per-batch-element criss-cross attention.

    x_ref block : (H, W, CP) bf16 (batch dim squeezed; channels zero-padded to CP)
    w_ref       : (CP, 2*P + CP) bf16 fused [wq | wk | wv] (zero-padded)
    b_ref       : (1, 2*P + CP)  f32 fused bias
    gamma_ref   : (1, 1) f32 in SMEM
    o_ref block : (H, W, CP) f32
    qkv_ref     : (H, W, 2*P + CP) bf16 VMEM scratch (fused projection result)
    """
    H, W, CP = x_ref.shape
    D = w_ref.shape[1]
    P = (D - CP) // 2                                      # padded q/k width (=128)

    w = w_ref[...]                                         # (CP, D) bf16
    b = b_ref[...]                                         # (1, D)  f32

    # ---- Fused q/k/v projection, chunked over row blocks so the f32 matmul
    # ---- transient stays small (feedback: bound the (H*W, D) f32 accumulator).
    TH = _proj_chunk_rows(H, W)

    @pl.loop(0, H // TH)
    def _(ci):
        h0 = pl.multiple_of(ci * TH, TH)
        xc = x_ref[pl.ds(h0, TH)]                          # (TH, W, CP) bf16
        r = jnp.dot(xc.reshape(TH * W, CP), w,
                    preferred_element_type=jnp.float32) + b
        qkv_ref[pl.ds(h0, TH)] = r.astype(jnp.bfloat16).reshape(TH, W, D)

    q = qkv_ref[:, :, :P]                                  # (H, W, P)  bf16
    k = qkv_ref[:, :, P:2 * P]                             # (H, W, P)  bf16
    v = qkv_ref[:, :, 2 * P:]                              # (H, W, CP) bf16

    # Additive diagonal mask for the H-branch energies.  Finite large negative so
    # the degenerate H == 1 case stays NaN-free (unlike -inf + max-subtract).
    ii = lax.broadcasted_iota(jnp.int32, (H, H), 0)
    jj = lax.broadcasted_iota(jnp.int32, (H, H), 1)
    diag_mask = jnp.where(ii == jj, jnp.float32(-1e30), jnp.float32(0.0))

    def softmax_last(e):                                   # f32 in, f32 out
        e = e - jnp.max(e, axis=-1, keepdims=True)
        p = jnp.exp(e)
        return p * pl.reciprocal(jnp.sum(p, axis=-1, keepdims=True), approx=True)

    # ---------- W-direction (row) attention: native h-leading layout ----------
    eW = jnp.einsum('hwc,hgc->hwg', q, k,
                    preferred_element_type=jnp.float32)    # (H, W, W)
    aW = softmax_last(eW).astype(jnp.bfloat16)
    out = jnp.einsum('hwg,hgc->hwc', aW, v,
                     preferred_element_type=jnp.float32)   # (H, W, CP) f32 accumulator

    # ---------- H-direction (column) attention ----------
    # Only the (much smaller) bf16 q/k/v slabs are transposed to w-leading; the
    # second fused projection and the f32 x-transpose of the old kernel are gone.
    qT = jnp.transpose(q, (1, 0, 2))                       # (W, H, P)  bf16
    kT = jnp.transpose(k, (1, 0, 2))                       # (W, H, P)  bf16
    vT = jnp.transpose(v, (1, 0, 2))                       # (W, H, CP) bf16
    eHt = jnp.einsum('whc,wgc->whg', qT, kT,
                     preferred_element_type=jnp.float32)   # (W, H, H)
    aHt = softmax_last(eHt + diag_mask[None, :, :]).astype(jnp.bfloat16)
    outHt = jnp.einsum('whg,wgc->whc', aHt, vT,
                       preferred_element_type=jnp.float32) # (W, H, CP) f32
    out = out + jnp.transpose(outHt, (1, 0, 2))            # accumulate in (H, W, CP)

    # Fused epilogue: y = gamma * (out_H + out_W) + x, residual re-read from x_ref
    # (no separate f32 copy of x kept live through the kernel).
    gamma = gamma_ref[0, 0]
    o_ref[...] = (gamma * out + x_ref[...].astype(jnp.float32)).astype(o_ref.dtype)


def cc_module_forward(x_nchw, params):
    """Wrapper: NCHW in / NCHW out.  Kernel runs NHWC (channel-padded, bf16), grid over batch."""
    B, C, H, W = x_nchw.shape
    C8 = params["wq"].shape[1]
    P = _round_up(max(C8, 1), 128)            # padded q/k projection width
    CP = _round_up(C, 128)                    # padded channel width (lane-dense)
    D = 2 * P + CP

    # TODO(synk): carry NHWC (pre-padded, bf16) activations through the surrounding
    # model so these two full HBM passes (transpose+pad in, slice+transpose out)
    # disappear; at small sizes they cost as much as the kernel itself.
    x_nhwc = jnp.transpose(x_nchw, (0, 2, 3, 1))
    if CP != C:
        x_nhwc = jnp.pad(x_nhwc, ((0, 0), (0, 0), (0, 0), (0, CP - C)))
    x_nhwc = x_nhwc.astype(jnp.bfloat16)      # bf16 I/O: halves input DMA; matmuls are bf16 anyway

    def pad2(wmat, rows, cols):
        return jnp.pad(wmat, ((0, rows - wmat.shape[0]), (0, cols - wmat.shape[1])))

    # Fused, zero-padded projection weights / bias: [q | k | v].
    w_fused = jnp.concatenate(
        [pad2(params["wq"], CP, P),
         pad2(params["wk"], CP, P),
         pad2(params["wv"], CP, CP)], axis=1).astype(jnp.bfloat16)   # (CP, D)
    b_fused = jnp.concatenate(
        [jnp.pad(params["bq"], (0, P - C8)),
         jnp.pad(params["bk"], (0, P - C8)),
         jnp.pad(params["bv"], (0, CP - C))]).reshape(1, D).astype(jnp.float32)

    # TODO(synk): for production DinkNet sizes (e.g. C=512, H=W=64) split into two
    # pallas_calls (H-branch tiled over W columns, W-branch tiled over H rows, with
    # the residual fused into the second via input_output_aliases) so each block
    # fits v7x's 64 MiB VMEM and both TensorCores get several pipelined steps; on
    # v6e the vmem limit below could instead be raised toward ~100 MiB.
    out_nhwc = pl.pallas_call(
        cc_kernel,
        out_shape=jax.ShapeDtypeStruct((B, H, W, CP), jnp.float32),
        grid=(B,),
        in_specs=[
            pl.BlockSpec((None, H, W, CP), lambda bb: (bb, 0, 0, 0)),  # x (bf16, padded)
            pl.BlockSpec((CP, D), lambda bb: (0, 0)),                  # fused weights
            pl.BlockSpec((1, D), lambda bb: (0, 0)),                   # fused bias
            pl.BlockSpec(memory_space=pltpu.MemorySpace.SMEM),         # gamma scalar
        ],
        out_specs=pl.BlockSpec((None, H, W, CP), lambda bb: (bb, 0, 0, 0)),
        scratch_shapes=[pltpu.VMEM((H, W, D), jnp.bfloat16)],          # fused qkv (bf16)
        compiler_params=pltpu.CompilerParams(
            dimension_semantics=("parallel",),
            vmem_limit_bytes=48 * 1024 * 1024),
    )(x_nhwc, w_fused, b_fused, params["gamma"].reshape(1, 1))

    out = out_nhwc[..., :C]                                # drop channel padding
    return jnp.transpose(out, (0, 3, 1, 2))


def cc_reference(x_nchw, params):
    """Pure-JAX reference mirroring the PyTorch math (for validation)."""
    hp = lax.Precision.HIGHEST
    wq, bq = params["wq"], params["bq"]
    wk, bk = params["wk"], params["bk"]
    wv, bv = params["wv"], params["bv"]
    gamma = params["gamma"][0]
    B, C, H, W = x_nchw.shape

    def conv1x1(x, w, b):   # w: (C_in, C_out)
        return jnp.einsum("bchw,cd->bdhw", x, w, precision=hp) + b.reshape(1, -1, 1, 1)

    q = conv1x1(x_nchw, wq, bq)
    k = conv1x1(x_nchw, wk, bk)
    v = conv1x1(x_nchw, wv, bv)

    eH = jnp.einsum("bchw,bcgw->bhwg", q, k, precision=hp)
    diag = jnp.eye(H, dtype=bool)[None, :, None, :]
    eH = jnp.where(diag, -jnp.inf, eH)
    aH = jax.nn.softmax(eH, axis=-1)
    eW = jnp.einsum("bchw,bchg->bhwg", q, k, precision=hp)
    aW = jax.nn.softmax(eW, axis=-1)
    outH = jnp.einsum("bhwg,bcgw->bchw", aH, v, precision=hp)
    outW = jnp.einsum("bhwg,bchg->bchw", aW, v, precision=hp)
    return gamma * (outH + outW) + x_nchw


def init_params(key, in_dim):
    c8 = in_dim // 8
    k1, k2, k3, k4, k5, k6 = jax.random.split(key, 6)
    scale = 0.1
    return {
        "wq": scale * jax.random.normal(k1, (in_dim, c8), jnp.float32),
        "bq": scale * jax.random.normal(k2, (c8,), jnp.float32),
        "wk": scale * jax.random.normal(k3, (in_dim, c8), jnp.float32),
        "bk": scale * jax.random.normal(k4, (c8,), jnp.float32),
        "wv": scale * jax.random.normal(k5, (in_dim, in_dim), jnp.float32),
        "bv": scale * jax.random.normal(k6, (in_dim,), jnp.float32),
        # PyTorch init is zeros(1); use a nonzero deterministic value so the
        # attention path is exercised (gamma=0 would make the output == x).
        "gamma": jnp.array([0.1], jnp.float32),
    }


if __name__ == "__main__":
    B, C, H, W = 2, 64, 16, 16
    key = jax.random.PRNGKey(0)
    kx, kp = jax.random.split(key)
    x = jax.random.normal(kx, (B, C, H, W), jnp.float32)
    params = init_params(kp, C)

    out = cc_module_forward(x, params)
    out = jax.block_until_ready(out)

    ref = jax.block_until_ready(cc_reference(x, params))
    np.testing.assert_allclose(np.asarray(out), np.asarray(ref), rtol=2e-2, atol=2e-2)

    print("KERNEL_OK")
</pallas_src>

<mosaic_0001>
module attributes {stable_mosaic.version = 11 : i64} {
  func.func @cc_kernel(%arg0: i32, %arg1: memref<1x16x16x128xbf16, #tpu.memory_space<vmem>>, %arg2: memref<128x384xbf16, #tpu.memory_space<vmem>>, %arg3: memref<1x384xf32, #tpu.memory_space<vmem>>, %arg4: memref<1x1xf32, #tpu.memory_space<smem>>, %arg5: memref<1x16x16x128xf32, #tpu.memory_space<vmem>>, %arg6: memref<16x16x384xbf16, #tpu.memory_space<vmem>>) attributes {dimension_semantics = [#tpu.dimension_semantics<parallel>], iteration_bounds = array<i64: 2>, scalar_prefetch = 0 : i64, scratch_operands = 1 : i64, tpu.core_type = #tpu.core_type<tc>, window_params = [{transform_indices = @transform_0, window_bounds = array<i64: 1, 16, 16, 128>}, {pipeline_mode = #tpu.pipeline_mode<synchronous>, transform_indices = @transform_1, window_bounds = array<i64: 128, 384>}, {pipeline_mode = #tpu.pipeline_mode<synchronous>, transform_indices = @transform_2, window_bounds = array<i64: 1, 384>}, {transform_indices = @transform_3, window_bounds = array<i64: 1, 1>}, {transform_indices = @transform_4, window_bounds = array<i64: 1, 16, 16, 128>}]} {
    %c0 = arith.constant 0 : index
    %c0_0 = arith.constant 0 : index
    %0 = vector.load %arg2[%c0, %c0_0] : memref<128x384xbf16, #tpu.memory_space<vmem>>, vector<128x384xbf16>
    %c0_1 = arith.constant 0 : index
    %c0_2 = arith.constant 0 : index
    %1 = vector.load %arg3[%c0_1, %c0_2] : memref<1x384xf32, #tpu.memory_space<vmem>>, vector<1x384xf32>
    %c0_i32 = arith.constant 0 : i32
    %c2_i32 = arith.constant 2 : i32
    %2 = arith.addi %c0_i32, %c2_i32 : i32
    %c1_i32 = arith.constant 1 : i32
    scf.for %arg7 = %c0_i32 to %2 step %c1_i32  : i32 {
      %c1_i32_30 = arith.constant 1 : i32
      %56 = arith.muli %arg7, %c1_i32_30 : i32
      %c0_i32_31 = arith.constant 0 : i32
      %57 = arith.addi %c0_i32_31, %56 : i32
      %c8_i32 = arith.constant 8 : i32
      %58 = arith.muli %57, %c8_i32 : i32
      %59 = tpu.assume_multiple %58, 8 : i32
      %c0_32 = arith.constant 0 : index
      %60 = arith.index_cast %59 : i32 to index
      %c0_33 = arith.constant 0 : index
      %c0_34 = arith.constant 0 : index
      %61 = vector.load %arg1[%c0_32, %60, %c0_33, %c0_34] : memref<1x16x16x128xbf16, #tpu.memory_space<vmem>>, vector<1x8x16x128xbf16>
      %62 = vector.shape_cast %61 : vector<1x8x16x128xbf16> to vector<8x16x128xbf16>
      %63 = vector.shape_cast %62 : vector<8x16x128xbf16> to vector<128x128xbf16>
      %cst_35 = arith.constant dense<0.000000e+00> : vector<128x384xf32>
      %64 = tpu.matmul %63, %0, %cst_35 {dimension_numbers = #tpu.dot_dimension_numbers<[1], [0], [0], [1], [0, 0, 1, 1], [], []>} : vector<128x128xbf16>, vector<128x384xbf16>, vector<128x384xf32> -> vector<128x384xf32>
      %65 = vector.broadcast %1 : vector<1x384xf32> to vector<128x384xf32>
      %66 = arith.addf %64, %65 : vector<128x384xf32>
      %67 = arith.truncf %66 : vector<128x384xf32> to vector<128x384xbf16>
      %68 = vector.shape_cast %67 : vector<128x384xbf16> to vector<8x16x384xbf16>
      %69 = arith.index_cast %59 : i32 to index
      %c0_36 = arith.constant 0 : index
      %c0_37 = arith.constant 0 : index
      %70 = vector.load %arg6[%69, %c0_36, %c0_37] : memref<16x16x384xbf16, #tpu.memory_space<vmem>>, vector<8x16x384xbf16>
      tpu.vector_store %arg6[%69, %c0_36, %c0_37], %68 {strides = array<i32>} : memref<16x16x384xbf16, #tpu.memory_space<vmem>>, vector<8x16x384xbf16>,
    }
    %c2_i32_3 = arith.constant 2 : i32
    %c0_4 = arith.constant 0 : index
    %c0_5 = arith.constant 0 : index
    %c0_6 = arith.constant 0 : index
    %3 = vector.load %arg6[%c0_4, %c0_5, %c0_6] : memref<16x16x384xbf16, #tpu.memory_space<vmem>>, vector<16x16x128xbf16>
    %c0_7 = arith.constant 0 : index
    %c0_8 = arith.constant 0 : index
    %c128 = arith.constant 128 : index
    %4 = vector.load %arg6[%c0_7, %c0_8, %c128] : memref<16x16x384xbf16, #tpu.memory_space<vmem>>, vector<16x16x128xbf16>
    %c0_9 = arith.constant 0 : index
    %c0_10 = arith.constant 0 : index
    %c256 = arith.constant 256 : index
    %5 = vector.load %arg6[%c0_9, %c0_10, %c256] : memref<16x16x384xbf16, #tpu.memory_space<vmem>>, vector<16x16x128xbf16>
    %6 = tpu.iota {dimensions = array<i32: 0>} : vector<16x16xi32>
    %7 = tpu.iota {dimensions = array<i32: 1>} : vector<16x16xi32>
    %8 = arith.cmpi eq, %6, %7 : vector<16x16xi32>
    %cst = arith.constant -1.000000e+30 : f32
    %cst_11 = arith.constant 0.000000e+00 : f32
    %9 = vector.broadcast %cst : f32 to vector<16x16xf32>
    %10 = vector.broadcast %cst_11 : f32 to vector<16x16xf32>
    %11 = arith.select %8, %9, %10 : vector<16x16xi1>, vector<16x16xf32>
    "tpu.trace_start"() <{level = 10 : i32, message = "hwc,hgc->hwg"}> : () -> ()
    %cst_12 = arith.constant dense<0.000000e+00> : vector<16x16x16xf32>
    %12 = tpu.matmul %3, %4, %cst_12 {dimension_numbers = #tpu.dot_dimension_numbers<[2], [2], [1], [1], [0, 0, 0, 1, 1, 1], [0], [0]>} : vector<16x16x128xbf16>, vector<16x16x128xbf16>, vector<16x16x16xf32> -> vector<16x16x16xf32>
    "tpu.trace_stop"() : () -> ()
    %cst_13 = arith.constant dense<0xFF800000> : vector<16x16xf32>
    %13 = vector.multi_reduction <maximumf>, %12, %cst_13 [2] : vector<16x16x16xf32> to vector<16x16xf32>
    %14 = vector.shape_cast %13 : vector<16x16xf32> to vector<16x16x1xf32>
    %15 = vector.broadcast %14 : vector<16x16x1xf32> to vector<16x16x16xf32>
    %16 = arith.subf %12, %15 : vector<16x16x16xf32>
    %17 = math.exp %16 : vector<16x16x16xf32>
    %cst_14 = arith.constant dense<0.000000e+00> : vector<16x16xf32>
    %18 = vector.multi_reduction <add>, %17, %cst_14 [2] : vector<16x16x16xf32> to vector<16x16xf32>
    %19 = vector.shape_cast %18 : vector<16x16xf32> to vector<16x16x1xf32>
    %20 = tpu.reciprocal %19 {approx = true} : vector<16x16x1xf32> -> vector<16x16x1xf32>
    %21 = vector.broadcast %20 : vector<16x16x1xf32> to vector<16x16x16xf32>
    %22 = arith.mulf %17, %21 : vector<16x16x16xf32>
    %23 = arith.truncf %22 : vector<16x16x16xf32> to vector<16x16x16xbf16>
    "tpu.trace_start"() <{level = 10 : i32, message = "hwg,hgc->hwc"}> : () -> ()
    %cst_15 = arith.constant dense<0.000000e+00> : vector<16x16x128xf32>
    %24 = tpu.matmul %23, %5, %cst_15 {dimension_numbers = #tpu.dot_dimension_numbers<[2], [1], [1], [2], [0, 0, 0, 1, 1, 2], [0], [0]>} : vector<16x16x16xbf16>, vector<16x16x128xbf16>, vector<16x16x128xf32> -> vector<16x16x128xf32>
    "tpu.trace_stop"() : () -> ()
    %25 = tpu.transpose %3, [1, 0, 2] : vector<16x16x128xbf16> -> vector<16x16x128xbf16>
    %26 = tpu.transpose %4, [1, 0, 2] : vector<16x16x128xbf16> -> vector<16x16x128xbf16>
    %27 = tpu.transpose %5, [1, 0, 2] : vector<16x16x128xbf16> -> vector<16x16x128xbf16>
    "tpu.trace_start"() <{level = 10 : i32, message = "whc,wgc->whg"}> : () -> ()
    %cst_16 = arith.constant dense<0.000000e+00> : vector<16x16x16xf32>
    %28 = tpu.matmul %25, %26, %cst_16 {dimension_numbers = #tpu.dot_dimension_numbers<[2], [2], [1], [1], [0, 0, 0, 1, 1, 1], [0], [0]>} : vector<16x16x128xbf16>, vector<16x16x128xbf16>, vector<16x16x16xf32> -> vector<16x16x16xf32>
    "tpu.trace_stop"() : () -> ()
    %29 = vector.shape_cast %11 : vector<16x16xf32> to vector<1x16x16xf32>
    %30 = vector.broadcast %29 : vector<1x16x16xf32> to vector<16x16x16xf32>
    %31 = arith.addf %28, %30 : vector<16x16x16xf32>
    %cst_17 = arith.constant dense<0xFF800000> : vector<16x16xf32>
    %32 = vector.multi_reduction <maximumf>, %31, %cst_17 [2] : vector<16x16x16xf32> to vector<16x16xf32>
    %33 = vector.shape_cast %32 : vector<16x16xf32> to vector<16x16x1xf32>
    %34 = vector.broadcast %33 : vector<16x16x1xf32> to vector<16x16x16xf32>
    %35 = arith.subf %31, %34 : vector<16x16x16xf32>
    %36 = math.exp %35 : vector<16x16x16xf32>
    %cst_18 = arith.constant dense<0.000000e+00> : vector<16x16xf32>
    %37 = vector.multi_reduction <add>, %36, %cst_18 [2] : vector<16x16x16xf32> to vector<16x16xf32>
    %38 = vector.shape_cast %37 : vector<16x16xf32> to vector<16x16x1xf32>
    %39 = tpu.reciprocal %38 {approx = true} : vector<16x16x1xf32> -> vector<16x16x1xf32>
    %40 = vector.broadcast %39 : vector<16x16x1xf32> to vector<16x16x16xf32>
    %41 = arith.mulf %36, %40 : vector<16x16x16xf32>
    %42 = arith.truncf %41 : vector<16x16x16xf32> to vector<16x16x16xbf16>
    "tpu.trace_start"() <{level = 10 : i32, message = "whg,wgc->whc"}> : () -> ()
    %cst_19 = arith.constant dense<0.000000e+00> : vector<16x16x128xf32>
    %43 = tpu.matmul %42, %27, %cst_19 {dimension_numbers = #tpu.dot_dimension_numbers<[2], [1], [1], [2], [0, 0, 0, 1, 1, 2], [0], [0]>} : vector<16x16x16xbf16>, vector<16x16x128xbf16>, vector<16x16x128xf32> -> vector<16x16x128xf32>
    "tpu.trace_stop"() : () -> ()
    %44 = tpu.transpose %43, [1, 0, 2] : vector<16x16x128xf32> -> vector<16x16x128xf32>
    %45 = arith.addf %24, %44 : vector<16x16x128xf32>
    %c0_20 = arith.constant 0 : index
    %c0_21 = arith.constant 0 : index
    %46 = memref.load %arg4[%c0_20, %c0_21] : memref<1x1xf32, #tpu.memory_space<smem>>
    %47 = vector.broadcast %46 : f32 to vector<16x16x128xf32>
    %48 = arith.mulf %47, %45 : vector<16x16x128xf32>
    %c0_22 = arith.constant 0 : index
    %c0_23 = arith.constant 0 : index
    %c0_24 = arith.constant 0 : index
    %c0_25 = arith.constant 0 : index
    %49 = vector.load %arg1[%c0_22, %c0_23, %c0_24, %c0_25] : memref<1x16x16x128xbf16, #tpu.memory_space<vmem>>, vector<1x16x16x128xbf16>
    %50 = vector.shape_cast %49 : vector<1x16x16x128xbf16> to vector<16x16x128xbf16>
    %51 = arith.extf %50 : vector<16x16x128xbf16> to vector<16x16x128xf32>
    %52 = arith.addf %48, %51 : vector<16x16x128xf32>
    %c0_26 = arith.constant 0 : index
    %c0_27 = arith.constant 0 : index
    %c0_28 = arith.constant 0 : index
    %c0_29 = arith.constant 0 : index
    %53 = vector.load %arg5[%c0_26, %c0_27, %c0_28, %c0_29] : memref<1x16x16x128xf32, #tpu.memory_space<vmem>>, vector<1x16x16x128xf32>
    %54 = vector.shape_cast %53 : vector<1x16x16x128xf32> to vector<16x16x128xf32>
    %55 = vector.shape_cast %52 : vector<16x16x128xf32> to vector<1x16x16x128xf32>
    tpu.vector_store %arg5[%c0_26, %c0_27, %c0_28, %c0_29], %55 {strides = array<i32>} : memref<1x16x16x128xf32, #tpu.memory_space<vmem>>, vector<1x16x16x128xf32>,
    return
  }
  func.func @transform_0(%arg0: i32) -> (i32, i32, i32, i32) {
    %c0_i32 = arith.constant 0 : i32
    %c0_i32_0 = arith.constant 0 : i32
    %c0_i32_1 = arith.constant 0 : i32
    %c0_i32_2 = arith.constant 0 : i32
    return %arg0, %c0_i32, %c0_i32_0, %c0_i32_1 : i32, i32, i32, i32
  }
  func.func @transform_1(%arg0: i32) -> (i32, i32) {
    %c0_i32 = arith.constant 0 : i32
    %c0_i32_0 = arith.constant 0 : i32
    %c0_i32_1 = arith.constant 0 : i32
    return %c0_i32, %c0_i32_0 : i32, i32
  }
  func.func @transform_2(%arg0: i32) -> (i32, i32) {
    %c0_i32 = arith.constant 0 : i32
    %c0_i32_0 = arith.constant 0 : i32
    %c0_i32_1 = arith.constant 0 : i32
    return %c0_i32, %c0_i32_0 : i32, i32
  }
  func.func @transform_3(%arg0: i32) -> (i32, i32) {
    %c0_i32 = arith.constant 0 : i32
    %c0_i32_0 = arith.constant 0 : i32
    %c0_i32_1 = arith.constant 0 : i32
    return %c0_i32, %c0_i32_0 : i32, i32
  }
  func.func @transform_4(%arg0: i32) -> (i32, i32, i32, i32) {
    %c0_i32 = arith.constant 0 : i32
    %c0_i32_0 = arith.constant 0 : i32
    %c0_i32_1 = arith.constant 0 : i32
    %c0_i32_2 = arith.constant 0 : i32
    return %arg0, %c0_i32, %c0_i32_0, %c0_i32_1 : i32, i32, i32, i32
  }
}

</mosaic_0001>

<llo_original>
// kernel: tpu_custom_call.1
$region0: #{tpu_custom_call.1}
  #allocation0 [shape = 'u32[]', space=smem, size = 0x4, offset = 0x4, fixed_abs, tag = 'smem constant byte address 0x4 - core index']
  #allocation1 [shape = 'u32[144,128]{1,0:T(1,128)}', space=vmem, size = 0x12000, scoped, tag = 'internal scratch']
  #allocation2 [shape = 'bf16[16,16,384]{2,1,0:T(8,128)(2,1)}', space=vmem, size = 0x30000, scoped, tag = 'scratch operand']
  #allocation3 [shape = 'f32[1,1]{1,0:T(1,128)S(6)}', space=smem, size = 0x200, scoped, tag = 'scoped memory for tpu_custom_call.1']
  %s0 = inlined_call_operand.hbm [shape: bf16[2,16,16,128], index: 0, kind: input, shape index: {}]
  %s1 = inlined_call_operand.hbm [shape: bf16[128,384], index: 1, kind: input, shape index: {}]
  %s2 = inlined_call_operand.vmem [shape: f32[1,384], index: 2, kind: input, shape index: {}]
  %s3 = inlined_call_operand.<no memory space> [shape: f32[1,1], index: 3, kind: input, shape index: {}]
  %s4 = inlined_call_operand.hbm [shape: f32[2,16,16,128], index: 4, kind: output, shape index: {}]
  %s5 = sld [smem:[#allocation0]]
  $region64: #{tpu_custom_call.1} parent=0
    _
  %s7 = ssub.s32 1, %s5
  %s8 = scalar_select 0, %s7, %s5
  %9 = sst [smem:[#allocation3]] %s3
  $region1: #{tpu_custom_call.1} parent=0
    #allocation4 [shape = 'u8[131072]{0}', space=vmem, size = 0x20000, scoped, tag = 'input window, operand 0']
    #allocation5 [shape = 's32[2]{0}', space=sflag, size = 0x8, scoped, tag = 'scoped memory for tpu_custom_call.1']
    #allocation6 [shape = 's32[2]{0}', space=sflag, size = 0x8, scoped, tag = 'scoped memory for tpu_custom_call.1']
    #allocation7 [shape = 'u8[98304]{0}', space=vmem, size = 0x18000, scoped, tag = 'input window, operand 1, single buffered']
    #allocation8 [shape = 's32[1]{0}', space=sflag, size = 0x4, scoped, tag = 'scoped memory for tpu_custom_call.1']
    #allocation9 [shape = 'u8[262144]{0}', space=vmem, size = 0x40000, scoped, tag = 'output window, operand 0']
    %10 = vsyncpa [#allocation5], 0
    %s11 = scalar_lea.sflag [#allocation5], 1
    %12 = vsyncpa %s11, 0
    %13 = vsyncpa [#allocation8], 0
    %14 = vsyncpa [#allocation6], 0
    %s15 = scalar_lea.sflag [#allocation6], 1
    %16 = vsyncpa %s15, 0
    loop: start=0, step=1, limit=4
    $region2: #{tpu_custom_call.1} parent=1 // loop_pre_header
      _
    $region3: #{tpu_custom_call.1} parent=1 // loop_header
      %s18 = sphi 0, %s22
      %p19 = scmp.ge.s32.totalorder %s18, 4
      %s28 = sphi 0, %s30
      %s31 = sphi 0, %s28
      %s32 = sphi 0, %s31
      %s48 = sphi 0, %s32
      %s52 = sphi 0, %s52
      %s54 = sphi 0, %s52
      %s55 = sphi 0, %s54
      %s69 = sphi 0, %s55
      %s73 = sphi 0, %s73
      %s75 = sphi 0, %s73
      %s76 = sphi 0, %s75
      %s90 = sphi 0, %s76
      %s94 = sphi 0, %s94
      %s96 = sphi 0, %s94
      %s97 = sphi 0, %s96
      %s111 = sphi 0, %s97
      %s117 = sphi 0, %s119
      %s120 = sphi 0, %s117
      %s121 = sphi 0, %s120
      %s137 = sphi 0, %s121
    $region4: #{tpu_custom_call.1} parent=1 // loop_header_branch
      %21 = sbr.rel (%p19) target = $region8
    $region5: #{tpu_custom_call.1} parent=1 // loop_body
      %s23 = ssub.s32 %s18, 1
      %s24 = ssub.s32 %s18, 2
      %s25 = sadd.s32 %s18, 1
      %s26 = ssub.s32 %s18, %s25
      %p27 = scmp.eq.s32.totalorder %s26, 0
      %s29 = sadd.s32 %s28, 1
      %s30 = scalar_select %p27, %s28, %s29
      %p33 = pneg %p27
      %p34 = scmp.eq.s32.totalorder %s18, 1
      %p35 = por %p33, %p34
      %p36 = scmp.ne.s32.totalorder %s28, %s31
      %p37 = scmp.eq.s32.totalorder %s18, 0
      %p38 = por %p36, %p37
      %p39 = scmp.ne.s32.totalorder %s28, %s31
      %p40 = scmp.eq.s32.totalorder %s23, 1
      %p41 = por %p39, %p40
      %p42 = scmp.ne.s32.totalorder %s31, %s32
      %p43 = scmp.eq.s32.totalorder %s23, 0
      %p44 = por %p42, %p43
      %p45 = scmp.ne.s32.totalorder %s31, %s32
      %p46 = scmp.eq.s32.totalorder %s24, 1
      %p47 = por %p45, %p46
      %p49 = scmp.ne.s32.totalorder %s32, %s48
      %p50 = scmp.eq.s32.totalorder %s24, 0
      %p51 = por %p49, %p50
      %s53 = sadd.s32 %s52, 1
      %p56 = scmp.eq.s32.totalorder %s18, 1
      %p57 = scmp.ne.s32.totalorder %s52, %s54
      %p58 = scmp.eq.s32.totalorder %s18, 0
      %p59 = por %p57, %p58
      %p60 = scmp.ne.s32.totalorder %s52, %s54
      %p61 = scmp.eq.s32.totalorder %s23, 1
      %p62 = por %p60, %p61
      %p63 = scmp.ne.s32.totalorder %s54, %s55
      %p64 = scmp.eq.s32.totalorder %s23, 0
      %p65 = por %p63, %p64
      %p66 = scmp.ne.s32.totalorder %s54, %s55
      %p67 = scmp.eq.s32.totalorder %s24, 1
      %p68 = por %p66, %p67
      %p70 = scmp.ne.s32.totalorder %s55, %s69
      %p71 = scmp.eq.s32.totalorder %s24, 0
      %p72 = por %p70, %p71
      %s74 = sadd.s32 %s73, 1
      %p77 = scmp.eq.s32.totalorder %s18, 1
      %p78 = scmp.ne.s32.totalorder %s73, %s75
      %p79 = scmp.eq.s32.totalorder %s18, 0
      %p80 = por %p78, %p79
      %p81 = scmp.ne.s32.totalorder %s73, %s75
      %p82 = scmp.eq.s32.totalorder %s23, 1
      %p83 = por %p81, %p82
      %p84 = scmp.ne.s32.totalorder %s75, %s76
      %p85 = scmp.eq.s32.totalorder %s23, 0
      %p86 = por %p84, %p85
      %p87 = scmp.ne.s32.totalorder %s75, %s76
      %p88 = scmp.eq.s32.totalorder %s24, 1
      %p89 = por %p87, %p88
      %p91 = scmp.ne.s32.totalorder %s76, %s90
      %p92 = scmp.eq.s32.totalorder %s24, 0
      %p93 = por %p91, %p92
      %s95 = sadd.s32 %s94, 1
      %p98 = scmp.eq.s32.totalorder %s18, 1
      %p99 = scmp.ne.s32.totalorder %s94, %s96
      %p100 = scmp.eq.s32.totalorder %s18, 0
      %p101 = por %p99, %p100
      %p102 = scmp.ne.s32.totalorder %s94, %s96
      %p103 = scmp.eq.s32.totalorder %s23, 1
      %p104 = por %p102, %p103
      %p105 = scmp.ne.s32.totalorder %s96, %s97
      %p106 = scmp.eq.s32.totalorder %s23, 0
      %p107 = por %p105, %p106
      %p108 = scmp.ne.s32.totalorder %s96, %s97
      %p109 = scmp.eq.s32.totalorder %s24, 1
      %p110 = por %p108, %p109
      %p112 = scmp.ne.s32.totalorder %s97, %s111
      %p113 = scmp.eq.s32.totalorder %s24, 0
      %p114 = por %p112, %p113
      %s115 = ssub.s32 %s18, %s25
      %p116 = scmp.eq.s32.totalorder %s115, 0
      %s118 = sadd.s32 %s117, 1
      %s119 = scalar_select %p116, %s117, %s118
      %p122 = pneg %p116
      %p123 = scmp.eq.s32.totalorder %s18, 1
      %p124 = por %p122, %p123
      %p125 = scmp.ne.s32.totalorder %s117, %s120
      %p126 = scmp.eq.s32.totalorder %s18, 0
      %p127 = por %p125, %p126
      %p128 = scmp.ne.s32.totalorder %s117, %s120
      %p129 = scmp.eq.s32.totalorder %s23, 1
      %p130 = por %p128, %p129
      %p131 = scmp.ne.s32.totalorder %s120, %s121
      %p132 = scmp.eq.s32.totalorder %s23, 0
      %p133 = por %p131, %p132
      %p134 = scmp.ne.s32.totalorder %s120, %s121
      %p135 = scmp.eq.s32.totalorder %s24, 1
      %p136 = por %p134, %p135
      %p138 = scmp.ne.s32.totalorder %s121, %s137
      %p139 = scmp.eq.s32.totalorder %s24, 0
      %p140 = por %p138, %p139
      %p141 = scmp.le.s32.totalorder 1, %s18
      %p142 = scmp.lt.s32.totalorder %s18, 3
      %p143 = pnand %p141, %p142
      %p144 = pneg %p143
      // Predicated region
      $region9: #{tpu_custom_call.1} parent=5 // pred_check
        _
      $region10: #{tpu_custom_call.1} parent=5 // pred_check_branch
        %146 = sbr.rel (%p143) target = $region12
      $region11: #{tpu_custom_call.1} parent=5 // pred_region
        %s147 = ssub.s32 %s18, 1
        // Predicated region
        $region13: #{tpu_custom_call.1} parent=11 // pred_check
          %p148 = pneg %p65
        $region14: #{tpu_custom_call.1} parent=11 // pred_check_branch
          %150 = sbr.rel (%p148) target = $region16
        $region15: #{tpu_custom_call.1} parent=11 // pred_region
          %s152 = ssub.s32 3072, 3072
          %153 = vsyncadd [#allocation8], %s152
          %s154 = sshll.u32 [#allocation7], 4
          %s155 = int_to_ptr.vmem [resolvable:$true] %s154
          %160 = dma.hbm_to_vmem [thread:$0]  %s1, 3072, %s155, [#allocation8], 192, 192, 12
        $region16: #{tpu_custom_call.1} parent=11 // pred_fallthru
          _
        // Predicated region
        $region17: #{tpu_custom_call.1} parent=11 // pred_check
          %p161 = pneg %p86
        $region18: #{tpu_custom_call.1} parent=11 // pred_check_branch
          %163 = sbr.rel (%p161) target = $region20
        $region19: #{tpu_custom_call.1} parent=11 // pred_region
          _
        $region20: #{tpu_custom_call.1} parent=11 // pred_fallthru
          _
        // Predicated region
        $region21: #{tpu_custom_call.1} parent=11 // pred_check
          %p164 = pneg %p107
        $region22: #{tpu_custom_call.1} parent=11 // pred_check_branch
          %166 = sbr.rel (%p164) target = $region24
        $region23: #{tpu_custom_call.1} parent=11 // pred_region
          _
        $region24: #{tpu_custom_call.1} parent=11 // pred_fallthru
          _
      $region12: #{tpu_custom_call.1} parent=5 // pred_fallthru
        _
      %p167 = scmp.lt.s32.totalorder %s18, 2
      // Predicated region
      $region25: #{tpu_custom_call.1} parent=5 // pred_check
        %p168 = pneg %p167
      $region26: #{tpu_custom_call.1} parent=5 // pred_check_branch
        %170 = sbr.rel (%p168) target = $region28
      $region27: #{tpu_custom_call.1} parent=5 // pred_region
        // Predicated region
        $region29: #{tpu_custom_call.1} parent=27 // pred_check
          %p171 = pneg %p38
        $region30: #{tpu_custom_call.1} parent=27 // pred_check_branch
          %173 = sbr.rel (%p171) target = $region32
        $region31: #{tpu_custom_call.1} parent=27 // pred_region
          %s174 = sand.u32 %s28, 1
          %s175 = scalar_lea.sflag [#allocation5], %s174
          %s176 = sand.u32 %s28, 1
          %s177 = smul.addr %s176, 128
          %s178 = scalar_lea.vmem [#allocation4], %s177
          %s180 = ssub.s32 2048, 2048
          %181 = vsyncadd %s175, %s180
          %s182 = smul.addr %s18, 32
          %s183 = smul.addr %s182, 64
          %s184 = scalar_lea.hbm %s0, %s183
          %s185 = sshll.u32 %s178, 4
          %s186 = int_to_ptr.vmem [resolvable:$true] %s185
          %191 = dma.hbm_to_vmem [thread:$0]  %s184, 2048, %s186, %s175, 64, 64, 4
        $region32: #{tpu_custom_call.1} parent=27 // pred_fallthru
          _
      $region28: #{tpu_custom_call.1} parent=5 // pred_fallthru
        _
      %p192 = scmp.le.s32.totalorder 1, %s18
      %p193 = scmp.lt.s32.totalorder %s18, 3
      %p194 = pnand %p192, %p193
      %p195 = pneg %p194
      // Predicated region
      $region33: #{tpu_custom_call.1} parent=5 // pred_check
        _
      $region34: #{tpu_custom_call.1} parent=5 // pred_check_branch
        %197 = sbr.rel (%p194) target = $region36
      $region35: #{tpu_custom_call.1} parent=5 // pred_region
        %s198 = ssub.s32 %s18, 1
        %s199 = sand.u32 %s31, 1
        %s200 = scalar_lea.sflag [#allocation5], %s199
        %s201 = sand.u32 %s31, 1
        %s202 = smul.addr %s201, 128
        %s203 = scalar_lea.vmem [#allocation4], %s202
        // Predicated region
        $region37: #{tpu_custom_call.1} parent=35 // pred_check
          %p204 = pneg %p44
        $region38: #{tpu_custom_call.1} parent=35 // pred_check_branch
          %206 = sbr.rel (%p204) target = $region40
        $region39: #{tpu_custom_call.1} parent=35 // pred_region
          %207 = dma.done %s200, 2048
        $region40: #{tpu_custom_call.1} parent=35 // pred_fallthru
          _
        // Predicated region
        $region41: #{tpu_custom_call.1} parent=35 // pred_check
          %p208 = pneg %p65
        $region42: #{tpu_custom_call.1} parent=35 // pred_check_branch
          %210 = sbr.rel (%p208) target = $region44
        $region43: #{tpu_custom_call.1} parent=35 // pred_region
          %211 = dma.done [#allocation8], 3072
        $region44: #{tpu_custom_call.1} parent=35 // pred_fallthru
          _
        %s212 = sand.u32 %s31, 1
        %s213 = scalar_lea.sflag [#allocation5], %s212
        %s214 = sand.u32 %s31, 1
        %s215 = smul.addr %s214, 128
        %s216 = scalar_lea.vmem [#allocation4], %s215
        %p217 = pneg %p44
        %p218 = pneg %p41
        %p219 = pneg %p65
        %p220 = pneg %p62
        %p221 = pneg %p86
        %p222 = pneg %p83
        %p223 = pneg %p107
        %p224 = pneg %p104
        %p225 = pneg %p133
        %p226 = pneg %p130
        %s227 = sand.u32 %s120, 1
        %s228 = scalar_lea.sflag [#allocation6], %s227
        %s229 = sand.u32 %s120, 1
        %s230 = smul.addr %s229, 256
        %s231 = scalar_lea.vmem [#allocation9], %s230
        %v233 = vld [vmem:[#allocation7] sm:$0xff]
        %v234 = vld [vmem:[#allocation7 + $0x8] sm:$0xf]
        %v235 = vld [vmem:[#allocation7 + $0xc] sm:$0xff]
        %v236 = vld [vmem:[#allocation7 + $0x14] sm:$0xf]
        %v237 = vld [vmem:[#allocation7 + $0x18] sm:$0xff]
        %v238 = vld [vmem:[#allocation7 + $0x20] sm:$0xf]
        %v239 = vld [vmem:[#allocation7 + $0x24] sm:$0xff]
        %v240 = vld [vmem:[#allocation7 + $0x2c] sm:$0xf]
        %v241 = vld [vmem:[#allocation7 + $0x30] sm:$0xff]
        %v242 = vld [vmem:[#allocation7 + $0x38] sm:$0xf]
        %v243 = vld [vmem:[#allocation7 + $0x3c] sm:$0xff]
        %v244 = vld [vmem:[#allocation7 + $0x44] sm:$0xf]
        %v245 = vld [vmem:[#allocation7 + $0x48] sm:$0xff]
        %v246 = vld [vmem:[#allocation7 + $0x50] sm:$0xf]
        %v247 = vld [vmem:[#allocation7 + $0x54] sm:$0xff]
        %v248 = vld [vmem:[#allocation7 + $0x5c] sm:$0xf]
        %v249 = vld [vmem:[#allocation7 + $0x60] sm:$0xff]
        %v250 = vld [vmem:[#allocation7 + $0x68] sm:$0xf]
        %v251 = vld [vmem:[#allocation7 + $0x6c] sm:$0xff]
        %v252 = vld [vmem:[#allocation7 + $0x74] sm:$0xf]
        %v253 = vld [vmem:[#allocation7 + $0x78] sm:$0xff]
        %v254 = vld [vmem:[#allocation7 + $0x80] sm:$0xf]
        %v255 = vld [vmem:[#allocation7 + $0x84] sm:$0xff]
        %v256 = vld [vmem:[#allocation7 + $0x8c] sm:$0xf]
        %v257 = vld [vmem:[#allocation7 + $0x90] sm:$0xff]
        %v258 = vld [vmem:[#allocation7 + $0x98] sm:$0xf]
        %v259 = vld [vmem:[#allocation7 + $0x9c] sm:$0xff]
        %v260 = vld [vmem:[#allocation7 + $0xa4] sm:$0xf]
        %v261 = vld [vmem:[#allocation7 + $0xa8] sm:$0xff]
        %v262 = vld [vmem:[#allocation7 + $0xb0] sm:$0xf]
        %v263 = vld [vmem:[#allocation7 + $0xb4] sm:$0xff]
        %v264 = vld [vmem:[#allocation7 + $0xbc] sm:$0xf]
        %v265 = vld [vmem:[%s2] sm:$0x7]
        loop: start=0, step=1, limit=2
        $region45: #{tpu_custom_call.1} parent=35 // loop_pre_header
          _
        $region46: #{tpu_custom_call.1} parent=35 // loop_header
          %s267 = sphi 0, %s271
          %p268 = scmp.ge.s32.totalorder %s267, 2
        $region47: #{tpu_custom_call.1} parent=35 // loop_header_branch
          %270 = sbr.rel (%p268) target = $region51
        $region48: #{tpu_custom_call.1} parent=35 // loop_body
          %s272 = smul.u32 %s267, 8
          %s273 = smul.u32 %s272, 2
          %s274 = smul.addr %s273, 4
          %s275 = scalar_lea.vmem %s203, %s274 [#allocation4]
          %v276 = vld [vmem:[%s275] sm:$0xf]
          %v277 = vld [vmem:[%s275 + $0x4] sm:$0xf]
          %v278 = vld [vmem:[%s275 + $0x8] sm:$0xf]
          %v279 = vld [vmem:[%s275 + $0xc] sm:$0xf]
          %v280 = vld [vmem:[%s275 + $0x10] sm:$0xf]
          %v281 = vld [vmem:[%s275 + $0x14] sm:$0xf]
          %v282 = vld [vmem:[%s275 + $0x18] sm:$0xf]
          %v283 = vld [vmem:[%s275 + $0x1c] sm:$0xf]
          %v284 = vld [vmem:[%s275 + $0x20] sm:$0xf]
          %v285 = vld [vmem:[%s275 + $0x24] sm:$0xf]
          %v286 = vld [vmem:[%s275 + $0x28] sm:$0xf]
          %v287 = vld [vmem:[%s275 + $0x2c] sm:$0xf]
          %v288 = vld [vmem:[%s275 + $0x30] sm:$0xf]
          %v289 = vld [vmem:[%s275 + $0x34] sm:$0xf]
          %v290 = vld [vmem:[%s275 + $0x38] sm:$0xf]
          %v291 = vld [vmem:[%s275 + $0x3c] sm:$0xf]
          %v293 = vlaneseq
          %v294 = vshrl.u32 %v293, 7
          %v295 = vsub.s32 0, %v294
          %v296 = vrot.slane %v265, %v295
          %v297 = vlaneseq
          %v298 = vshrl.u32 %v297, 7
          %v299 = vsub.s32 1, %v298
          %v300 = vrot.slane %v265, %v299
          %v301 = vlaneseq
          %v302 = vshrl.u32 %v301, 7
          %v303 = vsub.s32 2, %v302
          %v304 = vrot.slane %v265, %v303
          %v324 = vunpack.c.l.b16 %v276
          %v325 = vunpack.c.l.b16 %v277
          %v326 = vunpack.c.l.b16 %v278
          %v327 = vunpack.c.l.b16 %v279
          %v328 = vunpack.c.l.b16 %v280
          %v329 = vunpack.c.l.b16 %v281
          %v330 = vunpack.c.l.b16 %v282
          %v331 = vunpack.c.l.b16 %v283
          %v332 = vunpack.c.l.b16 %v284
          %v333 = vunpack.c.l.b16 %v285
          %v334 = vunpack.c.l.b16 %v286
          %v335 = vunpack.c.l.b16 %v287
          %v336 = vunpack.c.l.b16 %v288
          %v337 = vunpack.c.l.b16 %v289
          %v338 = vunpack.c.l.b16 %v290
          %v339 = vunpack.c.l.b16 %v291
          %v340 = vpack.c.b16 %v325, %v324
          %v341 = vpack.c.b16 %v327, %v326
          %v342 = vpack.c.b16 %v329, %v328
          %v343 = vpack.c.b16 %v331, %v330
          %v344 = vpack.c.b16 %v333, %v332
          %v345 = vpack.c.b16 %v335, %v334
          %v346 = vpack.c.b16 %v337, %v336
          %v347 = vpack.c.b16 %v339, %v338
          %v388 = vunpack.c.l.b16 %v233
          %v389 = vunpack.c.h.b16 %v233
          %v390 = vunpack.c.l.b16 %v234
          %v391 = vunpack.c.l.b16 %v235
          %v392 = vunpack.c.h.b16 %v235
          %v393 = vunpack.c.l.b16 %v236
          %v394 = vunpack.c.l.b16 %v237
          %v395 = vunpack.c.h.b16 %v237
          %v396 = vunpack.c.l.b16 %v238
          %v397 = vunpack.c.l.b16 %v239
          %v398 = vunpack.c.h.b16 %v239
          %v399 = vunpack.c.l.b16 %v240
          %v400 = vunpack.c.l.b16 %v241
          %v401 = vunpack.c.h.b16 %v241
          %v402 = vunpack.c.l.b16 %v242
          %v403 = vunpack.c.l.b16 %v243
          %v404 = vunpack.c.h.b16 %v243
          %v405 = vunpack.c.l.b16 %v244
          %v406 = vunpack.c.l.b16 %v245
          %v407 = vunpack.c.h.b16 %v245
          %v408 = vunpack.c.l.b16 %v246
          %v409 = vunpack.c.l.b16 %v247
          %v410 = vunpack.c.h.b16 %v247
          %v411 = vunpack.c.l.b16 %v248
          %v412 = vunpack.c.l.b16 %v249
          %v413 = vunpack.c.h.b16 %v249
          %v414 = vunpack.c.l.b16 %v250
          %v415 = vunpack.c.l.b16 %v251
          %v416 = vunpack.c.h.b16 %v251
          %v417 = vunpack.c.l.b16 %v252
          %v418 = vunpack.c.l.b16 %v253
          %v419 = vunpack.c.h.b16 %v253
          %v420 = vunpack.c.l.b16 %v254
          %v421 = vunpack.c.l.b16 %v255
          %v422 = vunpack.c.h.b16 %v255
          %v423 = vunpack.c.l.b16 %v256
          %v424 = vunpack.c.l.b16 %v257
          %v425 = vunpack.c.h.b16 %v257
          %v426 = vunpack.c.l.b16 %v258
          %v427 = vunpack.c.l.b16 %v259
          %v428 = vunpack.c.h.b16 %v259
          %v429 = vunpack.c.l.b16 %v260
          %v430 = vunpack.c.l.b16 %v261
          %v431 = vunpack.c.h.b16 %v261
          %v432 = vunpack.c.l.b16 %v262
          %v433 = vunpack.c.l.b16 %v263
          %v434 = vunpack.c.h.b16 %v263
          %v435 = vunpack.c.l.b16 %v264
          %v436 = vpack.c.b16 %v391, %v388
          %v437 = vpack.c.b16 %v392, %v389
          %v438 = vpack.c.b16 %v393, %v390
          %v439 = vpack.c.b16 %v397, %v394
          %v440 = vpack.c.b16 %v398, %v395
          %v441 = vpack.c.b16 %v399, %v396
          %v442 = vpack.c.b16 %v403, %v400
          %v443 = vpack.c.b16 %v404, %v401
          %v444 = vpack.c.b16 %v405, %v402
          %v445 = vpack.c.b16 %v409, %v406
          %v446 = vpack.c.b16 %v410, %v407
          %v447 = vpack.c.b16 %v411, %v408
          %v448 = vpack.c.b16 %v415, %v412
          %v449 = vpack.c.b16 %v416, %v413
          %v450 = vpack.c.b16 %v417, %v414
          %v451 = vpack.c.b16 %v421, %v418
          %v452 = vpack.c.b16 %v422, %v419
          %v453 = vpack.c.b16 %v423, %v420
          %v454 = vpack.c.b16 %v427, %v424
          %v455 = vpack.c.b16 %v428, %v425
          %v456 = vpack.c.b16 %v429, %v426
          %v457 = vpack.c.b16 %v433, %v430
          %v458 = vpack.c.b16 %v434, %v431
          %v459 = vpack.c.b16 %v435, %v432
          %484 = vmatprep.subr.bf16.mxu0 %v458
          %485 = vmatpush1.bf16.msra.mxu0 %v457
          %486 = vmatprep.subr.bf16.mxu0 %v455
          %487 = vmatpush1.bf16.msra.mxu0 %v454
          %488 = vmatprep.subr.bf16.mxu0 %v452
          %489 = vmatpush1.bf16.msra.mxu0 %v451
          %490 = vmatprep.subr.bf16.mxu0 %v449
          %491 = vmatpush1.bf16.msra.mxu0 %v448
          %492 = vmatprep.subr.bf16.mxu0 %v446
          %493 = vmatpush1.bf16.msra.mxu0 %v445
          %494 = vmatprep.subr.bf16.mxu0 %v443
          %495 = vmatpush1.bf16.msra.mxu0 %v442
          %496 = vmatprep.subr.bf16.mxu0 %v440
          %497 = vmatpush1.bf16.msra.mxu0 %v439
          %498 = vmatprep.subr.bf16.mxu0 %v437
          %499 = vmatpush1.bf16.msra.mxu0 %v436
          %500 = vmatprep.subr.bf16.mxu0 0
          %501 = vmatpush2.bf16.msra.mxu0 0
          %502 = vmatprep.subr.bf16.mxu0 0
          %503 = vmatpush2.bf16.msra.mxu0 0
          %504 = vmatprep.subr.bf16.mxu0 0
          %505 = vmatpush2.bf16.msra.mxu0 0
          %506 = vmatprep.subr.bf16.mxu0 0
          %507 = vmatpush2.bf16.msra.mxu0 0
          %508 = vmatprep.subr.bf16.mxu0 0
          %509 = vmatpush2.bf16.msra.mxu0 0
          %510 = vmatprep.subr.bf16.mxu0 0
          %511 = vmatpush2.bf16.msra.mxu0 0
          %512 = vmatprep.subr.bf16.mxu0 0
          %513 = vmatpush2.bf16.msra.mxu0 0
          %514 = vmatprep.subr.bf16.mxu0 0
          %515 = vmatpush2.bf16.msra.mxu0 0
          %516 = vmatprep.mubr.bf16.mxu0 0
          %517 = vmatmul.mubr.bf16.gmra.mxu0 %v340
          %v518 = vpop.f32.mrf.mxu0
          %v519 = vadd.f32 %v296, %v518
          %v520 = vpop.f32.mrf.mxu0
          %v521 = vadd.f32 %v300, %v520
          %v522 = vpop.f32.mrf.mxu0
          %v523 = vadd.f32 %v296, %v522
          %v524 = vpop.f32.mrf.mxu0
          %v525 = vadd.f32 %v300, %v524
          %526 = vmatprep.mubr.bf16.mxu0 0
          %527 = vmatmul.mubr.bf16.gmra.mxu0 %v341
          %v528 = vpop.f32.mrf.mxu0
          %v529 = vadd.f32 %v296, %v528
          %v530 = vpop.f32.mrf.mxu0
          %v531 = vadd.f32 %v300, %v530
          %v532 = vpop.f32.mrf.mxu0
          %v533 = vadd.f32 %v296, %v532
          %v534 = vpop.f32.mrf.mxu0
          %v535 = vadd.f32 %v300, %v534
          %536 = vmatprep.mubr.bf16.mxu0 0
          %537 = vmatmul.mubr.bf16.gmra.mxu0 %v342
          %v538 = vpop.f32.mrf.mxu0
          %v539 = vadd.f32 %v296, %v538
          %v540 = vpop.f32.mrf.mxu0
          %v541 = vadd.f32 %v300, %v540
          %v542 = vpop.f32.mrf.mxu0
          %v543 = vadd.f32 %v296, %v542
          %v544 = vpop.f32.mrf.mxu0
          %v545 = vadd.f32 %v300, %v544
          %546 = vmatprep.mubr.bf16.mxu0 0
          %547 = vmatmul.mubr.bf16.gmra.mxu0 %v343
          %v548 = vpop.f32.mrf.mxu0
          %v549 = vadd.f32 %v296, %v548
          %v550 = vpop.f32.mrf.mxu0
          %v551 = vadd.f32 %v300, %v550
          %v552 = vpop.f32.mrf.mxu0
          %v553 = vadd.f32 %v296, %v552
          %v554 = vpop.f32.mrf.mxu0
          %v555 = vadd.f32 %v300, %v554
          %556 = vmatprep.mubr.bf16.mxu0 0
          %557 = vmatmul.mubr.bf16.gmra.mxu0 %v344
          %v558 = vpop.f32.mrf.mxu0
          %v559 = vadd.f32 %v296, %v558
          %v560 = vpop.f32.mrf.mxu0
          %v561 = vadd.f32 %v300, %v560
          %v562 = vpop.f32.mrf.mxu0
          %v563 = vadd.f32 %v296, %v562
          %v564 = vpop.f32.mrf.mxu0
          %v565 = vadd.f32 %v300, %v564
          %566 = vmatprep.mubr.bf16.mxu0 0
          %567 = vmatmul.mubr.bf16.gmra.mxu0 %v345
          %v568 = vpop.f32.mrf.mxu0
          %v569 = vadd.f32 %v296, %v568
          %v570 = vpop.f32.mrf.mxu0
          %v571 = vadd.f32 %v300, %v570
          %v572 = vpop.f32.mrf.mxu0
          %v573 = vadd.f32 %v296, %v572
          %v574 = vpop.f32.mrf.mxu0
          %v575 = vadd.f32 %v300, %v574
          %576 = vmatprep.mubr.bf16.mxu0 0
          %577 = vmatmul.mubr.bf16.gmra.mxu0 %v346
          %v578 = vpop.f32.mrf.mxu0
          %v579 = vadd.f32 %v296, %v578
          %v580 = vpop.f32.mrf.mxu0
          %v581 = vadd.f32 %v300, %v580
          %v582 = vpop.f32.mrf.mxu0
          %v583 = vadd.f32 %v296, %v582
          %v584 = vpop.f32.mrf.mxu0
          %v585 = vadd.f32 %v300, %v584
          %586 = vmatprep.mubr.bf16.mxu0 0
          %587 = vmatmul.mubr.bf16.gmra.mxu0 %v347
          %v588 = vpop.f32.mrf.mxu0
          %v589 = vadd.f32 %v296, %v588
          %v590 = vpop.f32.mrf.mxu0
          %v591 = vadd.f32 %v300, %v590
          %v592 = vpop.f32.mrf.mxu0
          %v593 = vadd.f32 %v296, %v592
          %v594 = vpop.f32.mrf.mxu0
          %v595 = vadd.f32 %v300, %v594
          %596 = vdwg.mxu0
          %597 = vmatprep.subr.bf16.mxu0 0
          %598 = vmatpush1.bf16.msra.mxu0 %v459
          %599 = vmatprep.subr.bf16.mxu0 0
          %600 = vmatpush1.bf16.msra.mxu0 %v456
          %601 = vmatprep.subr.bf16.mxu0 0
          %602 = vmatpush1.bf16.msra.mxu0 %v453
          %603 = vmatprep.subr.bf16.mxu0 0
          %604 = vmatpush1.bf16.msra.mxu0 %v450
          %605 = vmatprep.subr.bf16.mxu0 0
          %606 = vmatpush1.bf16.msra.mxu0 %v447
          %607 = vmatprep.subr.bf16.mxu0 0
          %608 = vmatpush1.bf16.msra.mxu0 %v444
          %609 = vmatprep.subr.bf16.mxu0 0
          %610 = vmatpush1.bf16.msra.mxu0 %v441
          %611 = vmatprep.subr.bf16.mxu0 0
          %612 = vmatpush1.bf16.msra.mxu0 %v438
          %613 = vmatprep.subr.bf16.mxu0 0
          %614 = vmatpush2.bf16.msra.mxu0 0
          %615 = vmatprep.subr.bf16.mxu0 0
          %616 = vmatpush2.bf16.msra.mxu0 0
          %617 = vmatprep.subr.bf16.mxu0 0
          %618 = vmatpush2.bf16.msra.mxu0 0
          %619 = vmatprep.subr.bf16.mxu0 0
          %620 = vmatpush2.bf16.msra.mxu0 0
          %621 = vmatprep.subr.bf16.mxu0 0
          %622 = vmatpush2.bf16.msra.mxu0 0
          %623 = vmatprep.subr.bf16.mxu0 0
          %624 = vmatpush2.bf16.msra.mxu0 0
          %625 = vmatprep.subr.bf16.mxu0 0
          %626 = vmatpush2.bf16.msra.mxu0 0
          %627 = vmatprep.subr.bf16.mxu0 0
          %628 = vmatpush2.bf16.msra.mxu0 0
          %629 = vmatprep.mubr.bf16.mxu0 0
          %630 = vmatmul.mubr.bf16.gmra.mxu0 %v340
          %v631 = vpop.f32.mrf.mxu0
          %v632 = vadd.f32 %v304, %v631
          %v633 = vpop.f32.mrf.mxu0
          %v634 = vpop.f32.mrf.mxu0
          %v635 = vadd.f32 %v304, %v634
          %v636 = vpop.f32.mrf.mxu0
          %637 = vmatprep.mubr.bf16.mxu0 0
          %638 = vmatmul.mubr.bf16.gmra.mxu0 %v341
          %v639 = vpop.f32.mrf.mxu0
          %v640 = vadd.f32 %v304, %v639
          %v641 = vpop.f32.mrf.mxu0
          %v642 = vpop.f32.mrf.mxu0
          %v643 = vadd.f32 %v304, %v642
          %v644 = vpop.f32.mrf.mxu0
          %645 = vmatprep.mubr.bf16.mxu0 0
          %646 = vmatmul.mubr.bf16.gmra.mxu0 %v342
          %v647 = vpop.f32.mrf.mxu0
          %v648 = vadd.f32 %v304, %v647
          %v649 = vpop.f32.mrf.mxu0
          %v650 = vpop.f32.mrf.mxu0
          %v651 = vadd.f32 %v304, %v650
          %v652 = vpop.f32.mrf.mxu0
          %653 = vmatprep.mubr.bf16.mxu0 0
          %654 = vmatmul.mubr.bf16.gmra.mxu0 %v343
          %v655 = vpop.f32.mrf.mxu0
          %v656 = vadd.f32 %v304, %v655
          %v657 = vpop.f32.mrf.mxu0
          %v658 = vpop.f32.mrf.mxu0
          %v659 = vadd.f32 %v304, %v658
          %v660 = vpop.f32.mrf.mxu0
          %661 = vmatprep.mubr.bf16.mxu0 0
          %662 = vmatmul.mubr.bf16.gmra.mxu0 %v344
          %v663 = vpop.f32.mrf.mxu0
          %v664 = vadd.f32 %v304, %v663
          %v665 = vpop.f32.mrf.mxu0
          %v666 = vpop.f32.mrf.mxu0
          %v667 = vadd.f32 %v304, %v666
          %v668 = vpop.f32.mrf.mxu0
          %669 = vmatprep.mubr.bf16.mxu0 0
          %670 = vmatmul.mubr.bf16.gmra.mxu0 %v345
          %v671 = vpop.f32.mrf.mxu0
          %v672 = vadd.f32 %v304, %v671
          %v673 = vpop.f32.mrf.mxu0
          %v674 = vpop.f32.mrf.mxu0
          %v675 = vadd.f32 %v304, %v674
          %v676 = vpop.f32.mrf.mxu0
          %677 = vmatprep.mubr.bf16.mxu0 0
          %678 = vmatmul.mubr.bf16.gmra.mxu0 %v346
          %v679 = vpop.f32.mrf.mxu0
          %v680 = vadd.f32 %v304, %v679
          %v681 = vpop.f32.mrf.mxu0
          %v682 = vpop.f32.mrf.mxu0
          %v683 = vadd.f32 %v304, %v682
          %v684 = vpop.f32.mrf.mxu0
          %685 = vmatprep.mubr.bf16.mxu0 0
          %686 = vmatmul.mubr.bf16.gmra.mxu0 %v347
          %v687 = vpop.f32.mrf.mxu0
          %v688 = vadd.f32 %v304, %v687
          %v689 = vpop.f32.mrf.mxu0
          %v690 = vpop.f32.mrf.mxu0
          %v691 = vadd.f32 %v304, %v690
          %v692 = vpop.f32.mrf.mxu0
          %693 = vdwg.mxu0
          %v694 = vpack.c.bf16 %v523, %v519
          %v695 = vpack.c.bf16 %v525, %v521
          %v696 = vpack.c.bf16 %v635, %v632
          %v697 = vpack.c.bf16 %v533, %v529
          %v698 = vpack.c.bf16 %v535, %v531
          %v699 = vpack.c.bf16 %v643, %v640
          %v700 = vpack.c.bf16 %v543, %v539
          %v701 = vpack.c.bf16 %v545, %v541
          %v702 = vpack.c.bf16 %v651, %v648
          %v703 = vpack.c.bf16 %v553, %v549
          %v704 = vpack.c.bf16 %v555, %v551
          %v705 = vpack.c.bf16 %v659, %v656
          %v706 = vpack.c.bf16 %v563, %v559
          %v707 = vpack.c.bf16 %v565, %v561
          %v708 = vpack.c.bf16 %v667, %v664
          %v709 = vpack.c.bf16 %v573, %v569
          %v710 = vpack.c.bf16 %v575, %v571
          %v711 = vpack.c.bf16 %v675, %v672
          %v712 = vpack.c.bf16 %v583, %v579
          %v713 = vpack.c.bf16 %v585, %v581
          %v714 = vpack.c.bf16 %v683, %v680
          %v715 = vpack.c.bf16 %v593, %v589
          %v716 = vpack.c.bf16 %v595, %v591
          %v717 = vpack.c.bf16 %v691, %v688
          %v742 = vunpack.c.l.b16 %v694
          %v743 = vunpack.c.l.b16 %v695
          %v744 = vunpack.c.l.b16 %v696
          %v745 = vunpack.c.h.b16 %v694
          %v746 = vunpack.c.h.b16 %v695
          %v747 = vunpack.c.h.b16 %v696
          %v748 = vunpack.c.l.b16 %v697
          %v749 = vunpack.c.l.b16 %v698
          %v750 = vunpack.c.l.b16 %v699
          %v751 = vunpack.c.h.b16 %v697
          %v752 = vunpack.c.h.b16 %v698
          %v753 = vunpack.c.h.b16 %v699
          %v754 = vunpack.c.l.b16 %v700
          %v755 = vunpack.c.l.b16 %v701
          %v756 = vunpack.c.l.b16 %v702
          %v757 = vunpack.c.h.b16 %v700
          %v758 = vunpack.c.h.b16 %v701
          %v759 = vunpack.c.h.b16 %v702
          %v760 = vunpack.c.l.b16 %v703
          %v761 = vunpack.c.l.b16 %v704
          %v762 = vunpack.c.l.b16 %v705
          %v763 = vunpack.c.h.b16 %v703
          %v764 = vunpack.c.h.b16 %v704
          %v765 = vunpack.c.h.b16 %v705
          %v766 = vunpack.c.l.b16 %v706
          %v767 = vunpack.c.l.b16 %v707
          %v768 = vunpack.c.l.b16 %v708
          %v769 = vunpack.c.h.b16 %v706
          %v770 = vunpack.c.h.b16 %v707
          %v771 = vunpack.c.h.b16 %v708
          %v772 = vunpack.c.l.b16 %v709
          %v773 = vunpack.c.l.b16 %v710
          %v774 = vunpack.c.l.b16 %v711
          %v775 = vunpack.c.h.b16 %v709
          %v776 = vunpack.c.h.b16 %v710
          %v777 = vunpack.c.h.b16 %v711
          %v778 = vunpack.c.l.b16 %v712
          %v779 = vunpack.c.l.b16 %v713
          %v780 = vunpack.c.l.b16 %v714
          %v781 = vunpack.c.h.b16 %v712
          %v782 = vunpack.c.h.b16 %v713
          %v783 = vunpack.c.h.b16 %v714
          %v784 = vunpack.c.l.b16 %v715
          %v785 = vunpack.c.l.b16 %v716
          %v786 = vunpack.c.l.b16 %v717
          %v787 = vunpack.c.h.b16 %v715
          %v788 = vunpack.c.h.b16 %v716
          %v789 = vunpack.c.h.b16 %v717
          %v790 = vpack.c.b16 %v743, %v742
          %v791 = vpack.c.b16 %v744, %v744
          %v792 = vpack.c.b16 %v746, %v745
          %v793 = vpack.c.b16 %v747, %v747
          %v794 = vpack.c.b16 %v749, %v748
          %v795 = vpack.c.b16 %v750, %v750
          %v796 = vpack.c.b16 %v752, %v751
          %v797 = vpack.c.b16 %v753, %v753
          %v798 = vpack.c.b16 %v755, %v754
          %v799 = vpack.c.b16 %v756, %v756
          %v800 = vpack.c.b16 %v758, %v757
          %v801 = vpack.c.b16 %v759, %v759
          %v802 = vpack.c.b16 %v761, %v760
          %v803 = vpack.c.b16 %v762, %v762
          %v804 = vpack.c.b16 %v764, %v763
          %v805 = vpack.c.b16 %v765, %v765
          %v806 = vpack.c.b16 %v767, %v766
          %v807 = vpack.c.b16 %v768, %v768
          %v808 = vpack.c.b16 %v770, %v769
          %v809 = vpack.c.b16 %v771, %v771
          %v810 = vpack.c.b16 %v773, %v772
          %v811 = vpack.c.b16 %v774, %v774
          %v812 = vpack.c.b16 %v776, %v775
          %v813 = vpack.c.b16 %v777, %v777
          %v814 = vpack.c.b16 %v779, %v778
          %v815 = vpack.c.b16 %v780, %v780
          %v816 = vpack.c.b16 %v782, %v781
          %v817 = vpack.c.b16 %v783, %v783
          %v818 = vpack.c.b16 %v785, %v784
          %v819 = vpack.c.b16 %v786, %v786
          %v820 = vpack.c.b16 %v788, %v787
          %v821 = vpack.c.b16 %v789, %v789
          %s854 = smul.u32 %s272, 6
          %s855 = smul.addr %s854, 4
          %s856 = scalar_lea.vmem [#allocation2], %s855
          %857 = vst [vmem:[%s856] sm:$0xff] %v790
          %858 = vst [vmem:[%s856 + $0x8] sm:$0xf] %v791
          %859 = vst [vmem:[%s856 + $0xc] sm:$0xff] %v792
          %860 = vst [vmem:[%s856 + $0x14] sm:$0xf] %v793
          %861 = vst [vmem:[%s856 + $0x18] sm:$0xff] %v794
          %862 = vst [vmem:[%s856 + $0x20] sm:$0xf] %v795
          %863 = vst [vmem:[%s856 + $0x24] sm:$0xff] %v796
          %864 = vst [vmem:[%s856 + $0x2c] sm:$0xf] %v797
          %865 = vst [vmem:[%s856 + $0x30] sm:$0xff] %v798
          %866 = vst [vmem:[%s856 + $0x38] sm:$0xf] %v799
          %867 = vst [vmem:[%s856 + $0x3c] sm:$0xff] %v800
          %868 = vst [vmem:[%s856 + $0x44] sm:$0xf] %v801
          %869 = vst [vmem:[%s856 + $0x48] sm:$0xff] %v802
          %870 = vst [vmem:[%s856 + $0x50] sm:$0xf] %v803
          %871 = vst [vmem:[%s856 + $0x54] sm:$0xff] %v804
          %872 = vst [vmem:[%s856 + $0x5c] sm:$0xf] %v805
          %873 = vst [vmem:[%s856 + $0x60] sm:$0xff] %v806
          %874 = vst [vmem:[%s856 + $0x68] sm:$0xf] %v807
          %875 = vst [vmem:[%s856 + $0x6c] sm:$0xff] %v808
          %876 = vst [vmem:[%s856 + $0x74] sm:$0xf] %v809
          %877 = vst [vmem:[%s856 + $0x78] sm:$0xff] %v810
          %878 = vst [vmem:[%s856 + $0x80] sm:$0xf] %v811
          %879 = vst [vmem:[%s856 + $0x84] sm:$0xff] %v812
          %880 = vst [vmem:[%s856 + $0x8c] sm:$0xf] %v813
          %881 = vst [vmem:[%s856 + $0x90] sm:$0xff] %v814
          %882 = vst [vmem:[%s856 + $0x98] sm:$0xf] %v815
          %883 = vst [vmem:[%s856 + $0x9c] sm:$0xff] %v816
          %884 = vst [vmem:[%s856 + $0xa4] sm:$0xf] %v817
          %885 = vst [vmem:[%s856 + $0xa8] sm:$0xff] %v818
          %886 = vst [vmem:[%s856 + $0xb0] sm:$0xf] %v819
          %887 = vst [vmem:[%s856 + $0xb4] sm:$0xff] %v820
          %888 = vst [vmem:[%s856 + $0xbc] sm:$0xf] %v821
        $region49: #{tpu_custom_call.1} parent=35 // loop_footer
          %s271 = sadd.s32 1, %s267
        $region50: #{tpu_custom_call.1} parent=35 // loop_footer_branch
          %266 = sbr.rel target = $region46
        $region51: #{tpu_custom_call.1} parent=35 // loop_exit
          _
        %v889 = vld [vmem:[#allocation2] sm:$0xf]
        %v890 = vld [vmem:[#allocation2 + $0xc] sm:$0xf]
        %v891 = vld [vmem:[#allocation2 + $0x18] sm:$0xf]
        %v892 = vld [vmem:[#allocation2 + $0x24] sm:$0xf]
        %v893 = vld [vmem:[#allocation2 + $0x30] sm:$0xf]
        %v894 = vld [vmem:[#allocation2 + $0x3c] sm:$0xf]
        %v895 = vld [vmem:[#allocation2 + $0x48] sm:$0xf]
        %v896 = vld [vmem:[#allocation2 + $0x54] sm:$0xf]
        %v897 = vld [vmem:[#allocation2 + $0x60] sm:$0xf]
        %v898 = vld [vmem:[#allocation2 + $0x6c] sm:$0xf]
        %v899 = vld [vmem:[#allocation2 + $0x78] sm:$0xf]
        %v900 = vld [vmem:[#allocation2 + $0x84] sm:$0xf]
        %v901 = vld [vmem:[#allocation2 + $0x90] sm:$0xf]
        %v902 = vld [vmem:[#allocation2 + $0x9c] sm:$0xf]
        %v903 = vld [vmem:[#allocation2 + $0xa8] sm:$0xf]
        %v904 = vld [vmem:[#allocation2 + $0xb4] sm:$0xf]
        %v905 = vld [vmem:[#allocation2 + $0xc0] sm:$0xf]
        %v906 = vld [vmem:[#allocation2 + $0xcc] sm:$0xf]
        %v907 = vld [vmem:[#allocation2 + $0xd8] sm:$0xf]
        %v908 = vld [vmem:[#allocation2 + $0xe4] sm:$0xf]
        %v909 = vld [vmem:[#allocation2 + $0xf0] sm:$0xf]
        %v910 = vld [vmem:[#allocation2 + $0xfc] sm:$0xf]
        %v911 = vld [vmem:[#allocation2 + $0x108] sm:$0xf]
        %v912 = vld [vmem:[#allocation2 + $0x114] sm:$0xf]
        %v913 = vld [vmem:[#allocation2 + $0x120] sm:$0xf]
        %v914 = vld [vmem:[#allocation2 + $0x12c] sm:$0xf]
        %v915 = vld [vmem:[#allocation2 + $0x138] sm:$0xf]
        %v916 = vld [vmem:[#allocation2 + $0x144] sm:$0xf]
        %v917 = vld [vmem:[#allocation2 + $0x150] sm:$0xf]
        %v918 = vld [vmem:[#allocation2 + $0x15c] sm:$0xf]
        %v919 = vld [vmem:[#allocation2 + $0x168] sm:$0xf]
        %v920 = vld [vmem:[#allocation2 + $0x174] sm:$0xf]
        %v921 = vld [vmem:[#allocation2 + $0x4] sm:$0xf]
        %v922 = vld [vmem:[#allocation2 + $0x10] sm:$0xf]
        %v923 = vld [vmem:[#allocation2 + $0x1c] sm:$0xf]
        %v924 = vld [vmem:[#allocation2 + $0x28] sm:$0xf]
        %v925 = vld [vmem:[#allocation2 + $0x34] sm:$0xf]
        %v926 = vld [vmem:[#allocation2 + $0x40] sm:$0xf]
        %v927 = vld [vmem:[#allocation2 + $0x4c] sm:$0xf]
        %v928 = vld [vmem:[#allocation2 + $0x58] sm:$0xf]
        %v929 = vld [vmem:[#allocation2 + $0x64] sm:$0xf]
        %v930 = vld [vmem:[#allocation2 + $0x70] sm:$0xf]
        %v931 = vld [vmem:[#allocation2 + $0x7c] sm:$0xf]
        %v932 = vld [vmem:[#allocation2 + $0x88] sm:$0xf]
        %v933 = vld [vmem:[#allocation2 + $0x94] sm:$0xf]
        %v934 = vld [vmem:[#allocation2 + $0xa0] sm:$0xf]
        %v935 = vld [vmem:[#allocation2 + $0xac] sm:$0xf]
        %v936 = vld [vmem:[#allocation2 + $0xb8] sm:$0xf]
        %v937 = vld [vmem:[#allocation2 + $0xc4] sm:$0xf]
        %v938 = vld [vmem:[#allocation2 + $0xd0] sm:$0xf]
        %v939 = vld [vmem:[#allocation2 + $0xdc] sm:$0xf]
        %v940 = vld [vmem:[#allocation2 + $0xe8] sm:$0xf]
        %v941 = vld [vmem:[#allocation2 + $0xf4] sm:$0xf]
        %v942 = vld [vmem:[#allocation2 + $0x100] sm:$0xf]
        %v943 = vld [vmem:[#allocation2 + $0x10c] sm:$0xf]
        %v944 = vld [vmem:[#allocation2 + $0x118] sm:$0xf]
        %v945 = vld [vmem:[#allocation2 + $0x124] sm:$0xf]
        %v946 = vld [vmem:[#allocation2 + $0x130] sm:$0xf]
        %v947 = vld [vmem:[#allocation2 + $0x13c] sm:$0xf]
        %v948 = vld [vmem:[#allocation2 + $0x148] sm:$0xf]
        %v949 = vld [vmem:[#allocation2 + $0x154] sm:$0xf]
        %v950 = vld [vmem:[#allocation2 + $0x160] sm:$0xf]
        %v951 = vld [vmem:[#allocation2 + $0x16c] sm:$0xf]
        %v952 = vld [vmem:[#allocation2 + $0x178] sm:$0xf]
        %v953 = vld [vmem:[#allocation2 + $0x8] sm:$0xf]
        %v954 = vld [vmem:[#allocation2 + $0x14] sm:$0xf]
        %v955 = vld [vmem:[#allocation2 + $0x20] sm:$0xf]
        %v956 = vld [vmem:[#allocation2 + $0x2c] sm:$0xf]
        %v957 = vld [vmem:[#allocation2 + $0x38] sm:$0xf]
        %v958 = vld [vmem:[#allocation2 + $0x44] sm:$0xf]
        %v959 = vld [vmem:[#allocation2 + $0x50] sm:$0xf]
        %v960 = vld [vmem:[#allocation2 + $0x5c] sm:$0xf]
        %v961 = vld [vmem:[#allocation2 + $0x68] sm:$0xf]
        %v962 = vld [vmem:[#allocation2 + $0x74] sm:$0xf]
        %v963 = vld [vmem:[#allocation2 + $0x80] sm:$0xf]
        %v964 = vld [vmem:[#allocation2 + $0x8c] sm:$0xf]
        %v965 = vld [vmem:[#allocation2 + $0x98] sm:$0xf]
        %v966 = vld [vmem:[#allocation2 + $0xa4] sm:$0xf]
        %v967 = vld [vmem:[#allocation2 + $0xb0] sm:$0xf]
        %v968 = vld [vmem:[#allocation2 + $0xbc] sm:$0xf]
        %v969 = vld [vmem:[#allocation2 + $0xc8] sm:$0xf]
        %v970 = vld [vmem:[#allocation2 + $0xd4] sm:$0xf]
        %v971 = vld [vmem:[#allocation2 + $0xe0] sm:$0xf]
        %v972 = vld [vmem:[#allocation2 + $0xec] sm:$0xf]
        %v973 = vld [vmem:[#allocation2 + $0xf8] sm:$0xf]
        %v974 = vld [vmem:[#allocation2 + $0x104] sm:$0xf]
        %v975 = vld [vmem:[#allocation2 + $0x110] sm:$0xf]
        %v976 = vld [vmem:[#allocation2 + $0x11c] sm:$0xf]
        %v977 = vld [vmem:[#allocation2 + $0x128] sm:$0xf]
        %v978 = vld [vmem:[#allocation2 + $0x134] sm:$0xf]
        %v979 = vld [vmem:[#allocation2 + $0x140] sm:$0xf]
        %v980 = vld [vmem:[#allocation2 + $0x14c] sm:$0xf]
        %v981 = vld [vmem:[#allocation2 + $0x158] sm:$0xf]
        %v982 = vld [vmem:[#allocation2 + $0x164] sm:$0xf]
        %v983 = vld [vmem:[#allocation2 + $0x170] sm:$0xf]
        %v984 = vld [vmem:[#allocation2 + $0x17c] sm:$0xf]
        %v985 = vlaneseq
        %v986 = vshrl.u32 %v985, 7
        %v987 = vadd.s32 %v986, 8
        %v988 = vlaneseq
        %v989 = vand.u32 %v988, 127
        %vm990 = vcmp.eq.s32.totalorder %v986, %v989
        %vm991 = vcmp.eq.s32.totalorder %v987, %v989
        %v992 = vsel %vm990, -1e+30, 0.0
        %v993 = vsel %vm991, -1e+30, 0.0
        %v996 = vunpack.c.l.b16 %v889
        %v997 = vunpack.c.l.b16 %v890
        %v998 = vpack.c.b16 %v997, %v996
        %v1002 = vunpack.c.l.b16 %v921
        %v1003 = vunpack.c.l.b16 %v922
        %v1004 = vpack.c.b16 %v1003, %v1002
        %1006 = vmatprep.subr.bf16.mxu0 0
        %1007 = vmatpush1.bf16.xpose.msra.mxu0 0
        %1008 = vmatprep.subr.bf16.mxu0 0
        %1009 = vmatpush1.bf16.xpose.msra.mxu0 0
        %1010 = vmatprep.subr.bf16.mxu0 0
        %1011 = vmatpush1.bf16.xpose.msra.mxu0 0
        %1012 = vmatprep.subr.bf16.mxu0 0
        %1013 = vmatpush1.bf16.xpose.msra.mxu0 0
        %1014 = vmatprep.subr.bf16.mxu0 0
        %1015 = vmatpush1.bf16.xpose.msra.mxu0 0
        %1016 = vmatprep.subr.bf16.mxu0 0
        %1017 = vmatpush1.bf16.xpose.msra.mxu0 0
        %1018 = vmatprep.subr.bf16.mxu0 0
        %1019 = vmatpush1.bf16.xpose.msra.mxu0 0
        %1020 = vmatprep.subr.bf16.mxu0 0
        %1021 = vmatpush1.bf16.xpose.msra.mxu0 %v1004
        %1022 = vmatprep.subr.bf16.mxu0 0
        %1023 = vmatpush2.bf16.xpose.msra.mxu0 0
        %1024 = vmatprep.subr.bf16.mxu0 0
        %1025 = vmatpush2.bf16.xpose.msra.mxu0 0
        %1026 = vmatprep.subr.bf16.mxu0 0
        %1027 = vmatpush2.bf16.xpose.msra.mxu0 0
        %1028 = vmatprep.subr.bf16.mxu0 0
        %1029 = vmatpush2.bf16.xpose.msra.mxu0 0
        %1030 = vmatprep.subr.bf16.mxu0 0
        %1031 = vmatpush2.bf16.xpose.msra.mxu0 0
        %1032 = vmatprep.subr.bf16.mxu0 0
        %1033 = vmatpush2.bf16.xpose.msra.mxu0 0
        %1034 = vmatprep.subr.bf16.mxu0 0
        %1035 = vmatpush2.bf16.xpose.msra.mxu0 0
        %1036 = vmatprep.subr.bf16.mxu0 0
        %1037 = vmatpush2.bf16.xpose.msra.mxu0 0
        %1038 = vmatprep.mubr.bf16.mxu0 0
        %1039 = vmatmul.mubr.bf16.gmra.mxu0 %v998
        %v1040 = vpop.f32.mrf.mxu0
        %v1041 = vadd.f32 0.0, %v1040
        %v1042 = vpop.f32.mrf.mxu0
        %v1043 = vpop.f32.mrf.mxu0
        %v1044 = vadd.f32 0.0, %v1043
        %v1045 = vpop.f32.mrf.mxu0
        %1046 = vdwg.mxu0
        %v1049 = vunpack.c.l.b16 %v891
        %v1050 = vunpack.c.l.b16 %v892
        %v1051 = vpack.c.b16 %v1050, %v1049
        %v1055 = vunpack.c.l.b16 %v923
        %v1056 = vunpack.c.l.b16 %v924
        %v1057 = vpack.c.b16 %v1056, %v1055
        %1059 = vmatprep.subr.bf16.mxu0 0
        %1060 = vmatpush1.bf16.xpose.msra.mxu0 0
        %1061 = vmatprep.subr.bf16.mxu0 0
        %1062 = vmatpush1.bf16.xpose.msra.mxu0 0
        %1063 = vmatprep.subr.bf16.mxu0 0
        %1064 = vmatpush1.bf16.xpose.msra.mxu0 0
        %1065 = vmatprep.subr.bf16.mxu0 0
        %1066 = vmatpush1.bf16.xpose.msra.mxu0 0
        %1067 = vmatprep.subr.bf16.mxu0 0
        %1068 = vmatpush1.bf16.xpose.msra.mxu0 0
        %1069 = vmatprep.subr.bf16.mxu0 0
        %1070 = vmatpush1.bf16.xpose.msra.mxu0 0
        %1071 = vmatprep.subr.bf16.mxu0 0
        %1072 = vmatpush1.bf16.xpose.msra.mxu0 0
        %1073 = vmatprep.subr.bf16.mxu0 0
        %1074 = vmatpush1.bf16.xpose.msra.mxu0 %v1057
        %1075 = vmatprep.subr.bf16.mxu0 0
        %1076 = vmatpush2.bf16.xpose.msra.mxu0 0
        %1077 = vmatprep.subr.bf16.mxu0 0
        %1078 = vmatpush2.bf16.xpose.msra.mxu0 0
        %1079 = vmatprep.subr.bf16.mxu0 0
        %1080 = vmatpush2.bf16.xpose.msra.mxu0 0
        %1081 = vmatprep.subr.bf16.mxu0 0
        %1082 = vmatpush2.bf16.xpose.msra.mxu0 0
        %1083 = vmatprep.subr.bf16.mxu0 0
        %1084 = vmatpush2.bf16.xpose.msra.mxu0 0
        %1085 = vmatprep.subr.bf16.mxu0 0
        %1086 = vmatpush2.bf16.xpose.msra.mxu0 0
        %1087 = vmatprep.subr.bf16.mxu0 0
        %1088 = vmatpush2.bf16.xpose.msra.mxu0 0
        %1089 = vmatprep.subr.bf16.mxu0 0
        %1090 = vmatpush2.bf16.xpose.msra.mxu0 0
        %1091 = vmatprep.mubr.bf16.mxu0 0
        %1092 = vmatmul.mubr.bf16.gmra.mxu0 %v1051
        %v1093 = vpop.f32.mrf.mxu0
        %v1094 = vadd.f32 0.0, %v1093
        %v1095 = vpop.f32.mrf.mxu0
        %v1096 = vpop.f32.mrf.mxu0
        %v1097 = vadd.f32 0.0, %v1096
        %v1098 = vpop.f32.mrf.mxu0
        %1099 = vdwg.mxu0
        %v1102 = vunpack.c.l.b16 %v893
        %v1103 = vunpack.c.l.b16 %v894
        %v1104 = vpack.c.b16 %v1103, %v1102
        %v1108 = vunpack.c.l.b16 %v925
        %v1109 = vunpack.c.l.b16 %v926
        %v1110 = vpack.c.b16 %v1109, %v1108
        %1112 = vmatprep.subr.bf16.mxu0 0
        %1113 = vmatpush1.bf16.xpose.msra.mxu0 0
        %1114 = vmatprep.subr.bf16.mxu0 0
        %1115 = vmatpush1.bf16.xpose.msra.mxu0 0
        %1116 = vmatprep.subr.bf16.mxu0 0
        %1117 = vmatpush1.bf16.xpose.msra.mxu0 0
        %1118 = vmatprep.subr.bf16.mxu0 0
        %1119 = vmatpush1.bf16.xpose.msra.mxu0 0
        %1120 = vmatprep.subr.bf16.mxu0 0
        %1121 = vmatpush1.bf16.xpose.msra.mxu0 0
        %1122 = vmatprep.subr.bf16.mxu0 0
        %1123 = vmatpush1.bf16.xpose.msra.mxu0 0
        %1124 = vmatprep.subr.bf16.mxu0 0
        %1125 = vmatpush1.bf16.xpose.msra.mxu0 0
        %1126 = vmatprep.subr.bf16.mxu0 0
        %1127 = vmatpush1.bf16.xpose.msra.mxu0 %v1110
        %1128 = vmatprep.subr.bf16.mxu0 0
        %1129 = vmatpush2.bf16.xpose.msra.mxu0 0
        %1130 = vmatprep.subr.bf16.mxu0 0
        %1131 = vmatpush2.bf16.xpose.msra.mxu0 0
        %1132 = vmatprep.subr.bf16.mxu0 0
        %1133 = vmatpush2.bf16.xpose.msra.mxu0 0
        %1134 = vmatprep.subr.bf16.mxu0 0
        %1135 = vmatpush2.bf16.xpose.msra.mxu0 0
        %1136 = vmatprep.subr.bf16.mxu0 0
        %1137 = vmatpush2.bf16.xpose.msra.mxu0 0
        %1138 = vmatprep.subr.bf16.mxu0 0
        %1139 = vmatpush2.bf16.xpose.msra.mxu0 0
        %1140 = vmatprep.subr.bf16.mxu0 0
        %1141 = vmatpush2.bf16.xpose.msra.mxu0 0
        %1142 = vmatprep.subr.bf16.mxu0 0
        %1143 = vmatpush2.bf16.xpose.msra.mxu0 0
        %1144 = vmatprep.mubr.bf16.mxu0 0
        %1145 = vmatmul.mubr.bf16.gmra.mxu0 %v1104
        %v1146 = vpop.f32.mrf.mxu0
        %v1147 = vadd.f32 0.0, %v1146
        %v1148 = vpop.f32.mrf.mxu0
        %v1149 = vpop.f32.mrf.mxu0
        %v1150 = vadd.f32 0.0, %v1149
        %v1151 = vpop.f32.mrf.mxu0
        %1152 = vdwg.mxu0
        %v1155 = vunpack.c.l.b16 %v895
        %v1156 = vunpack.c.l.b16 %v896
        %v1157 = vpack.c.b16 %v1156, %v1155
        %v1161 = vunpack.c.l.b16 %v927
        %v1162 = vunpack.c.l.b16 %v928
        %v1163 = vpack.c.b16 %v1162, %v1161
        %1165 = vmatprep.subr.bf16.mxu0 0
        %1166 = vmatpush1.bf16.xpose.msra.mxu0 0
        %1167 = vmatprep.subr.bf16.mxu0 0
        %1168 = vmatpush1.bf16.xpose.msra.mxu0 0
        %1169 = vmatprep.subr.bf16.mxu0 0
        %1170 = vmatpush1.bf16.xpose.msra.mxu0 0
        %1171 = vmatprep.subr.bf16.mxu0 0
        %1172 = vmatpush1.bf16.xpose.msra.mxu0 0
        %1173 = vmatprep.subr.bf16.mxu0 0
        %1174 = vmatpush1.bf16.xpose.msra.mxu0 0
        %1175 = vmatprep.subr.bf16.mxu0 0
        %1176 = vmatpush1.bf16.xpose.msra.mxu0 0
        %1177 = vmatprep.subr.bf16.mxu0 0
        %1178 = vmatpush1.bf16.xpose.msra.mxu0 0
        %1179 = vmatprep.subr.bf16.mxu0 0
        %1180 = vmatpush1.bf16.xpose.msra.mxu0 %v1163
        %1181 = vmatprep.subr.bf16.mxu0 0
        %1182 = vmatpush2.bf16.xpose.msra.mxu0 0
        %1183 = vmatprep.subr.bf16.mxu0 0
        %1184 = vmatpush2.bf16.xpose.msra.mxu0 0
        %1185 = vmatprep.subr.bf16.mxu0 0
        %1186 = vmatpush2.bf16.xpose.msra.mxu0 0
        %1187 = vmatprep.subr.bf16.mxu0 0
        %1188 = vmatpush2.bf16.xpose.msra.mxu0 0
        %1189 = vmatprep.subr.bf16.mxu0 0
        %1190 = vmatpush2.bf16.xpose.msra.mxu0 0
        %1191 = vmatprep.subr.bf16.mxu0 0
        %1192 = vmatpush2.bf16.xpose.msra.mxu0 0
        %1193 = vmatprep.subr.bf16.mxu0 0
        %1194 = vmatpush2.bf16.xpose.msra.mxu0 0
        %1195 = vmatprep.subr.bf16.mxu0 0
        %1196 = vmatpush2.bf16.xpose.msra.mxu0 0
        %1197 = vmatprep.mubr.bf16.mxu0 0
        %1198 = vmatmul.mubr.bf16.gmra.mxu0 %v1157
        %v1199 = vpop.f32.mrf.mxu0
        %v1200 = vadd.f32 0.0, %v1199
        %v1201 = vpop.f32.mrf.mxu0
        %v1202 = vpop.f32.mrf.mxu0
        %v1203 = vadd.f32 0.0, %v1202
        %v1204 = vpop.f32.mrf.mxu0
        %1205 = vdwg.mxu0
        %v1208 = vunpack.c.l.b16 %v897
        %v1209 = vunpack.c.l.b16 %v898
        %v1210 = vpack.c.b16 %v1209, %v1208
        %v1214 = vunpack.c.l.b16 %v929
        %v1215 = vunpack.c.l.b16 %v930
        %v1216 = vpack.c.b16 %v1215, %v1214
        %1218 = vmatprep.subr.bf16.mxu0 0
        %1219 = vmatpush1.bf16.xpose.msra.mxu0 0
        %1220 = vmatprep.subr.bf16.mxu0 0
        %1221 = vmatpush1.bf16.xpose.msra.mxu0 0
        %1222 = vmatprep.subr.bf16.mxu0 0
        %1223 = vmatpush1.bf16.xpose.msra.mxu0 0
        %1224 = vmatprep.subr.bf16.mxu0 0
        %1225 = vmatpush1.bf16.xpose.msra.mxu0 0
        %1226 = vmatprep.subr.bf16.mxu0 0
        %1227 = vmatpush1.bf16.xpose.msra.mxu0 0
        %1228 = vmatprep.subr.bf16.mxu0 0
        %1229 = vmatpush1.bf16.xpose.msra.mxu0 0
        %1230 = vmatprep.subr.bf16.mxu0 0
        %1231 = vmatpush1.bf16.xpose.msra.mxu0 0
        %1232 = vmatprep.subr.bf16.mxu0 0
        %1233 = vmatpush1.bf16.xpose.msra.mxu0 %v1216
        %1234 = vmatprep.subr.bf16.mxu0 0
        %1235 = vmatpush2.bf16.xpose.msra.mxu0 0
        %1236 = vmatprep.subr.bf16.mxu0 0
        %1237 = vmatpush2.bf16.xpose.msra.mxu0 0
        %1238 = vmatprep.subr.bf16.mxu0 0
        %1239 = vmatpush2.bf16.xpose.msra.mxu0 0
        %1240 = vmatprep.subr.bf16.mxu0 0
        %1241 = vmatpush2.bf16.xpose.msra.mxu0 0
        %1242 = vmatprep.subr.bf16.mxu0 0
        %1243 = vmatpush2.bf16.xpose.msra.mxu0 0
        %1244 = vmatprep.subr.bf16.mxu0 0
        %1245 = vmatpush2.bf16.xpose.msra.mxu0 0
        %1246 = vmatprep.subr.bf16.mxu0 0
        %1247 = vmatpush2.bf16.xpose.msra.mxu0 0
        %1248 = vmatprep.subr.bf16.mxu0 0
        %1249 = vmatpush2.bf16.xpose.msra.mxu0 0
        %1250 = vmatprep.mubr.bf16.mxu0 0
        %1251 = vmatmul.mubr.bf16.gmra.mxu0 %v1210
        %v1252 = vpop.f32.mrf.mxu0
        %v1253 = vadd.f32 0.0, %v1252
        %v1254 = vpop.f32.mrf.mxu0
        %v1255 = vpop.f32.mrf.mxu0
        %v1256 = vadd.f32 0.0, %v1255
        %v1257 = vpop.f32.mrf.mxu0
        %1258 = vdwg.mxu0
        %v1261 = vunpack.c.l.b16 %v899
        %v1262 = vunpack.c.l.b16 %v900
        %v1263 = vpack.c.b16 %v1262, %v1261
        %v1267 = vunpack.c.l.b16 %v931
        %v1268 = vunpack.c.l.b16 %v932
        %v1269 = vpack.c.b16 %v1268, %v1267
        %1271 = vmatprep.subr.bf16.mxu0 0
        %1272 = vmatpush1.bf16.xpose.msra.mxu0 0
        %1273 = vmatprep.subr.bf16.mxu0 0
        %1274 = vmatpush1.bf16.xpose.msra.mxu0 0
        %1275 = vmatprep.subr.bf16.mxu0 0
        %1276 = vmatpush1.bf16.xpose.msra.mxu0 0
        %1277 = vmatprep.subr.bf16.mxu0 0
        %1278 = vmatpush1.bf16.xpose.msra.mxu0 0
        %1279 = vmatprep.subr.bf16.mxu0 0
        %1280 = vmatpush1.bf16.xpose.msra.mxu0 0
        %1281 = vmatprep.subr.bf16.mxu0 0
        %1282 = vmatpush1.bf16.xpose.msra.mxu0 0
        %1283 = vmatprep.subr.bf16.mxu0 0
        %1284 = vmatpush1.bf16.xpose.msra.mxu0 0
        %1285 = vmatprep.subr.bf16.mxu0 0
        %1286 = vmatpush1.bf16.xpose.msra.mxu0 %v1269
        %1287 = vmatprep.subr.bf16.mxu0 0
        %1288 = vmatpush2.bf16.xpose.msra.mxu0 0
        %1289 = vmatprep.subr.bf16.mxu0 0
        %1290 = vmatpush2.bf16.xpose.msra.mxu0 0
        %1291 = vmatprep.subr.bf16.mxu0 0
        %1292 = vmatpush2.bf16.xpose.msra.mxu0 0
        %1293 = vmatprep.subr.bf16.mxu0 0
        %1294 = vmatpush2.bf16.xpose.msra.mxu0 0
        %1295 = vmatprep.subr.bf16.mxu0 0
        %1296 = vmatpush2.bf16.xpose.msra.mxu0 0
        %1297 = vmatprep.subr.bf16.mxu0 0
        %1298 = vmatpush2.bf16.xpose.msra.mxu0 0
        %1299 = vmatprep.subr.bf16.mxu0 0
        %1300 = vmatpush2.bf16.xpose.msra.mxu0 0
        %1301 = vmatprep.subr.bf16.mxu0 0
        %1302 = vmatpush2.bf16.xpose.msra.mxu0 0
        %1303 = vmatprep.mubr.bf16.mxu0 0
        %1304 = vmatmul.mubr.bf16.gmra.mxu0 %v1263
        %v1305 = vpop.f32.mrf.mxu0
        %v1306 = vadd.f32 0.0, %v1305
        %v1307 = vpop.f32.mrf.mxu0
        %v1308 = vpop.f32.mrf.mxu0
        %v1309 = vadd.f32 0.0, %v1308
        %v1310 = vpop.f32.mrf.mxu0
        %1311 = vdwg.mxu0
        %v1314 = vunpack.c.l.b16 %v901
        %v1315 = vunpack.c.l.b16 %v902
        %v1316 = vpack.c.b16 %v1315, %v1314
        %v1320 = vunpack.c.l.b16 %v933
        %v1321 = vunpack.c.l.b16 %v934
        %v1322 = vpack.c.b16 %v1321, %v1320
        %1324 = vmatprep.subr.bf16.mxu0 0
        %1325 = vmatpush1.bf16.xpose.msra.mxu0 0
        %1326 = vmatprep.subr.bf16.mxu0 0
        %1327 = vmatpush1.bf16.xpose.msra.mxu0 0
        %1328 = vmatprep.subr.bf16.mxu0 0
        %1329 = vmatpush1.bf16.xpose.msra.mxu0 0
        %1330 = vmatprep.subr.bf16.mxu0 0
        %1331 = vmatpush1.bf16.xpose.msra.mxu0 0
        %1332 = vmatprep.subr.bf16.mxu0 0
        %1333 = vmatpush1.bf16.xpose.msra.mxu0 0
        %1334 = vmatprep.subr.bf16.mxu0 0
        %1335 = vmatpush1.bf16.xpose.msra.mxu0 0
        %1336 = vmatprep.subr.bf16.mxu0 0
        %1337 = vmatpush1.bf16.xpose.msra.mxu0 0
        %1338 = vmatprep.subr.bf16.mxu0 0
        %1339 = vmatpush1.bf16.xpose.msra.mxu0 %v1322
        %1340 = vmatprep.subr.bf16.mxu0 0
        %1341 = vmatpush2.bf16.xpose.msra.mxu0 0
        %1342 = vmatprep.subr.bf16.mxu0 0
        %1343 = vmatpush2.bf16.xpose.msra.mxu0 0
        %1344 = vmatprep.subr.bf16.mxu0 0
        %1345 = vmatpush2.bf16.xpose.msra.mxu0 0
        %1346 = vmatprep.subr.bf16.mxu0 0
        %1347 = vmatpush2.bf16.xpose.msra.mxu0 0
        %1348 = vmatprep.subr.bf16.mxu0 0
        %1349 = vmatpush2.bf16.xpose.msra.mxu0 0
        %1350 = vmatprep.subr.bf16.mxu0 0
        %1351 = vmatpush2.bf16.xpose.msra.mxu0 0
        %1352 = vmatprep.subr.bf16.mxu0 0
        %1353 = vmatpush2.bf16.xpose.msra.mxu0 0
        %1354 = vmatprep.subr.bf16.mxu0 0
        %1355 = vmatpush2.bf16.xpose.msra.mxu0 0
        %1356 = vmatprep.mubr.bf16.mxu0 0
        %1357 = vmatmul.mubr.bf16.gmra.mxu0 %v1316
        %v1358 = vpop.f32.mrf.mxu0
        %v1359 = vadd.f32 0.0, %v1358
        %v1360 = vpop.f32.mrf.mxu0
        %v1361 = vpop.f32.mrf.mxu0
        %v1362 = vadd.f32 0.0, %v1361
        %v1363 = vpop.f32.mrf.mxu0
        %1364 = vdwg.mxu0
        %v1367 = vunpack.c.l.b16 %v903
        %v1368 = vunpack.c.l.b16 %v904
        %v1369 = vpack.c.b16 %v1368, %v1367
        %v1373 = vunpack.c.l.b16 %v935
        %v1374 = vunpack.c.l.b16 %v936
        %v1375 = vpack.c.b16 %v1374, %v1373
        %1377 = vmatprep.subr.bf16.mxu0 0
        %1378 = vmatpush1.bf16.xpose.msra.mxu0 0
        %1379 = vmatprep.subr.bf16.mxu0 0
        %1380 = vmatpush1.bf16.xpose.msra.mxu0 0
        %1381 = vmatprep.subr.bf16.mxu0 0
        %1382 = vmatpush1.bf16.xpose.msra.mxu0 0
        %1383 = vmatprep.subr.bf16.mxu0 0
        %1384 = vmatpush1.bf16.xpose.msra.mxu0 0
        %1385 = vmatprep.subr.bf16.mxu0 0
        %1386 = vmatpush1.bf16.xpose.msra.mxu0 0
        %1387 = vmatprep.subr.bf16.mxu0 0
        %1388 = vmatpush1.bf16.xpose.msra.mxu0 0
        %1389 = vmatprep.subr.bf16.mxu0 0
        %1390 = vmatpush1.bf16.xpose.msra.mxu0 0
        %1391 = vmatprep.subr.bf16.mxu0 0
        %1392 = vmatpush1.bf16.xpose.msra.mxu0 %v1375
        %1393 = vmatprep.subr.bf16.mxu0 0
        %1394 = vmatpush2.bf16.xpose.msra.mxu0 0
        %1395 = vmatprep.subr.bf16.mxu0 0
        %1396 = vmatpush2.bf16.xpose.msra.mxu0 0
        %1397 = vmatprep.subr.bf16.mxu0 0
        %1398 = vmatpush2.bf16.xpose.msra.mxu0 0
        %1399 = vmatprep.subr.bf16.mxu0 0
        %1400 = vmatpush2.bf16.xpose.msra.mxu0 0
        %1401 = vmatprep.subr.bf16.mxu0 0
        %1402 = vmatpush2.bf16.xpose.msra.mxu0 0
        %1403 = vmatprep.subr.bf16.mxu0 0
        %1404 = vmatpush2.bf16.xpose.msra.mxu0 0
        %1405 = vmatprep.subr.bf16.mxu0 0
        %1406 = vmatpush2.bf16.xpose.msra.mxu0 0
        %1407 = vmatprep.subr.bf16.mxu0 0
        %1408 = vmatpush2.bf16.xpose.msra.mxu0 0
        %1409 = vmatprep.mubr.bf16.mxu0 0
        %1410 = vmatmul.mubr.bf16.gmra.mxu0 %v1369
        %v1411 = vpop.f32.mrf.mxu0
        %v1412 = vadd.f32 0.0, %v1411
        %v1413 = vpop.f32.mrf.mxu0
        %v1414 = vpop.f32.mrf.mxu0
        %v1415 = vadd.f32 0.0, %v1414
        %v1416 = vpop.f32.mrf.mxu0
        %1417 = vdwg.mxu0
        %v1420 = vunpack.c.l.b16 %v905
        %v1421 = vunpack.c.l.b16 %v906
        %v1422 = vpack.c.b16 %v1421, %v1420
        %v1426 = vunpack.c.l.b16 %v937
        %v1427 = vunpack.c.l.b16 %v938
        %v1428 = vpack.c.b16 %v1427, %v1426
        %1430 = vmatprep.subr.bf16.mxu0 0
        %1431 = vmatpush1.bf16.xpose.msra.mxu0 0
        %1432 = vmatprep.subr.bf16.mxu0 0
        %1433 = vmatpush1.bf16.xpose.msra.mxu0 0
        %1434 = vmatprep.subr.bf16.mxu0 0
        %1435 = vmatpush1.bf16.xpose.msra.mxu0 0
        %1436 = vmatprep.subr.bf16.mxu0 0
        %1437 = vmatpush1.bf16.xpose.msra.mxu0 0
        %1438 = vmatprep.subr.bf16.mxu0 0
        %1439 = vmatpush1.bf16.xpose.msra.mxu0 0
        %1440 = vmatprep.subr.bf16.mxu0 0
        %1441 = vmatpush1.bf16.xpose.msra.mxu0 0
        %1442 = vmatprep.subr.bf16.mxu0 0
        %1443 = vmatpush1.bf16.xpose.msra.mxu0 0
        %1444 = vmatprep.subr.bf16.mxu0 0
        %1445 = vmatpush1.bf16.xpose.msra.mxu0 %v1428
        %1446 = vmatprep.subr.bf16.mxu0 0
        %1447 = vmatpush2.bf16.xpose.msra.mxu0 0
        %1448 = vmatprep.subr.bf16.mxu0 0
        %1449 = vmatpush2.bf16.xpose.msra.mxu0 0
        %1450 = vmatprep.subr.bf16.mxu0 0
        %1451 = vmatpush2.bf16.xpose.msra.mxu0 0
        %1452 = vmatprep.subr.bf16.mxu0 0
        %1453 = vmatpush2.bf16.xpose.msra.mxu0 0
        %1454 = vmatprep.subr.bf16.mxu0 0
        %1455 = vmatpush2.bf16.xpose.msra.mxu0 0
        %1456 = vmatprep.subr.bf16.mxu0 0
        %1457 = vmatpush2.bf16.xpose.msra.mxu0 0
        %1458 = vmatprep.subr.bf16.mxu0 0
        %1459 = vmatpush2.bf16.xpose.msra.mxu0 0
        %1460 = vmatprep.subr.bf16.mxu0 0
        %1461 = vmatpush2.bf16.xpose.msra.mxu0 0
        %1462 = vmatprep.mubr.bf16.mxu0 0
        %1463 = vmatmul.mubr.bf16.gmra.mxu0 %v1422
        %v1464 = vpop.f32.mrf.mxu0
        %v1465 = vadd.f32 0.0, %v1464
        %v1466 = vpop.f32.mrf.mxu0
        %v1467 = vpop.f32.mrf.mxu0
        %v1468 = vadd.f32 0.0, %v1467
        %v1469 = vpop.f32.mrf.mxu0
        %1470 = vdwg.mxu0
        %v1473 = vunpack.c.l.b16 %v907
        %v1474 = vunpack.c.l.b16 %v908
        %v1475 = vpack.c.b16 %v1474, %v1473
        %v1479 = vunpack.c.l.b16 %v939
        %v1480 = vunpack.c.l.b16 %v940
        %v1481 = vpack.c.b16 %v1480, %v1479
        %1483 = vmatprep.subr.bf16.mxu0 0
        %1484 = vmatpush1.bf16.xpose.msra.mxu0 0
        %1485 = vmatprep.subr.bf16.mxu0 0
        %1486 = vmatpush1.bf16.xpose.msra.mxu0 0
        %1487 = vmatprep.subr.bf16.mxu0 0
        %1488 = vmatpush1.bf16.xpose.msra.mxu0 0
        %1489 = vmatprep.subr.bf16.mxu0 0
        %1490 = vmatpush1.bf16.xpose.msra.mxu0 0
        %1491 = vmatprep.subr.bf16.mxu0 0
        %1492 = vmatpush1.bf16.xpose.msra.mxu0 0
        %1493 = vmatprep.subr.bf16.mxu0 0
        %1494 = vmatpush1.bf16.xpose.msra.mxu0 0
        %1495 = vmatprep.subr.bf16.mxu0 0
        %1496 = vmatpush1.bf16.xpose.msra.mxu0 0
        %1497 = vmatprep.subr.bf16.mxu0 0
        %1498 = vmatpush1.bf16.xpose.msra.mxu0 %v1481
        %1499 = vmatprep.subr.bf16.mxu0 0
        %1500 = vmatpush2.bf16.xpose.msra.mxu0 0
        %1501 = vmatprep.subr.bf16.mxu0 0
        %1502 = vmatpush2.bf16.xpose.msra.mxu0 0
        %1503 = vmatprep.subr.bf16.mxu0 0
        %1504 = vmatpush2.bf16.xpose.msra.mxu0 0
        %1505 = vmatprep.subr.bf16.mxu0 0
        %1506 = vmatpush2.bf16.xpose.msra.mxu0 0
        %1507 = vmatprep.subr.bf16.mxu0 0
        %1508 = vmatpush2.bf16.xpose.msra.mxu0 0
        %1509 = vmatprep.subr.bf16.mxu0 0
        %1510 = vmatpush2.bf16.xpose.msra.mxu0 0
        %1511 = vmatprep.subr.bf16.mxu0 0
        %1512 = vmatpush2.bf16.xpose.msra.mxu0 0
        %1513 = vmatprep.subr.bf16.mxu0 0
        %1514 = vmatpush2.bf16.xpose.msra.mxu0 0
        %1515 = vmatprep.mubr.bf16.mxu0 0
        %1516 = vmatmul.mubr.bf16.gmra.mxu0 %v1475
        %v1517 = vpop.f32.mrf.mxu0
        %v1518 = vadd.f32 0.0, %v1517
        %v1519 = vpop.f32.mrf.mxu0
        %v1520 = vpop.f32.mrf.mxu0
        %v1521 = vadd.f32 0.0, %v1520
        %v1522 = vpop.f32.mrf.mxu0
        %1523 = vdwg.mxu0
        %v1526 = vunpack.c.l.b16 %v909
        %v1527 = vunpack.c.l.b16 %v910
        %v1528 = vpack.c.b16 %v1527, %v1526
        %v1532 = vunpack.c.l.b16 %v941
        %v1533 = vunpack.c.l.b16 %v942
        %v1534 = vpack.c.b16 %v1533, %v1532
        %1536 = vmatprep.subr.bf16.mxu0 0
        %1537 = vmatpush1.bf16.xpose.msra.mxu0 0
        %1538 = vmatprep.subr.bf16.mxu0 0
        %1539 = vmatpush1.bf16.xpose.msra.mxu0 0
        %1540 = vmatprep.subr.bf16.mxu0 0
        %1541 = vmatpush1.bf16.xpose.msra.mxu0 0
        %1542 = vmatprep.subr.bf16.mxu0 0
        %1543 = vmatpush1.bf16.xpose.msra.mxu0 0
        %1544 = vmatprep.subr.bf16.mxu0 0
        %1545 = vmatpush1.bf16.xpose.msra.mxu0 0
        %1546 = vmatprep.subr.bf16.mxu0 0
        %1547 = vmatpush1.bf16.xpose.msra.mxu0 0
        %1548 = vmatprep.subr.bf16.mxu0 0
        %1549 = vmatpush1.bf16.xpose.msra.mxu0 0
        %1550 = vmatprep.subr.bf16.mxu0 0
        %1551 = vmatpush1.bf16.xpose.msra.mxu0 %v1534
        %1552 = vmatprep.subr.bf16.mxu0 0
        %1553 = vmatpush2.bf16.xpose.msra.mxu0 0
        %1554 = vmatprep.subr.bf16.mxu0 0
        %1555 = vmatpush2.bf16.xpose.msra.mxu0 0
        %1556 = vmatprep.subr.bf16.mxu0 0
        %1557 = vmatpush2.bf16.xpose.msra.mxu0 0
        %1558 = vmatprep.subr.bf16.mxu0 0
        %1559 = vmatpush2.bf16.xpose.msra.mxu0 0
        %1560 = vmatprep.subr.bf16.mxu0 0
        %1561 = vmatpush2.bf16.xpose.msra.mxu0 0
        %1562 = vmatprep.subr.bf16.mxu0 0
        %1563 = vmatpush2.bf16.xpose.msra.mxu0 0
        %1564 = vmatprep.subr.bf16.mxu0 0
        %1565 = vmatpush2.bf16.xpose.msra.mxu0 0
        %1566 = vmatprep.subr.bf16.mxu0 0
        %1567 = vmatpush2.bf16.xpose.msra.mxu0 0
        %1568 = vmatprep.mubr.bf16.mxu0 0
        %1569 = vmatmul.mubr.bf16.gmra.mxu0 %v1528
        %v1570 = vpop.f32.mrf.mxu0
        %v1571 = vadd.f32 0.0, %v1570
        %v1572 = vpop.f32.mrf.mxu0
        %v1573 = vpop.f32.mrf.mxu0
        %v1574 = vadd.f32 0.0, %v1573
        %v1575 = vpop.f32.mrf.mxu0
        %1576 = vdwg.mxu0
        %v1579 = vunpack.c.l.b16 %v911
        %v1580 = vunpack.c.l.b16 %v912
        %v1581 = vpack.c.b16 %v1580, %v1579
        %v1585 = vunpack.c.l.b16 %v943
        %v1586 = vunpack.c.l.b16 %v944
        %v1587 = vpack.c.b16 %v1586, %v1585
        %1589 = vmatprep.subr.bf16.mxu0 0
        %1590 = vmatpush1.bf16.xpose.msra.mxu0 0
        %1591 = vmatprep.subr.bf16.mxu0 0
        %1592 = vmatpush1.bf16.xpose.msra.mxu0 0
        %1593 = vmatprep.subr.bf16.mxu0 0
        %1594 = vmatpush1.bf16.xpose.msra.mxu0 0
        %1595 = vmatprep.subr.bf16.mxu0 0
        %1596 = vmatpush1.bf16.xpose.msra.mxu0 0
        %1597 = vmatprep.subr.bf16.mxu0 0
        %1598 = vmatpush1.bf16.xpose.msra.mxu0 0
        %1599 = vmatprep.subr.bf16.mxu0 0
        %1600 = vmatpush1.bf16.xpose.msra.mxu0 0
        %1601 = vmatprep.subr.bf16.mxu0 0
        %1602 = vmatpush1.bf16.xpose.msra.mxu0 0
        %1603 = vmatprep.subr.bf16.mxu0 0
        %1604 = vmatpush1.bf16.xpose.msra.mxu0 %v1587
        %1605 = vmatprep.subr.bf16.mxu0 0
        %1606 = vmatpush2.bf16.xpose.msra.mxu0 0
        %1607 = vmatprep.subr.bf16.mxu0 0
        %1608 = vmatpush2.bf16.xpose.msra.mxu0 0
        %1609 = vmatprep.subr.bf16.mxu0 0
        %1610 = vmatpush2.bf16.xpose.msra.mxu0 0
        %1611 = vmatprep.subr.bf16.mxu0 0
        %1612 = vmatpush2.bf16.xpose.msra.mxu0 0
        %1613 = vmatprep.subr.bf16.mxu0 0
        %1614 = vmatpush2.bf16.xpose.msra.mxu0 0
        %1615 = vmatprep.subr.bf16.mxu0 0
        %1616 = vmatpush2.bf16.xpose.msra.mxu0 0
        %1617 = vmatprep.subr.bf16.mxu0 0
        %1618 = vmatpush2.bf16.xpose.msra.mxu0 0
        %1619 = vmatprep.subr.bf16.mxu0 0
        %1620 = vmatpush2.bf16.xpose.msra.mxu0 0
        %1621 = vmatprep.mubr.bf16.mxu0 0
        %1622 = vmatmul.mubr.bf16.gmra.mxu0 %v1581
        %v1623 = vpop.f32.mrf.mxu0
        %v1624 = vadd.f32 0.0, %v1623
        %v1625 = vpop.f32.mrf.mxu0
        %v1626 = vpop.f32.mrf.mxu0
        %v1627 = vadd.f32 0.0, %v1626
        %v1628 = vpop.f32.mrf.mxu0
        %1629 = vdwg.mxu0
        %v1632 = vunpack.c.l.b16 %v913
        %v1633 = vunpack.c.l.b16 %v914
        %v1634 = vpack.c.b16 %v1633, %v1632
        %v1638 = vunpack.c.l.b16 %v945
        %v1639 = vunpack.c.l.b16 %v946
        %v1640 = vpack.c.b16 %v1639, %v1638
        %1642 = vmatprep.subr.bf16.mxu0 0
        %1643 = vmatpush1.bf16.xpose.msra.mxu0 0
        %1644 = vmatprep.subr.bf16.mxu0 0
        %1645 = vmatpush1.bf16.xpose.msra.mxu0 0
        %1646 = vmatprep.subr.bf16.mxu0 0
        %1647 = vmatpush1.bf16.xpose.msra.mxu0 0
        %1648 = vmatprep.subr.bf16.mxu0 0
        %1649 = vmatpush1.bf16.xpose.msra.mxu0 0
        %1650 = vmatprep.subr.bf16.mxu0 0
        %1651 = vmatpush1.bf16.xpose.msra.mxu0 0
        %1652 = vmatprep.subr.bf16.mxu0 0
        %1653 = vmatpush1.bf16.xpose.msra.mxu0 0
        %1654 = vmatprep.subr.bf16.mxu0 0
        %1655 = vmatpush1.bf16.xpose.msra.mxu0 0
        %1656 = vmatprep.subr.bf16.mxu0 0
        %1657 = vmatpush1.bf16.xpose.msra.mxu0 %v1640
        %1658 = vmatprep.subr.bf16.mxu0 0
        %1659 = vmatpush2.bf16.xpose.msra.mxu0 0
        %1660 = vmatprep.subr.bf16.mxu0 0
        %1661 = vmatpush2.bf16.xpose.msra.mxu0 0
        %1662 = vmatprep.subr.bf16.mxu0 0
        %1663 = vmatpush2.bf16.xpose.msra.mxu0 0
        %1664 = vmatprep.subr.bf16.mxu0 0
        %1665 = vmatpush2.bf16.xpose.msra.mxu0 0
        %1666 = vmatprep.subr.bf16.mxu0 0
        %1667 = vmatpush2.bf16.xpose.msra.mxu0 0
        %1668 = vmatprep.subr.bf16.mxu0 0
        %1669 = vmatpush2.bf16.xpose.msra.mxu0 0
        %1670 = vmatprep.subr.bf16.mxu0 0
        %1671 = vmatpush2.bf16.xpose.msra.mxu0 0
        %1672 = vmatprep.subr.bf16.mxu0 0
        %1673 = vmatpush2.bf16.xpose.msra.mxu0 0
        %1674 = vmatprep.mubr.bf16.mxu0 0
        %1675 = vmatmul.mubr.bf16.gmra.mxu0 %v1634
        %v1676 = vpop.f32.mrf.mxu0
        %v1677 = vadd.f32 0.0, %v1676
        %v1678 = vpop.f32.mrf.mxu0
        %v1679 = vpop.f32.mrf.mxu0
        %v1680 = vadd.f32 0.0, %v1679
        %v1681 = vpop.f32.mrf.mxu0
        %1682 = vdwg.mxu0
        %v1685 = vunpack.c.l.b16 %v915
        %v1686 = vunpack.c.l.b16 %v916
        %v1687 = vpack.c.b16 %v1686, %v1685
        %v1691 = vunpack.c.l.b16 %v947
        %v1692 = vunpack.c.l.b16 %v948
        %v1693 = vpack.c.b16 %v1692, %v1691
        %1695 = vmatprep.subr.bf16.mxu0 0
        %1696 = vmatpush1.bf16.xpose.msra.mxu0 0
        %1697 = vmatprep.subr.bf16.mxu0 0
        %1698 = vmatpush1.bf16.xpose.msra.mxu0 0
        %1699 = vmatprep.subr.bf16.mxu0 0
        %1700 = vmatpush1.bf16.xpose.msra.mxu0 0
        %1701 = vmatprep.subr.bf16.mxu0 0
        %1702 = vmatpush1.bf16.xpose.msra.mxu0 0
        %1703 = vmatprep.subr.bf16.mxu0 0
        %1704 = vmatpush1.bf16.xpose.msra.mxu0 0
        %1705 = vmatprep.subr.bf16.mxu0 0
        %1706 = vmatpush1.bf16.xpose.msra.mxu0 0
        %1707 = vmatprep.subr.bf16.mxu0 0
        %1708 = vmatpush1.bf16.xpose.msra.mxu0 0
        %1709 = vmatprep.subr.bf16.mxu0 0
        %1710 = vmatpush1.bf16.xpose.msra.mxu0 %v1693
        %1711 = vmatprep.subr.bf16.mxu0 0
        %1712 = vmatpush2.bf16.xpose.msra.mxu0 0
        %1713 = vmatprep.subr.bf16.mxu0 0
        %1714 = vmatpush2.bf16.xpose.msra.mxu0 0
        %1715 = vmatprep.subr.bf16.mxu0 0
        %1716 = vmatpush2.bf16.xpose.msra.mxu0 0
        %1717 = vmatprep.subr.bf16.mxu0 0
        %1718 = vmatpush2.bf16.xpose.msra.mxu0 0
        %1719 = vmatprep.subr.bf16.mxu0 0
        %1720 = vmatpush2.bf16.xpose.msra.mxu0 0
        %1721 = vmatprep.subr.bf16.mxu0 0
        %1722 = vmatpush2.bf16.xpose.msra.mxu0 0
        %1723 = vmatprep.subr.bf16.mxu0 0
        %1724 = vmatpush2.bf16.xpose.msra.mxu0 0
        %1725 = vmatprep.subr.bf16.mxu0 0
        %1726 = vmatpush2.bf16.xpose.msra.mxu0 0
        %1727 = vmatprep.mubr.bf16.mxu0 0
        %1728 = vmatmul.mubr.bf16.gmra.mxu0 %v1687
        %v1729 = vpop.f32.mrf.mxu0
        %v1730 = vadd.f32 0.0, %v1729
        %v1731 = vpop.f32.mrf.mxu0
        %v1732 = vpop.f32.mrf.mxu0
        %v1733 = vadd.f32 0.0, %v1732
        %v1734 = vpop.f32.mrf.mxu0
        %1735 = vdwg.mxu0
        %v1738 = vunpack.c.l.b16 %v917
        %v1739 = vunpack.c.l.b16 %v918
        %v1740 = vpack.c.b16 %v1739, %v1738
        %v1744 = vunpack.c.l.b16 %v949
        %v1745 = vunpack.c.l.b16 %v950
        %v1746 = vpack.c.b16 %v1745, %v1744
        %1748 = vmatprep.subr.bf16.mxu0 0
        %1749 = vmatpush1.bf16.xpose.msra.mxu0 0
        %1750 = vmatprep.subr.bf16.mxu0 0
        %1751 = vmatpush1.bf16.xpose.msra.mxu0 0
        %1752 = vmatprep.subr.bf16.mxu0 0
        %1753 = vmatpush1.bf16.xpose.msra.mxu0 0
        %1754 = vmatprep.subr.bf16.mxu0 0
        %1755 = vmatpush1.bf16.xpose.msra.mxu0 0
        %1756 = vmatprep.subr.bf16.mxu0 0
        %1757 = vmatpush1.bf16.xpose.msra.mxu0 0
        %1758 = vmatprep.subr.bf16.mxu0 0
        %1759 = vmatpush1.bf16.xpose.msra.mxu0 0
        %1760 = vmatprep.subr.bf16.mxu0 0
        %1761 = vmatpush1.bf16.xpose.msra.mxu0 0
        %1762 = vmatprep.subr.bf16.mxu0 0
        %1763 = vmatpush1.bf16.xpose.msra.mxu0 %v1746
        %1764 = vmatprep.subr.bf16.mxu0 0
        %1765 = vmatpush2.bf16.xpose.msra.mxu0 0
        %1766 = vmatprep.subr.bf16.mxu0 0
        %1767 = vmatpush2.bf16.xpose.msra.mxu0 0
        %1768 = vmatprep.subr.bf16.mxu0 0
        %1769 = vmatpush2.bf16.xpose.msra.mxu0 0
        %1770 = vmatprep.subr.bf16.mxu0 0
        %1771 = vmatpush2.bf16.xpose.msra.mxu0 0
        %1772 = vmatprep.subr.bf16.mxu0 0
        %1773 = vmatpush2.bf16.xpose.msra.mxu0 0
        %1774 = vmatprep.subr.bf16.mxu0 0
        %1775 = vmatpush2.bf16.xpose.msra.mxu0 0
        %1776 = vmatprep.subr.bf16.mxu0 0
        %1777 = vmatpush2.bf16.xpose.msra.mxu0 0
        %1778 = vmatprep.subr.bf16.mxu0 0
        %1779 = vmatpush2.bf16.xpose.msra.mxu0 0
        %1780 = vmatprep.mubr.bf16.mxu0 0
        %1781 = vmatmul.mubr.bf16.gmra.mxu0 %v1740
        %v1782 = vpop.f32.mrf.mxu0
        %v1783 = vadd.f32 0.0, %v1782
        %v1784 = vpop.f32.mrf.mxu0
        %v1785 = vpop.f32.mrf.mxu0
        %v1786 = vadd.f32 0.0, %v1785
        %v1787 = vpop.f32.mrf.mxu0
        %1788 = vdwg.mxu0
        %v1791 = vunpack.c.l.b16 %v919
        %v1792 = vunpack.c.l.b16 %v920
        %v1793 = vpack.c.b16 %v1792, %v1791
        %v1797 = vunpack.c.l.b16 %v951
        %v1798 = vunpack.c.l.b16 %v952
        %v1799 = vpack.c.b16 %v1798, %v1797
        %1801 = vmatprep.subr.bf16.mxu0 0
        %1802 = vmatpush1.bf16.xpose.msra.mxu0 0
        %1803 = vmatprep.subr.bf16.mxu0 0
        %1804 = vmatpush1.bf16.xpose.msra.mxu0 0
        %1805 = vmatprep.subr.bf16.mxu0 0
        %1806 = vmatpush1.bf16.xpose.msra.mxu0 0
        %1807 = vmatprep.subr.bf16.mxu0 0
        %1808 = vmatpush1.bf16.xpose.msra.mxu0 0
        %1809 = vmatprep.subr.bf16.mxu0 0
        %1810 = vmatpush1.bf16.xpose.msra.mxu0 0
        %1811 = vmatprep.subr.bf16.mxu0 0
        %1812 = vmatpush1.bf16.xpose.msra.mxu0 0
        %1813 = vmatprep.subr.bf16.mxu0 0
        %1814 = vmatpush1.bf16.xpose.msra.mxu0 0
        %1815 = vmatprep.subr.bf16.mxu0 0
        %1816 = vmatpush1.bf16.xpose.msra.mxu0 %v1799
        %1817 = vmatprep.subr.bf16.mxu0 0
        %1818 = vmatpush2.bf16.xpose.msra.mxu0 0
        %1819 = vmatprep.subr.bf16.mxu0 0
        %1820 = vmatpush2.bf16.xpose.msra.mxu0 0
        %1821 = vmatprep.subr.bf16.mxu0 0
        %1822 = vmatpush2.bf16.xpose.msra.mxu0 0
        %1823 = vmatprep.subr.bf16.mxu0 0
        %1824 = vmatpush2.bf16.xpose.msra.mxu0 0
        %1825 = vmatprep.subr.bf16.mxu0 0
        %1826 = vmatpush2.bf16.xpose.msra.mxu0 0
        %1827 = vmatprep.subr.bf16.mxu0 0
        %1828 = vmatpush2.bf16.xpose.msra.mxu0 0
        %1829 = vmatprep.subr.bf16.mxu0 0
        %1830 = vmatpush2.bf16.xpose.msra.mxu0 0
        %1831 = vmatprep.subr.bf16.mxu0 0
        %1832 = vmatpush2.bf16.xpose.msra.mxu0 0
        %1833 = vmatprep.mubr.bf16.mxu0 0
        %1834 = vmatmul.mubr.bf16.gmra.mxu0 %v1793
        %v1835 = vpop.f32.mrf.mxu0
        %v1836 = vadd.f32 0.0, %v1835
        %v1837 = vpop.f32.mrf.mxu0
        %v1838 = vpop.f32.mrf.mxu0
        %v1839 = vadd.f32 0.0, %v1838
        %v1840 = vpop.f32.mrf.mxu0
        %1841 = vdwg.mxu0
        %vm1842 = vcmask 130048
        %v1843 = vsel %vm1842, %v1041, -inf
        %1844 = vmax.xlane.f32.xlu0 %v1843
        %v1845 = vpop.xlane.xlu0 %1844
        %v1846 = vsel %vm1842, %v1044, -inf
        %1847 = vmax.xlane.f32.xlu0 %v1846
        %v1848 = vpop.xlane.xlu0 %1847
        %v1849 = vsel %vm1842, %v1094, -inf
        %1850 = vmax.xlane.f32.xlu0 %v1849
        %v1851 = vpop.xlane.xlu0 %1850
        %v1852 = vsel %vm1842, %v1097, -inf
        %1853 = vmax.xlane.f32.xlu0 %v1852
        %v1854 = vpop.xlane.xlu0 %1853
        %v1855 = vsel %vm1842, %v1147, -inf
        %1856 = vmax.xlane.f32.xlu0 %v1855
        %v1857 = vpop.xlane.xlu0 %1856
        %v1858 = vsel %vm1842, %v1150, -inf
        %1859 = vmax.xlane.f32.xlu0 %v1858
        %v1860 = vpop.xlane.xlu0 %1859
        %v1861 = vsel %vm1842, %v1200, -inf
        %1862 = vmax.xlane.f32.xlu0 %v1861
        %v1863 = vpop.xlane.xlu0 %1862
        %v1864 = vsel %vm1842, %v1203, -inf
        %1865 = vmax.xlane.f32.xlu0 %v1864
        %v1866 = vpop.xlane.xlu0 %1865
        %v1867 = vsel %vm1842, %v1253, -inf
        %1868 = vmax.xlane.f32.xlu0 %v1867
        %v1869 = vpop.xlane.xlu0 %1868
        %v1870 = vsel %vm1842, %v1256, -inf
        %1871 = vmax.xlane.f32.xlu0 %v1870
        %v1872 = vpop.xlane.xlu0 %1871
        %v1873 = vsel %vm1842, %v1306, -inf
        %1874 = vmax.xlane.f32.xlu0 %v1873
        %v1875 = vpop.xlane.xlu0 %1874
        %v1876 = vsel %vm1842, %v1309, -inf
        %1877 = vmax.xlane.f32.xlu0 %v1876
        %v1878 = vpop.xlane.xlu0 %1877
        %v1879 = vsel %vm1842, %v1359, -inf
        %1880 = vmax.xlane.f32.xlu0 %v1879
        %v1881 = vpop.xlane.xlu0 %1880
        %v1882 = vsel %vm1842, %v1362, -inf
        %1883 = vmax.xlane.f32.xlu0 %v1882
        %v1884 = vpop.xlane.xlu0 %1883
        %v1885 = vsel %vm1842, %v1412, -inf
        %1886 = vmax.xlane.f32.xlu0 %v1885
        %v1887 = vpop.xlane.xlu0 %1886
        %v1888 = vsel %vm1842, %v1415, -inf
        %1889 = vmax.xlane.f32.xlu0 %v1888
        %v1890 = vpop.xlane.xlu0 %1889
        %v1891 = vsel %vm1842, %v1465, -inf
        %1892 = vmax.xlane.f32.xlu0 %v1891
        %v1893 = vpop.xlane.xlu0 %1892
        %v1894 = vsel %vm1842, %v1468, -inf
        %1895 = vmax.xlane.f32.xlu0 %v1894
        %v1896 = vpop.xlane.xlu0 %1895
        %v1897 = vsel %vm1842, %v1518, -inf
        %1898 = vmax.xlane.f32.xlu0 %v1897
        %v1899 = vpop.xlane.xlu0 %1898
        %v1900 = vsel %vm1842, %v1521, -inf
        %1901 = vmax.xlane.f32.xlu0 %v1900
        %v1902 = vpop.xlane.xlu0 %1901
        %v1903 = vsel %vm1842, %v1571, -inf
        %1904 = vmax.xlane.f32.xlu0 %v1903
        %v1905 = vpop.xlane.xlu0 %1904
        %v1906 = vsel %vm1842, %v1574, -inf
        %1907 = vmax.xlane.f32.xlu0 %v1906
        %v1908 = vpop.xlane.xlu0 %1907
        %v1909 = vsel %vm1842, %v1624, -inf
        %1910 = vmax.xlane.f32.xlu0 %v1909
        %v1911 = vpop.xlane.xlu0 %1910
        %v1912 = vsel %vm1842, %v1627, -inf
        %1913 = vmax.xlane.f32.xlu0 %v1912
        %v1914 = vpop.xlane.xlu0 %1913
        %v1915 = vsel %vm1842, %v1677, -inf
        %1916 = vmax.xlane.f32.xlu0 %v1915
        %v1917 = vpop.xlane.xlu0 %1916
        %v1918 = vsel %vm1842, %v1680, -inf
        %1919 = vmax.xlane.f32.xlu0 %v1918
        %v1920 = vpop.xlane.xlu0 %1919
        %v1921 = vsel %vm1842, %v1730, -inf
        %1922 = vmax.xlane.f32.xlu0 %v1921
        %v1923 = vpop.xlane.xlu0 %1922
        %v1924 = vsel %vm1842, %v1733, -inf
        %1925 = vmax.xlane.f32.xlu0 %v1924
        %v1926 = vpop.xlane.xlu0 %1925
        %v1927 = vsel %vm1842, %v1783, -inf
        %1928 = vmax.xlane.f32.xlu0 %v1927
        %v1929 = vpop.xlane.xlu0 %1928
        %v1930 = vsel %vm1842, %v1786, -inf
        %1931 = vmax.xlane.f32.xlu0 %v1930
        %v1932 = vpop.xlane.xlu0 %1931
        %v1933 = vsel %vm1842, %v1836, -inf
        %1934 = vmax.xlane.f32.xlu0 %v1933
        %v1935 = vpop.xlane.xlu0 %1934
        %v1936 = vsel %vm1842, %v1839, -inf
        %1937 = vmax.xlane.f32.xlu0 %v1936
        %v1938 = vpop.xlane.xlu0 %1937
        %v1939 = vsub.f32 %v1041, %v1845
        %v1940 = vsub.f32 %v1044, %v1848
        %v1941 = vsub.f32 %v1094, %v1851
        %v1942 = vsub.f32 %v1097, %v1854
        %v1943 = vsub.f32 %v1147, %v1857
        %v1944 = vsub.f32 %v1150, %v1860
        %v1945 = vsub.f32 %v1200, %v1863
        %v1946 = vsub.f32 %v1203, %v1866
        %v1947 = vsub.f32 %v1253, %v1869
        %v1948 = vsub.f32 %v1256, %v1872
        %v1949 = vsub.f32 %v1306, %v1875
        %v1950 = vsub.f32 %v1309, %v1878
        %v1951 = vsub.f32 %v1359, %v1881
        %v1952 = vsub.f32 %v1362, %v1884
        %v1953 = vsub.f32 %v1412, %v1887
        %v1954 = vsub.f32 %v1415, %v1890
        %v1955 = vsub.f32 %v1465, %v1893
        %v1956 = vsub.f32 %v1468, %v1896
        %v1957 = vsub.f32 %v1518, %v1899
        %v1958 = vsub.f32 %v1521, %v1902
        %v1959 = vsub.f32 %v1571, %v1905
        %v1960 = vsub.f32 %v1574, %v1908
        %v1961 = vsub.f32 %v1624, %v1911
        %v1962 = vsub.f32 %v1627, %v1914
        %v1963 = vsub.f32 %v1677, %v1917
        %v1964 = vsub.f32 %v1680, %v1920
        %v1965 = vsub.f32 %v1730, %v1923
        %v1966 = vsub.f32 %v1733, %v1926
        %v1967 = vsub.f32 %v1783, %v1929
        %v1968 = vsub.f32 %v1786, %v1932
        %v1969 = vsub.f32 %v1836, %v1935
        %v1970 = vsub.f32 %v1839, %v1938
        %v1971 = vmul.f32 %v1939, 1.442695
        %v1972 = vpow.pop %v1971
        %v1973 = vmul.f32 %v1940, 1.442695
        %v1974 = vpow.pop %v1973
        %v1975 = vmul.f32 %v1941, 1.442695
        %v1976 = vpow.pop %v1975
        %v1977 = vmul.f32 %v1942, 1.442695
        %v1978 = vpow.pop %v1977
        %v1979 = vmul.f32 %v1943, 1.442695
        %v1980 = vpow.pop %v1979
        %v1981 = vmul.f32 %v1944, 1.442695
        %v1982 = vpow.pop %v1981
        %v1983 = vmul.f32 %v1945, 1.442695
        %v1984 = vpow.pop %v1983
        %v1985 = vmul.f32 %v1946, 1.442695
        %v1986 = vpow.pop %v1985
        %v1987 = vmul.f32 %v1947, 1.442695
        %v1988 = vpow.pop %v1987
        %v1989 = vmul.f32 %v1948, 1.442695
        %v1990 = vpow.pop %v1989
        %v1991 = vmul.f32 %v1949, 1.442695
        %v1992 = vpow.pop %v1991
        %v1993 = vmul.f32 %v1950, 1.442695
        %v1994 = vpow.pop %v1993
        %v1995 = vmul.f32 %v1951, 1.442695
        %v1996 = vpow.pop %v1995
        %v1997 = vmul.f32 %v1952, 1.442695
        %v1998 = vpow.pop %v1997
        %v1999 = vmul.f32 %v1953, 1.442695
        %v2000 = vpow.pop %v1999
        %v2001 = vmul.f32 %v1954, 1.442695
        %v2002 = vpow.pop %v2001
        %v2003 = vmul.f32 %v1955, 1.442695
        %v2004 = vpow.pop %v2003
        %v2005 = vmul.f32 %v1956, 1.442695
        %v2006 = vpow.pop %v2005
        %v2007 = vmul.f32 %v1957, 1.442695
        %v2008 = vpow.pop %v2007
        %v2009 = vmul.f32 %v1958, 1.442695
        %v2010 = vpow.pop %v2009
        %v2011 = vmul.f32 %v1959, 1.442695
        %v2012 = vpow.pop %v2011
        %v2013 = vmul.f32 %v1960, 1.442695
        %v2014 = vpow.pop %v2013
        %v2015 = vmul.f32 %v1961, 1.442695
        %v2016 = vpow.pop %v2015
        %v2017 = vmul.f32 %v1962, 1.442695
        %v2018 = vpow.pop %v2017
        %v2019 = vmul.f32 %v1963, 1.442695
        %v2020 = vpow.pop %v2019
        %v2021 = vmul.f32 %v1964, 1.442695
        %v2022 = vpow.pop %v2021
        %v2023 = vmul.f32 %v1965, 1.442695
        %v2024 = vpow.pop %v2023
        %v2025 = vmul.f32 %v1966, 1.442695
        %v2026 = vpow.pop %v2025
        %v2027 = vmul.f32 %v1967, 1.442695
        %v2028 = vpow.pop %v2027
        %v2029 = vmul.f32 %v1968, 1.442695
        %v2030 = vpow.pop %v2029
        %v2031 = vmul.f32 %v1969, 1.442695
        %v2032 = vpow.pop %v2031
        %v2033 = vmul.f32 %v1970, 1.442695
        %v2034 = vpow.pop %v2033
        %v2035 = vsel %vm1842, %v1972, 0.0
        %2036 = vadd.xlane.f32.xlu0 %v2035
        %v2037 = vpop.xlane.xlu0 %2036
        %v2038 = vsel %vm1842, %v1974, 0.0
        %2039 = vadd.xlane.f32.xlu0 %v2038
        %v2040 = vpop.xlane.xlu0 %2039
        %v2041 = vsel %vm1842, %v1976, 0.0
        %2042 = vadd.xlane.f32.xlu0 %v2041
        %v2043 = vpop.xlane.xlu0 %2042
        %v2044 = vsel %vm1842, %v1978, 0.0
        %2045 = vadd.xlane.f32.xlu0 %v2044
        %v2046 = vpop.xlane.xlu0 %2045
        %v2047 = vsel %vm1842, %v1980, 0.0
        %2048 = vadd.xlane.f32.xlu0 %v2047
        %v2049 = vpop.xlane.xlu0 %2048
        %v2050 = vsel %vm1842, %v1982, 0.0
        %2051 = vadd.xlane.f32.xlu0 %v2050
        %v2052 = vpop.xlane.xlu0 %2051
        %v2053 = vsel %vm1842, %v1984, 0.0
        %2054 = vadd.xlane.f32.xlu0 %v2053
        %v2055 = vpop.xlane.xlu0 %2054
        %v2056 = vsel %vm1842, %v1986, 0.0
        %2057 = vadd.xlane.f32.xlu0 %v2056
        %v2058 = vpop.xlane.xlu0 %2057
        %v2059 = vsel %vm1842, %v1988, 0.0
        %2060 = vadd.xlane.f32.xlu0 %v2059
        %v2061 = vpop.xlane.xlu0 %2060
        %v2062 = vsel %vm1842, %v1990, 0.0
        %2063 = vadd.xlane.f32.xlu0 %v2062
        %v2064 = vpop.xlane.xlu0 %2063
        %v2065 = vsel %vm1842, %v1992, 0.0
        %2066 = vadd.xlane.f32.xlu0 %v2065
        %v2067 = vpop.xlane.xlu0 %2066
        %v2068 = vsel %vm1842, %v1994, 0.0
        %2069 = vadd.xlane.f32.xlu0 %v2068
        %v2070 = vpop.xlane.xlu0 %2069
        %v2071 = vsel %vm1842, %v1996, 0.0
        %2072 = vadd.xlane.f32.xlu0 %v2071
        %v2073 = vpop.xlane.xlu0 %2072
        %v2074 = vsel %vm1842, %v1998, 0.0
        %2075 = vadd.xlane.f32.xlu0 %v2074
        %v2076 = vpop.xlane.xlu0 %2075
        %v2077 = vsel %vm1842, %v2000, 0.0
        %2078 = vadd.xlane.f32.xlu0 %v2077
        %v2079 = vpop.xlane.xlu0 %2078
        %v2080 = vsel %vm1842, %v2002, 0.0
        %2081 = vadd.xlane.f32.xlu0 %v2080
        %v2082 = vpop.xlane.xlu0 %2081
        %v2083 = vsel %vm1842, %v2004, 0.0
        %2084 = vadd.xlane.f32.xlu0 %v2083
        %v2085 = vpop.xlane.xlu0 %2084
        %v2086 = vsel %vm1842, %v2006, 0.0
        %2087 = vadd.xlane.f32.xlu0 %v2086
        %v2088 = vpop.xlane.xlu0 %2087
        %v2089 = vsel %vm1842, %v2008, 0.0
        %2090 = vadd.xlane.f32.xlu0 %v2089
        %v2091 = vpop.xlane.xlu0 %2090
        %v2092 = vsel %vm1842, %v2010, 0.0
        %2093 = vadd.xlane.f32.xlu0 %v2092
        %v2094 = vpop.xlane.xlu0 %2093
        %v2095 = vsel %vm1842, %v2012, 0.0
        %2096 = vadd.xlane.f32.xlu0 %v2095
        %v2097 = vpop.xlane.xlu0 %2096
        %v2098 = vsel %vm1842, %v2014, 0.0
        %2099 = vadd.xlane.f32.xlu0 %v2098
        %v2100 = vpop.xlane.xlu0 %2099
        %v2101 = vsel %vm1842, %v2016, 0.0
        %2102 = vadd.xlane.f32.xlu0 %v2101
        %v2103 = vpop.xlane.xlu0 %2102
        %v2104 = vsel %vm1842, %v2018, 0.0
        %2105 = vadd.xlane.f32.xlu0 %v2104
        %v2106 = vpop.xlane.xlu0 %2105
        %v2107 = vsel %vm1842, %v2020, 0.0
        %2108 = vadd.xlane.f32.xlu0 %v2107
        %v2109 = vpop.xlane.xlu0 %2108
        %v2110 = vsel %vm1842, %v2022, 0.0
        %2111 = vadd.xlane.f32.xlu0 %v2110
        %v2112 = vpop.xlane.xlu0 %2111
        %v2113 = vsel %vm1842, %v2024, 0.0
        %2114 = vadd.xlane.f32.xlu0 %v2113
        %v2115 = vpop.xlane.xlu0 %2114
        %v2116 = vsel %vm1842, %v2026, 0.0
        %2117 = vadd.xlane.f32.xlu0 %v2116
        %v2118 = vpop.xlane.xlu0 %2117
        %v2119 = vsel %vm1842, %v2028, 0.0
        %2120 = vadd.xlane.f32.xlu0 %v2119
        %v2121 = vpop.xlane.xlu0 %2120
        %v2122 = vsel %vm1842, %v2030, 0.0
        %2123 = vadd.xlane.f32.xlu0 %v2122
        %v2124 = vpop.xlane.xlu0 %2123
        %v2125 = vsel %vm1842, %v2032, 0.0
        %2126 = vadd.xlane.f32.xlu0 %v2125
        %v2127 = vpop.xlane.xlu0 %2126
        %v2128 = vsel %vm1842, %v2034, 0.0
        %2129 = vadd.xlane.f32.xlu0 %v2128
        %v2130 = vpop.xlane.xlu0 %2129
        %v2131 = vrcp.pop %v2037
        %v2132 = vrcp.pop %v2040
        %v2133 = vrcp.pop %v2043
        %v2134 = vrcp.pop %v2046
        %v2135 = vrcp.pop %v2049
        %v2136 = vrcp.pop %v2052
        %v2137 = vrcp.pop %v2055
        %v2138 = vrcp.pop %v2058
        %v2139 = vrcp.pop %v2061
        %v2140 = vrcp.pop %v2064
        %v2141 = vrcp.pop %v2067
        %v2142 = vrcp.pop %v2070
        %v2143 = vrcp.pop %v2073
        %v2144 = vrcp.pop %v2076
        %v2145 = vrcp.pop %v2079
        %v2146 = vrcp.pop %v2082
        %v2147 = vrcp.pop %v2085
        %v2148 = vrcp.pop %v2088
        %v2149 = vrcp.pop %v2091
        %v2150 = vrcp.pop %v2094
        %v2151 = vrcp.pop %v2097
        %v2152 = vrcp.pop %v2100
        %v2153 = vrcp.pop %v2103
        %v2154 = vrcp.pop %v2106
        %v2155 = vrcp.pop %v2109
        %v2156 = vrcp.pop %v2112
        %v2157 = vrcp.pop %v2115
        %v2158 = vrcp.pop %v2118
        %v2159 = vrcp.pop %v2121
        %v2160 = vrcp.pop %v2124
        %v2161 = vrcp.pop %v2127
        %v2162 = vrcp.pop %v2130
        %v2163 = vmul.f32 %v1972, %v2131
        %v2164 = vmul.f32 %v1974, %v2132
        %v2165 = vmul.f32 %v1976, %v2133
        %v2166 = vmul.f32 %v1978, %v2134
        %v2167 = vmul.f32 %v1980, %v2135
        %v2168 = vmul.f32 %v1982, %v2136
        %v2169 = vmul.f32 %v1984, %v2137
        %v2170 = vmul.f32 %v1986, %v2138
        %v2171 = vmul.f32 %v1988, %v2139
        %v2172 = vmul.f32 %v1990, %v2140
        %v2173 = vmul.f32 %v1992, %v2141
        %v2174 = vmul.f32 %v1994, %v2142
        %v2175 = vmul.f32 %v1996, %v2143
        %v2176 = vmul.f32 %v1998, %v2144
        %v2177 = vmul.f32 %v2000, %v2145
        %v2178 = vmul.f32 %v2002, %v2146
        %v2179 = vmul.f32 %v2004, %v2147
        %v2180 = vmul.f32 %v2006, %v2148
        %v2181 = vmul.f32 %v2008, %v2149
        %v2182 = vmul.f32 %v2010, %v2150
        %v2183 = vmul.f32 %v2012, %v2151
        %v2184 = vmul.f32 %v2014, %v2152
        %v2185 = vmul.f32 %v2016, %v2153
        %v2186 = vmul.f32 %v2018, %v2154
        %v2187 = vmul.f32 %v2020, %v2155
        %v2188 = vmul.f32 %v2022, %v2156
        %v2189 = vmul.f32 %v2024, %v2157
        %v2190 = vmul.f32 %v2026, %v2158
        %v2191 = vmul.f32 %v2028, %v2159
        %v2192 = vmul.f32 %v2030, %v2160
        %v2193 = vmul.f32 %v2032, %v2161
        %v2194 = vmul.f32 %v2034, %v2162
        %v2195 = vpack.c.bf16 %v2164, %v2163
        %v2196 = vpack.c.bf16 %v2166, %v2165
        %v2197 = vpack.c.bf16 %v2168, %v2167
        %v2198 = vpack.c.bf16 %v2170, %v2169
        %v2199 = vpack.c.bf16 %v2172, %v2171
        %v2200 = vpack.c.bf16 %v2174, %v2173
        %v2201 = vpack.c.bf16 %v2176, %v2175
        %v2202 = vpack.c.bf16 %v2178, %v2177
        %v2203 = vpack.c.bf16 %v2180, %v2179
        %v2204 = vpack.c.bf16 %v2182, %v2181
        %v2205 = vpack.c.bf16 %v2184, %v2183
        %v2206 = vpack.c.bf16 %v2186, %v2185
        %v2207 = vpack.c.bf16 %v2188, %v2187
        %v2208 = vpack.c.bf16 %v2190, %v2189
        %v2209 = vpack.c.bf16 %v2192, %v2191
        %v2210 = vpack.c.bf16 %v2194, %v2193
        %v2211 = vcombine.low %v889, %v897
        %v2213 = vunpack.c.l.s4 1983009808
        %v2214 = vunpack.c.0.s8 %v2213
        %v2215 = vlaneseq
        %v2216 = vshrl.u32 %v2215, 7
        %v2217 = vsub.s32 %v2214, %v2216
        %v2218 = vrot.slane %v2211, %v2217
        %v2219 = vcombine.low %v893, %v901
        %v2221 = vunpack.c.l.s4 1983009808
        %v2222 = vunpack.c.0.s8 %v2221
        %v2223 = vlaneseq
        %v2224 = vshrl.u32 %v2223, 7
        %v2225 = vsub.s32 %v2222, %v2224
        %v2226 = vrot.slane %v2219, %v2225
        %v2227 = vcombine.low %v2218, %v2226
        %v2228 = vcombine.high %v2218, %v2226
        %v2230 = vunpack.c.l.s4 1934713408
        %v2231 = vunpack.c.0.s8 %v2230
        %v2232 = vlaneseq
        %v2233 = vshrl.u32 %v2232, 7
        %v2234 = vsub.s32 %v2231, %v2233
        %v2235 = vrot.slane %v2227, %v2234
        %v2237 = vunpack.c.l.s4 1934713408
        %v2238 = vunpack.c.0.s8 %v2237
        %v2239 = vlaneseq
        %v2240 = vshrl.u32 %v2239, 7
        %v2241 = vsub.s32 %v2238, %v2240
        %v2242 = vrot.slane %v2228, %v2241
        %v2243 = vcombine.high %v2235, 0
        %v2244 = vcombine.high %v2242, 0
        %v2245 = vcombine.low %v891, %v899
        %v2247 = vunpack.c.l.s4 1983009808
        %v2248 = vunpack.c.0.s8 %v2247
        %v2249 = vlaneseq
        %v2250 = vshrl.u32 %v2249, 7
        %v2251 = vsub.s32 %v2248, %v2250
        %v2252 = vrot.slane %v2245, %v2251
        %v2253 = vcombine.low %v895, %v903
        %v2255 = vunpack.c.l.s4 1983009808
        %v2256 = vunpack.c.0.s8 %v2255
        %v2257 = vlaneseq
        %v2258 = vshrl.u32 %v2257, 7
        %v2259 = vsub.s32 %v2256, %v2258
        %v2260 = vrot.slane %v2253, %v2259
        %v2261 = vcombine.low %v2252, %v2260
        %v2262 = vcombine.high %v2252, %v2260
        %v2264 = vunpack.c.l.s4 1934713408
        %v2265 = vunpack.c.0.s8 %v2264
        %v2266 = vlaneseq
        %v2267 = vshrl.u32 %v2266, 7
        %v2268 = vsub.s32 %v2265, %v2267
        %v2269 = vrot.slane %v2261, %v2268
        %v2271 = vunpack.c.l.s4 1934713408
        %v2272 = vunpack.c.0.s8 %v2271
        %v2273 = vlaneseq
        %v2274 = vshrl.u32 %v2273, 7
        %v2275 = vsub.s32 %v2272, %v2274
        %v2276 = vrot.slane %v2262, %v2275
        %v2277 = vcombine.high %v2269, 0
        %v2278 = vcombine.high %v2276, 0
        %v2279 = vcombine.low %v905, %v913
        %v2281 = vunpack.c.l.s4 1983009808
        %v2282 = vunpack.c.0.s8 %v2281
        %v2283 = vlaneseq
        %v2284 = vshrl.u32 %v2283, 7
        %v2285 = vsub.s32 %v2282, %v2284
        %v2286 = vrot.slane %v2279, %v2285
        %v2287 = vcombine.low %v909, %v917
        %v2289 = vunpack.c.l.s4 1983009808
        %v2290 = vunpack.c.0.s8 %v2289
        %v2291 = vlaneseq
        %v2292 = vshrl.u32 %v2291, 7
        %v2293 = vsub.s32 %v2290, %v2292
        %v2294 = vrot.slane %v2287, %v2293
        %v2295 = vcombine.low %v2286, %v2294
        %v2296 = vcombine.high %v2286, %v2294
        %v2298 = vunpack.c.l.s4 1934713408
        %v2299 = vunpack.c.0.s8 %v2298
        %v2300 = vlaneseq
        %v2301 = vshrl.u32 %v2300, 7
        %v2302 = vsub.s32 %v2299, %v2301
        %v2303 = vrot.slane %v2295, %v2302
        %v2305 = vunpack.c.l.s4 1934713408
        %v2306 = vunpack.c.0.s8 %v2305
        %v2307 = vlaneseq
        %v2308 = vshrl.u32 %v2307, 7
        %v2309 = vsub.s32 %v2306, %v2308
        %v2310 = vrot.slane %v2296, %v2309
        %v2311 = vcombine.high %v2303, 0
        %v2312 = vcombine.high %v2310, 0
        %v2313 = vcombine.low %v907, %v915
        %v2315 = vunpack.c.l.s4 1983009808
        %v2316 = vunpack.c.0.s8 %v2315
        %v2317 = vlaneseq
        %v2318 = vshrl.u32 %v2317, 7
        %v2319 = vsub.s32 %v2316, %v2318
        %v2320 = vrot.slane %v2313, %v2319
        %v2321 = vcombine.low %v911, %v919
        %v2323 = vunpack.c.l.s4 1983009808
        %v2324 = vunpack.c.0.s8 %v2323
        %v2325 = vlaneseq
        %v2326 = vshrl.u32 %v2325, 7
        %v2327 = vsub.s32 %v2324, %v2326
        %v2328 = vrot.slane %v2321, %v2327
        %v2329 = vcombine.low %v2320, %v2328
        %v2330 = vcombine.high %v2320, %v2328
        %v2332 = vunpack.c.l.s4 1934713408
        %v2333 = vunpack.c.0.s8 %v2332
        %v2334 = vlaneseq
        %v2335 = vshrl.u32 %v2334, 7
        %v2336 = vsub.s32 %v2333, %v2335
        %v2337 = vrot.slane %v2329, %v2336
        %v2339 = vunpack.c.l.s4 1934713408
        %v2340 = vunpack.c.0.s8 %v2339
        %v2341 = vlaneseq
        %v2342 = vshrl.u32 %v2341, 7
        %v2343 = vsub.s32 %v2340, %v2342
        %v2344 = vrot.slane %v2330, %v2343
        %v2345 = vcombine.high %v2337, 0
        %v2346 = vcombine.high %v2344, 0
        %v2347 = vcombine.low %v890, %v898
        %v2349 = vunpack.c.l.s4 1983009808
        %v2350 = vunpack.c.0.s8 %v2349
        %v2351 = vlaneseq
        %v2352 = vshrl.u32 %v2351, 7
        %v2353 = vsub.s32 %v2350, %v2352
        %v2354 = vrot.slane %v2347, %v2353
        %v2355 = vcombine.low %v894, %v902
        %v2357 = vunpack.c.l.s4 1983009808
        %v2358 = vunpack.c.0.s8 %v2357
        %v2359 = vlaneseq
        %v2360 = vshrl.u32 %v2359, 7
        %v2361 = vsub.s32 %v2358, %v2360
        %v2362 = vrot.slane %v2355, %v2361
        %v2363 = vcombine.low %v2354, %v2362
        %v2364 = vcombine.high %v2354, %v2362
        %v2366 = vunpack.c.l.s4 1934713408
        %v2367 = vunpack.c.0.s8 %v2366
        %v2368 = vlaneseq
        %v2369 = vshrl.u32 %v2368, 7
        %v2370 = vsub.s32 %v2367, %v2369
        %v2371 = vrot.slane %v2363, %v2370
        %v2373 = vunpack.c.l.s4 1934713408
        %v2374 = vunpack.c.0.s8 %v2373
        %v2375 = vlaneseq
        %v2376 = vshrl.u32 %v2375, 7
        %v2377 = vsub.s32 %v2374, %v2376
        %v2378 = vrot.slane %v2364, %v2377
        %v2379 = vcombine.high %v2371, 0
        %v2380 = vcombine.high %v2378, 0
        %v2381 = vcombine.low %v892, %v900
        %v2383 = vunpack.c.l.s4 1983009808
        %v2384 = vunpack.c.0.s8 %v2383
        %v2385 = vlaneseq
        %v2386 = vshrl.u32 %v2385, 7
        %v2387 = vsub.s32 %v2384, %v2386
        %v2388 = vrot.slane %v2381, %v2387
        %v2389 = vcombine.low %v896, %v904
        %v2391 = vunpack.c.l.s4 1983009808
        %v2392 = vunpack.c.0.s8 %v2391
        %v2393 = vlaneseq
        %v2394 = vshrl.u32 %v2393, 7
        %v2395 = vsub.s32 %v2392, %v2394
        %v2396 = vrot.slane %v2389, %v2395
        %v2397 = vcombine.low %v2388, %v2396
        %v2398 = vcombine.high %v2388, %v2396
        %v2400 = vunpack.c.l.s4 1934713408
        %v2401 = vunpack.c.0.s8 %v2400
        %v2402 = vlaneseq
        %v2403 = vshrl.u32 %v2402, 7
        %v2404 = vsub.s32 %v2401, %v2403
        %v2405 = vrot.slane %v2397, %v2404
        %v2407 = vunpack.c.l.s4 1934713408
        %v2408 = vunpack.c.0.s8 %v2407
        %v2409 = vlaneseq
        %v2410 = vshrl.u32 %v2409, 7
        %v2411 = vsub.s32 %v2408, %v2410
        %v2412 = vrot.slane %v2398, %v2411
        %v2413 = vcombine.high %v2405, 0
        %v2414 = vcombine.high %v2412, 0
        %v2415 = vcombine.low %v906, %v914
        %v2417 = vunpack.c.l.s4 1983009808
        %v2418 = vunpack.c.0.s8 %v2417
        %v2419 = vlaneseq
        %v2420 = vshrl.u32 %v2419, 7
        %v2421 = vsub.s32 %v2418, %v2420
        %v2422 = vrot.slane %v2415, %v2421
        %v2423 = vcombine.low %v910, %v918
        %v2425 = vunpack.c.l.s4 1983009808
        %v2426 = vunpack.c.0.s8 %v2425
        %v2427 = vlaneseq
        %v2428 = vshrl.u32 %v2427, 7
        %v2429 = vsub.s32 %v2426, %v2428
        %v2430 = vrot.slane %v2423, %v2429
        %v2431 = vcombine.low %v2422, %v2430
        %v2432 = vcombine.high %v2422, %v2430
        %v2434 = vunpack.c.l.s4 1934713408
        %v2435 = vunpack.c.0.s8 %v2434
        %v2436 = vlaneseq
        %v2437 = vshrl.u32 %v2436, 7
        %v2438 = vsub.s32 %v2435, %v2437
        %v2439 = vrot.slane %v2431, %v2438
        %v2441 = vunpack.c.l.s4 1934713408
        %v2442 = vunpack.c.0.s8 %v2441
        %v2443 = vlaneseq
        %v2444 = vshrl.u32 %v2443, 7
        %v2445 = vsub.s32 %v2442, %v2444
        %v2446 = vrot.slane %v2432, %v2445
        %v2447 = vcombine.high %v2439, 0
        %v2448 = vcombine.high %v2446, 0
        %v2449 = vcombine.low %v908, %v916
        %v2451 = vunpack.c.l.s4 1983009808
        %v2452 = vunpack.c.0.s8 %v2451
        %v2453 = vlaneseq
        %v2454 = vshrl.u32 %v2453, 7
        %v2455 = vsub.s32 %v2452, %v2454
        %v2456 = vrot.slane %v2449, %v2455
        %v2457 = vcombine.low %v912, %v920
        %v2459 = vunpack.c.l.s4 1983009808
        %v2460 = vunpack.c.0.s8 %v2459
        %v2461 = vlaneseq
        %v2462 = vshrl.u32 %v2461, 7
        %v2463 = vsub.s32 %v2460, %v2462
        %v2464 = vrot.slane %v2457, %v2463
        %v2465 = vcombine.low %v2456, %v2464
        %v2466 = vcombine.high %v2456, %v2464
        %v2468 = vunpack.c.l.s4 1934713408
        %v2469 = vunpack.c.0.s8 %v2468
        %v2470 = vlaneseq
        %v2471 = vshrl.u32 %v2470, 7
        %v2472 = vsub.s32 %v2469, %v2471
        %v2473 = vrot.slane %v2465, %v2472
        %v2475 = vunpack.c.l.s4 1934713408
        %v2476 = vunpack.c.0.s8 %v2475
        %v2477 = vlaneseq
        %v2478 = vshrl.u32 %v2477, 7
        %v2479 = vsub.s32 %v2476, %v2478
        %v2480 = vrot.slane %v2466, %v2479
        %v2481 = vcombine.high %v2473, 0
        %v2482 = vcombine.high %v2480, 0
        %v2485 = vpack.i.b16 %v2269, %v2235
        %v2486 = vshrl.u32 %v2235, 16
        %v2487 = vshrl.u32 %v2269, 16
        %v2488 = vpack.i.b16 %v2487, %v2486
        %v2491 = vpack.i.b16 %v2277, %v2243
        %v2492 = vshrl.u32 %v2243, 16
        %v2493 = vshrl.u32 %v2277, 16
        %v2494 = vpack.i.b16 %v2493, %v2492
        %v2497 = vpack.i.b16 %v2276, %v2242
        %v2498 = vshrl.u32 %v2242, 16
        %v2499 = vshrl.u32 %v2276, 16
        %v2500 = vpack.i.b16 %v2499, %v2498
        %v2503 = vpack.i.b16 %v2278, %v2244
        %v2504 = vshrl.u32 %v2244, 16
        %v2505 = vshrl.u32 %v2278, 16
        %v2506 = vpack.i.b16 %v2505, %v2504
        %v2509 = vpack.i.b16 %v2405, %v2371
        %v2510 = vshrl.u32 %v2371, 16
        %v2511 = vshrl.u32 %v2405, 16
        %v2512 = vpack.i.b16 %v2511, %v2510
        %v2515 = vpack.i.b16 %v2413, %v2379
        %v2516 = vshrl.u32 %v2379, 16
        %v2517 = vshrl.u32 %v2413, 16
        %v2518 = vpack.i.b16 %v2517, %v2516
        %v2521 = vpack.i.b16 %v2412, %v2378
        %v2522 = vshrl.u32 %v2378, 16
        %v2523 = vshrl.u32 %v2412, 16
        %v2524 = vpack.i.b16 %v2523, %v2522
        %v2527 = vpack.i.b16 %v2414, %v2380
        %v2528 = vshrl.u32 %v2380, 16
        %v2529 = vshrl.u32 %v2414, 16
        %v2530 = vpack.i.b16 %v2529, %v2528
        %v2533 = vpack.i.b16 %v2337, %v2303
        %v2534 = vshrl.u32 %v2303, 16
        %v2535 = vshrl.u32 %v2337, 16
        %v2536 = vpack.i.b16 %v2535, %v2534
        %v2539 = vpack.i.b16 %v2345, %v2311
        %v2540 = vshrl.u32 %v2311, 16
        %v2541 = vshrl.u32 %v2345, 16
        %v2542 = vpack.i.b16 %v2541, %v2540
        %v2545 = vpack.i.b16 %v2344, %v2310
        %v2546 = vshrl.u32 %v2310, 16
        %v2547 = vshrl.u32 %v2344, 16
        %v2548 = vpack.i.b16 %v2547, %v2546
        %v2551 = vpack.i.b16 %v2346, %v2312
        %v2552 = vshrl.u32 %v2312, 16
        %v2553 = vshrl.u32 %v2346, 16
        %v2554 = vpack.i.b16 %v2553, %v2552
        %v2557 = vpack.i.b16 %v2473, %v2439
        %v2558 = vshrl.u32 %v2439, 16
        %v2559 = vshrl.u32 %v2473, 16
        %v2560 = vpack.i.b16 %v2559, %v2558
        %v2563 = vpack.i.b16 %v2481, %v2447
        %v2564 = vshrl.u32 %v2447, 16
        %v2565 = vshrl.u32 %v2481, 16
        %v2566 = vpack.i.b16 %v2565, %v2564
        %v2569 = vpack.i.b16 %v2480, %v2446
        %v2570 = vshrl.u32 %v2446, 16
        %v2571 = vshrl.u32 %v2480, 16
        %v2572 = vpack.i.b16 %v2571, %v2570
        %v2575 = vpack.i.b16 %v2482, %v2448
        %v2576 = vshrl.u32 %v2448, 16
        %v2577 = vshrl.u32 %v2482, 16
        %v2578 = vpack.i.b16 %v2577, %v2576
        %v2579 = vcombine.low %v921, %v929
        %v2581 = vunpack.c.l.s4 1983009808
        %v2582 = vunpack.c.0.s8 %v2581
        %v2583 = vlaneseq
        %v2584 = vshrl.u32 %v2583, 7
        %v2585 = vsub.s32 %v2582, %v2584
        %v2586 = vrot.slane %v2579, %v2585
        %v2587 = vcombine.low %v925, %v933
        %v2589 = vunpack.c.l.s4 1983009808
        %v2590 = vunpack.c.0.s8 %v2589
        %v2591 = vlaneseq
        %v2592 = vshrl.u32 %v2591, 7
        %v2593 = vsub.s32 %v2590, %v2592
        %v2594 = vrot.slane %v2587, %v2593
        %v2595 = vcombine.low %v2586, %v2594
        %v2596 = vcombine.high %v2586, %v2594
        %v2598 = vunpack.c.l.s4 1934713408
        %v2599 = vunpack.c.0.s8 %v2598
        %v2600 = vlaneseq
        %v2601 = vshrl.u32 %v2600, 7
        %v2602 = vsub.s32 %v2599, %v2601
        %v2603 = vrot.slane %v2595, %v2602
        %v2605 = vunpack.c.l.s4 1934713408
        %v2606 = vunpack.c.0.s8 %v2605
        %v2607 = vlaneseq
        %v2608 = vshrl.u32 %v2607, 7
        %v2609 = vsub.s32 %v2606, %v2608
        %v2610 = vrot.slane %v2596, %v2609
        %v2611 = vcombine.high %v2603, 0
        %v2612 = vcombine.high %v2610, 0
        %v2613 = vcombine.low %v923, %v931
        %v2615 = vunpack.c.l.s4 1983009808
        %v2616 = vunpack.c.0.s8 %v2615
        %v2617 = vlaneseq
        %v2618 = vshrl.u32 %v2617, 7
        %v2619 = vsub.s32 %v2616, %v2618
        %v2620 = vrot.slane %v2613, %v2619
        %v2621 = vcombine.low %v927, %v935
        %v2623 = vunpack.c.l.s4 1983009808
        %v2624 = vunpack.c.0.s8 %v2623
        %v2625 = vlaneseq
        %v2626 = vshrl.u32 %v2625, 7
        %v2627 = vsub.s32 %v2624, %v2626
        %v2628 = vrot.slane %v2621, %v2627
        %v2629 = vcombine.low %v2620, %v2628
        %v2630 = vcombine.high %v2620, %v2628
        %v2632 = vunpack.c.l.s4 1934713408
        %v2633 = vunpack.c.0.s8 %v2632
        %v2634 = vlaneseq
        %v2635 = vshrl.u32 %v2634, 7
        %v2636 = vsub.s32 %v2633, %v2635
        %v2637 = vrot.slane %v2629, %v2636
        %v2639 = vunpack.c.l.s4 1934713408
        %v2640 = vunpack.c.0.s8 %v2639
        %v2641 = vlaneseq
        %v2642 = vshrl.u32 %v2641, 7
        %v2643 = vsub.s32 %v2640, %v2642
        %v2644 = vrot.slane %v2630, %v2643
        %v2645 = vcombine.high %v2637, 0
        %v2646 = vcombine.high %v2644, 0
        %v2647 = vcombine.low %v937, %v945
        %v2649 = vunpack.c.l.s4 1983009808
        %v2650 = vunpack.c.0.s8 %v2649
        %v2651 = vlaneseq
        %v2652 = vshrl.u32 %v2651, 7
        %v2653 = vsub.s32 %v2650, %v2652
        %v2654 = vrot.slane %v2647, %v2653
        %v2655 = vcombine.low %v941, %v949
        %v2657 = vunpack.c.l.s4 1983009808
        %v2658 = vunpack.c.0.s8 %v2657
        %v2659 = vlaneseq
        %v2660 = vshrl.u32 %v2659, 7
        %v2661 = vsub.s32 %v2658, %v2660
        %v2662 = vrot.slane %v2655, %v2661
        %v2663 = vcombine.low %v2654, %v2662
        %v2664 = vcombine.high %v2654, %v2662
        %v2666 = vunpack.c.l.s4 1934713408
        %v2667 = vunpack.c.0.s8 %v2666
        %v2668 = vlaneseq
        %v2669 = vshrl.u32 %v2668, 7
        %v2670 = vsub.s32 %v2667, %v2669
        %v2671 = vrot.slane %v2663, %v2670
        %v2673 = vunpack.c.l.s4 1934713408
        %v2674 = vunpack.c.0.s8 %v2673
        %v2675 = vlaneseq
        %v2676 = vshrl.u32 %v2675, 7
        %v2677 = vsub.s32 %v2674, %v2676
        %v2678 = vrot.slane %v2664, %v2677
        %v2679 = vcombine.high %v2671, 0
        %v2680 = vcombine.high %v2678, 0
        %v2681 = vcombine.low %v939, %v947
        %v2683 = vunpack.c.l.s4 1983009808
        %v2684 = vunpack.c.0.s8 %v2683
        %v2685 = vlaneseq
        %v2686 = vshrl.u32 %v2685, 7
        %v2687 = vsub.s32 %v2684, %v2686
        %v2688 = vrot.slane %v2681, %v2687
        %v2689 = vcombine.low %v943, %v951
        %v2691 = vunpack.c.l.s4 1983009808
        %v2692 = vunpack.c.0.s8 %v2691
        %v2693 = vlaneseq
        %v2694 = vshrl.u32 %v2693, 7
        %v2695 = vsub.s32 %v2692, %v2694
        %v2696 = vrot.slane %v2689, %v2695
        %v2697 = vcombine.low %v2688, %v2696
        %v2698 = vcombine.high %v2688, %v2696
        %v2700 = vunpack.c.l.s4 1934713408
        %v2701 = vunpack.c.0.s8 %v2700
        %v2702 = vlaneseq
        %v2703 = vshrl.u32 %v2702, 7
        %v2704 = vsub.s32 %v2701, %v2703
        %v2705 = vrot.slane %v2697, %v2704
        %v2707 = vunpack.c.l.s4 1934713408
        %v2708 = vunpack.c.0.s8 %v2707
        %v2709 = vlaneseq
        %v2710 = vshrl.u32 %v2709, 7
        %v2711 = vsub.s32 %v2708, %v2710
        %v2712 = vrot.slane %v2698, %v2711
        %v2713 = vcombine.high %v2705, 0
        %v2714 = vcombine.high %v2712, 0
        %v2715 = vcombine.low %v922, %v930
        %v2717 = vunpack.c.l.s4 1983009808
        %v2718 = vunpack.c.0.s8 %v2717
        %v2719 = vlaneseq
        %v2720 = vshrl.u32 %v2719, 7
        %v2721 = vsub.s32 %v2718, %v2720
        %v2722 = vrot.slane %v2715, %v2721
        %v2723 = vcombine.low %v926, %v934
        %v2725 = vunpack.c.l.s4 1983009808
        %v2726 = vunpack.c.0.s8 %v2725
        %v2727 = vlaneseq
        %v2728 = vshrl.u32 %v2727, 7
        %v2729 = vsub.s32 %v2726, %v2728
        %v2730 = vrot.slane %v2723, %v2729
        %v2731 = vcombine.low %v2722, %v2730
        %v2732 = vcombine.high %v2722, %v2730
        %v2734 = vunpack.c.l.s4 1934713408
        %v2735 = vunpack.c.0.s8 %v2734
        %v2736 = vlaneseq
        %v2737 = vshrl.u32 %v2736, 7
        %v2738 = vsub.s32 %v2735, %v2737
        %v2739 = vrot.slane %v2731, %v2738
        %v2741 = vunpack.c.l.s4 1934713408
        %v2742 = vunpack.c.0.s8 %v2741
        %v2743 = vlaneseq
        %v2744 = vshrl.u32 %v2743, 7
        %v2745 = vsub.s32 %v2742, %v2744
        %v2746 = vrot.slane %v2732, %v2745
        %v2747 = vcombine.high %v2739, 0
        %v2748 = vcombine.high %v2746, 0
        %v2749 = vcombine.low %v924, %v932
        %v2751 = vunpack.c.l.s4 1983009808
        %v2752 = vunpack.c.0.s8 %v2751
        %v2753 = vlaneseq
        %v2754 = vshrl.u32 %v2753, 7
        %v2755 = vsub.s32 %v2752, %v2754
        %v2756 = vrot.slane %v2749, %v2755
        %v2757 = vcombine.low %v928, %v936
        %v2759 = vunpack.c.l.s4 1983009808
        %v2760 = vunpack.c.0.s8 %v2759
        %v2761 = vlaneseq
        %v2762 = vshrl.u32 %v2761, 7
        %v2763 = vsub.s32 %v2760, %v2762
        %v2764 = vrot.slane %v2757, %v2763
        %v2765 = vcombine.low %v2756, %v2764
        %v2766 = vcombine.high %v2756, %v2764
        %v2768 = vunpack.c.l.s4 1934713408
        %v2769 = vunpack.c.0.s8 %v2768
        %v2770 = vlaneseq
        %v2771 = vshrl.u32 %v2770, 7
        %v2772 = vsub.s32 %v2769, %v2771
        %v2773 = vrot.slane %v2765, %v2772
        %v2775 = vunpack.c.l.s4 1934713408
        %v2776 = vunpack.c.0.s8 %v2775
        %v2777 = vlaneseq
        %v2778 = vshrl.u32 %v2777, 7
        %v2779 = vsub.s32 %v2776, %v2778
        %v2780 = vrot.slane %v2766, %v2779
        %v2781 = vcombine.high %v2773, 0
        %v2782 = vcombine.high %v2780, 0
        %v2783 = vcombine.low %v938, %v946
        %v2785 = vunpack.c.l.s4 1983009808
        %v2786 = vunpack.c.0.s8 %v2785
        %v2787 = vlaneseq
        %v2788 = vshrl.u32 %v2787, 7
        %v2789 = vsub.s32 %v2786, %v2788
        %v2790 = vrot.slane %v2783, %v2789
        %v2791 = vcombine.low %v942, %v950
        %v2793 = vunpack.c.l.s4 1983009808
        %v2794 = vunpack.c.0.s8 %v2793
        %v2795 = vlaneseq
        %v2796 = vshrl.u32 %v2795, 7
        %v2797 = vsub.s32 %v2794, %v2796
        %v2798 = vrot.slane %v2791, %v2797
        %v2799 = vcombine.low %v2790, %v2798
        %v2800 = vcombine.high %v2790, %v2798
        %v2802 = vunpack.c.l.s4 1934713408
        %v2803 = vunpack.c.0.s8 %v2802
        %v2804 = vlaneseq
        %v2805 = vshrl.u32 %v2804, 7
        %v2806 = vsub.s32 %v2803, %v2805
        %v2807 = vrot.slane %v2799, %v2806
        %v2809 = vunpack.c.l.s4 1934713408
        %v2810 = vunpack.c.0.s8 %v2809
        %v2811 = vlaneseq
        %v2812 = vshrl.u32 %v2811, 7
        %v2813 = vsub.s32 %v2810, %v2812
        %v2814 = vrot.slane %v2800, %v2813
        %v2815 = vcombine.high %v2807, 0
        %v2816 = vcombine.high %v2814, 0
        %v2817 = vcombine.low %v940, %v948
        %v2819 = vunpack.c.l.s4 1983009808
        %v2820 = vunpack.c.0.s8 %v2819
        %v2821 = vlaneseq
        %v2822 = vshrl.u32 %v2821, 7
        %v2823 = vsub.s32 %v2820, %v2822
        %v2824 = vrot.slane %v2817, %v2823
        %v2825 = vcombine.low %v944, %v952
        %v2827 = vunpack.c.l.s4 1983009808
        %v2828 = vunpack.c.0.s8 %v2827
        %v2829 = vlaneseq
        %v2830 = vshrl.u32 %v2829, 7
        %v2831 = vsub.s32 %v2828, %v2830
        %v2832 = vrot.slane %v2825, %v2831
        %v2833 = vcombine.low %v2824, %v2832
        %v2834 = vcombine.high %v2824, %v2832
        %v2836 = vunpack.c.l.s4 1934713408
        %v2837 = vunpack.c.0.s8 %v2836
        %v2838 = vlaneseq
        %v2839 = vshrl.u32 %v2838, 7
        %v2840 = vsub.s32 %v2837, %v2839
        %v2841 = vrot.slane %v2833, %v2840
        %v2843 = vunpack.c.l.s4 1934713408
        %v2844 = vunpack.c.0.s8 %v2843
        %v2845 = vlaneseq
        %v2846 = vshrl.u32 %v2845, 7
        %v2847 = vsub.s32 %v2844, %v2846
        %v2848 = vrot.slane %v2834, %v2847
        %v2849 = vcombine.high %v2841, 0
        %v2850 = vcombine.high %v2848, 0
        %v2853 = vpack.i.b16 %v2637, %v2603
        %v2854 = vshrl.u32 %v2603, 16
        %v2855 = vshrl.u32 %v2637, 16
        %v2856 = vpack.i.b16 %v2855, %v2854
        %v2859 = vpack.i.b16 %v2645, %v2611
        %v2860 = vshrl.u32 %v2611, 16
        %v2861 = vshrl.u32 %v2645, 16
        %v2862 = vpack.i.b16 %v2861, %v2860
        %v2865 = vpack.i.b16 %v2644, %v2610
        %v2866 = vshrl.u32 %v2610, 16
        %v2867 = vshrl.u32 %v2644, 16
        %v2868 = vpack.i.b16 %v2867, %v2866
        %v2871 = vpack.i.b16 %v2646, %v2612
        %v2872 = vshrl.u32 %v2612, 16
        %v2873 = vshrl.u32 %v2646, 16
        %v2874 = vpack.i.b16 %v2873, %v2872
        %v2877 = vpack.i.b16 %v2773, %v2739
        %v2878 = vshrl.u32 %v2739, 16
        %v2879 = vshrl.u32 %v2773, 16
        %v2880 = vpack.i.b16 %v2879, %v2878
        %v2883 = vpack.i.b16 %v2781, %v2747
        %v2884 = vshrl.u32 %v2747, 16
        %v2885 = vshrl.u32 %v2781, 16
        %v2886 = vpack.i.b16 %v2885, %v2884
        %v2889 = vpack.i.b16 %v2780, %v2746
        %v2890 = vshrl.u32 %v2746, 16
        %v2891 = vshrl.u32 %v2780, 16
        %v2892 = vpack.i.b16 %v2891, %v2890
        %v2895 = vpack.i.b16 %v2782, %v2748
        %v2896 = vshrl.u32 %v2748, 16
        %v2897 = vshrl.u32 %v2782, 16
        %v2898 = vpack.i.b16 %v2897, %v2896
        %v2901 = vpack.i.b16 %v2705, %v2671
        %v2902 = vshrl.u32 %v2671, 16
        %v2903 = vshrl.u32 %v2705, 16
        %v2904 = vpack.i.b16 %v2903, %v2902
        %v2907 = vpack.i.b16 %v2713, %v2679
        %v2908 = vshrl.u32 %v2679, 16
        %v2909 = vshrl.u32 %v2713, 16
        %v2910 = vpack.i.b16 %v2909, %v2908
        %v2913 = vpack.i.b16 %v2712, %v2678
        %v2914 = vshrl.u32 %v2678, 16
        %v2915 = vshrl.u32 %v2712, 16
        %v2916 = vpack.i.b16 %v2915, %v2914
        %v2919 = vpack.i.b16 %v2714, %v2680
        %v2920 = vshrl.u32 %v2680, 16
        %v2921 = vshrl.u32 %v2714, 16
        %v2922 = vpack.i.b16 %v2921, %v2920
        %v2925 = vpack.i.b16 %v2841, %v2807
        %v2926 = vshrl.u32 %v2807, 16
        %v2927 = vshrl.u32 %v2841, 16
        %v2928 = vpack.i.b16 %v2927, %v2926
        %v2931 = vpack.i.b16 %v2849, %v2815
        %v2932 = vshrl.u32 %v2815, 16
        %v2933 = vshrl.u32 %v2849, 16
        %v2934 = vpack.i.b16 %v2933, %v2932
        %v2937 = vpack.i.b16 %v2848, %v2814
        %v2938 = vshrl.u32 %v2814, 16
        %v2939 = vshrl.u32 %v2848, 16
        %v2940 = vpack.i.b16 %v2939, %v2938
        %v2943 = vpack.i.b16 %v2850, %v2816
        %v2944 = vshrl.u32 %v2816, 16
        %v2945 = vshrl.u32 %v2850, 16
        %v2946 = vpack.i.b16 %v2945, %v2944
        %v2947 = vcombine.low %v953, %v961
        %v2949 = vunpack.c.l.s4 1983009808
        %v2950 = vunpack.c.0.s8 %v2949
        %v2951 = vlaneseq
        %v2952 = vshrl.u32 %v2951, 7
        %v2953 = vsub.s32 %v2950, %v2952
        %v2954 = vrot.slane %v2947, %v2953
        %v2955 = vcombine.low %v957, %v965
        %v2957 = vunpack.c.l.s4 1983009808
        %v2958 = vunpack.c.0.s8 %v2957
        %v2959 = vlaneseq
        %v2960 = vshrl.u32 %v2959, 7
        %v2961 = vsub.s32 %v2958, %v2960
        %v2962 = vrot.slane %v2955, %v2961
        %v2963 = vcombine.low %v2954, %v2962
        %v2964 = vcombine.high %v2954, %v2962
        %v2966 = vunpack.c.l.s4 1934713408
        %v2967 = vunpack.c.0.s8 %v2966
        %v2968 = vlaneseq
        %v2969 = vshrl.u32 %v2968, 7
        %v2970 = vsub.s32 %v2967, %v2969
        %v2971 = vrot.slane %v2963, %v2970
        %v2973 = vunpack.c.l.s4 1934713408
        %v2974 = vunpack.c.0.s8 %v2973
        %v2975 = vlaneseq
        %v2976 = vshrl.u32 %v2975, 7
        %v2977 = vsub.s32 %v2974, %v2976
        %v2978 = vrot.slane %v2964, %v2977
        %v2979 = vcombine.high %v2971, 0
        %v2980 = vcombine.high %v2978, 0
        %v2981 = vcombine.low %v955, %v963
        %v2983 = vunpack.c.l.s4 1983009808
        %v2984 = vunpack.c.0.s8 %v2983
        %v2985 = vlaneseq
        %v2986 = vshrl.u32 %v2985, 7
        %v2987 = vsub.s32 %v2984, %v2986
        %v2988 = vrot.slane %v2981, %v2987
        %v2989 = vcombine.low %v959, %v967
        %v2991 = vunpack.c.l.s4 1983009808
        %v2992 = vunpack.c.0.s8 %v2991
        %v2993 = vlaneseq
        %v2994 = vshrl.u32 %v2993, 7
        %v2995 = vsub.s32 %v2992, %v2994
        %v2996 = vrot.slane %v2989, %v2995
        %v2997 = vcombine.low %v2988, %v2996
        %v2998 = vcombine.high %v2988, %v2996
        %v3000 = vunpack.c.l.s4 1934713408
        %v3001 = vunpack.c.0.s8 %v3000
        %v3002 = vlaneseq
        %v3003 = vshrl.u32 %v3002, 7
        %v3004 = vsub.s32 %v3001, %v3003
        %v3005 = vrot.slane %v2997, %v3004
        %v3007 = vunpack.c.l.s4 1934713408
        %v3008 = vunpack.c.0.s8 %v3007
        %v3009 = vlaneseq
        %v3010 = vshrl.u32 %v3009, 7
        %v3011 = vsub.s32 %v3008, %v3010
        %v3012 = vrot.slane %v2998, %v3011
        %v3013 = vcombine.high %v3005, 0
        %v3014 = vcombine.high %v3012, 0
        %v3015 = vcombine.low %v969, %v977
        %v3017 = vunpack.c.l.s4 1983009808
        %v3018 = vunpack.c.0.s8 %v3017
        %v3019 = vlaneseq
        %v3020 = vshrl.u32 %v3019, 7
        %v3021 = vsub.s32 %v3018, %v3020
        %v3022 = vrot.slane %v3015, %v3021
        %v3023 = vcombine.low %v973, %v981
        %v3025 = vunpack.c.l.s4 1983009808
        %v3026 = vunpack.c.0.s8 %v3025
        %v3027 = vlaneseq
        %v3028 = vshrl.u32 %v3027, 7
        %v3029 = vsub.s32 %v3026, %v3028
        %v3030 = vrot.slane %v3023, %v3029
        %v3031 = vcombine.low %v3022, %v3030
        %v3032 = vcombine.high %v3022, %v3030
        %v3034 = vunpack.c.l.s4 1934713408
        %v3035 = vunpack.c.0.s8 %v3034
        %v3036 = vlaneseq
        %v3037 = vshrl.u32 %v3036, 7
        %v3038 = vsub.s32 %v3035, %v3037
        %v3039 = vrot.slane %v3031, %v3038
        %v3041 = vunpack.c.l.s4 1934713408
        %v3042 = vunpack.c.0.s8 %v3041
        %v3043 = vlaneseq
        %v3044 = vshrl.u32 %v3043, 7
        %v3045 = vsub.s32 %v3042, %v3044
        %v3046 = vrot.slane %v3032, %v3045
        %v3047 = vcombine.high %v3039, 0
        %v3048 = vcombine.high %v3046, 0
        %v3049 = vcombine.low %v971, %v979
        %v3051 = vunpack.c.l.s4 1983009808
        %v3052 = vunpack.c.0.s8 %v3051
        %v3053 = vlaneseq
        %v3054 = vshrl.u32 %v3053, 7
        %v3055 = vsub.s32 %v3052, %v3054
        %v3056 = vrot.slane %v3049, %v3055
        %v3057 = vcombine.low %v975, %v983
        %v3059 = vunpack.c.l.s4 1983009808
        %v3060 = vunpack.c.0.s8 %v3059
        %v3061 = vlaneseq
        %v3062 = vshrl.u32 %v3061, 7
        %v3063 = vsub.s32 %v3060, %v3062
        %v3064 = vrot.slane %v3057, %v3063
        %v3065 = vcombine.low %v3056, %v3064
        %v3066 = vcombine.high %v3056, %v3064
        %v3068 = vunpack.c.l.s4 1934713408
        %v3069 = vunpack.c.0.s8 %v3068
        %v3070 = vlaneseq
        %v3071 = vshrl.u32 %v3070, 7
        %v3072 = vsub.s32 %v3069, %v3071
        %v3073 = vrot.slane %v3065, %v3072
        %v3075 = vunpack.c.l.s4 1934713408
        %v3076 = vunpack.c.0.s8 %v3075
        %v3077 = vlaneseq
        %v3078 = vshrl.u32 %v3077, 7
        %v3079 = vsub.s32 %v3076, %v3078
        %v3080 = vrot.slane %v3066, %v3079
        %v3081 = vcombine.high %v3073, 0
        %v3082 = vcombine.high %v3080, 0
        %v3083 = vcombine.low %v954, %v962
        %v3085 = vunpack.c.l.s4 1983009808
        %v3086 = vunpack.c.0.s8 %v3085
        %v3087 = vlaneseq
        %v3088 = vshrl.u32 %v3087, 7
        %v3089 = vsub.s32 %v3086, %v3088
        %v3090 = vrot.slane %v3083, %v3089
        %v3091 = vcombine.low %v958, %v966
        %v3093 = vunpack.c.l.s4 1983009808
        %v3094 = vunpack.c.0.s8 %v3093
        %v3095 = vlaneseq
        %v3096 = vshrl.u32 %v3095, 7
        %v3097 = vsub.s32 %v3094, %v3096
        %v3098 = vrot.slane %v3091, %v3097
        %v3099 = vcombine.low %v3090, %v3098
        %v3100 = vcombine.high %v3090, %v3098
        %v3102 = vunpack.c.l.s4 1934713408
        %v3103 = vunpack.c.0.s8 %v3102
        %v3104 = vlaneseq
        %v3105 = vshrl.u32 %v3104, 7
        %v3106 = vsub.s32 %v3103, %v3105
        %v3107 = vrot.slane %v3099, %v3106
        %v3109 = vunpack.c.l.s4 1934713408
        %v3110 = vunpack.c.0.s8 %v3109
        %v3111 = vlaneseq
        %v3112 = vshrl.u32 %v3111, 7
        %v3113 = vsub.s32 %v3110, %v3112
        %v3114 = vrot.slane %v3100, %v3113
        %v3115 = vcombine.high %v3107, 0
        %v3116 = vcombine.high %v3114, 0
        %v3117 = vcombine.low %v956, %v964
        %v3119 = vunpack.c.l.s4 1983009808
        %v3120 = vunpack.c.0.s8 %v3119
        %v3121 = vlaneseq
        %v3122 = vshrl.u32 %v3121, 7
        %v3123 = vsub.s32 %v3120, %v3122
        %v3124 = vrot.slane %v3117, %v3123
        %v3125 = vcombine.low %v960, %v968
        %v3127 = vunpack.c.l.s4 1983009808
        %v3128 = vunpack.c.0.s8 %v3127
        %v3129 = vlaneseq
        %v3130 = vshrl.u32 %v3129, 7
        %v3131 = vsub.s32 %v3128, %v3130
        %v3132 = vrot.slane %v3125, %v3131
        %v3133 = vcombine.low %v3124, %v3132
        %v3134 = vcombine.high %v3124, %v3132
        %v3136 = vunpack.c.l.s4 1934713408
        %v3137 = vunpack.c.0.s8 %v3136
        %v3138 = vlaneseq
        %v3139 = vshrl.u32 %v3138, 7
        %v3140 = vsub.s32 %v3137, %v3139
        %v3141 = vrot.slane %v3133, %v3140
        %v3143 = vunpack.c.l.s4 1934713408
        %v3144 = vunpack.c.0.s8 %v3143
        %v3145 = vlaneseq
        %v3146 = vshrl.u32 %v3145, 7
        %v3147 = vsub.s32 %v3144, %v3146
        %v3148 = vrot.slane %v3134, %v3147
        %v3149 = vcombine.high %v3141, 0
        %v3150 = vcombine.high %v3148, 0
        %v3151 = vcombine.low %v970, %v978
        %v3153 = vunpack.c.l.s4 1983009808
        %v3154 = vunpack.c.0.s8 %v3153
        %v3155 = vlaneseq
        %v3156 = vshrl.u32 %v3155, 7
        %v3157 = vsub.s32 %v3154, %v3156
        %v3158 = vrot.slane %v3151, %v3157
        %v3159 = vcombine.low %v974, %v982
        %v3161 = vunpack.c.l.s4 1983009808
        %v3162 = vunpack.c.0.s8 %v3161
        %v3163 = vlaneseq
        %v3164 = vshrl.u32 %v3163, 7
        %v3165 = vsub.s32 %v3162, %v3164
        %v3166 = vrot.slane %v3159, %v3165
        %v3167 = vcombine.low %v3158, %v3166
        %v3168 = vcombine.high %v3158, %v3166
        %v3170 = vunpack.c.l.s4 1934713408
        %v3171 = vunpack.c.0.s8 %v3170
        %v3172 = vlaneseq
        %v3173 = vshrl.u32 %v3172, 7
        %v3174 = vsub.s32 %v3171, %v3173
        %v3175 = vrot.slane %v3167, %v3174
        %v3177 = vunpack.c.l.s4 1934713408
        %v3178 = vunpack.c.0.s8 %v3177
        %v3179 = vlaneseq
        %v3180 = vshrl.u32 %v3179, 7
        %v3181 = vsub.s32 %v3178, %v3180
        %v3182 = vrot.slane %v3168, %v3181
        %v3183 = vcombine.high %v3175, 0
        %v3184 = vcombine.high %v3182, 0
        %v3185 = vcombine.low %v972, %v980
        %v3187 = vunpack.c.l.s4 1983009808
        %v3188 = vunpack.c.0.s8 %v3187
        %v3189 = vlaneseq
        %v3190 = vshrl.u32 %v3189, 7
        %v3191 = vsub.s32 %v3188, %v3190
        %v3192 = vrot.slane %v3185, %v3191
        %v3193 = vcombine.low %v976, %v984
        %v3195 = vunpack.c.l.s4 1983009808
        %v3196 = vunpack.c.0.s8 %v3195
        %v3197 = vlaneseq
        %v3198 = vshrl.u32 %v3197, 7
        %v3199 = vsub.s32 %v3196, %v3198
        %v3200 = vrot.slane %v3193, %v3199
        %v3201 = vcombine.low %v3192, %v3200
        %v3202 = vcombine.high %v3192, %v3200
        %v3204 = vunpack.c.l.s4 1934713408
        %v3205 = vunpack.c.0.s8 %v3204
        %v3206 = vlaneseq
        %v3207 = vshrl.u32 %v3206, 7
        %v3208 = vsub.s32 %v3205, %v3207
        %v3209 = vrot.slane %v3201, %v3208
        %v3211 = vunpack.c.l.s4 1934713408
        %v3212 = vunpack.c.0.s8 %v3211
        %v3213 = vlaneseq
        %v3214 = vshrl.u32 %v3213, 7
        %v3215 = vsub.s32 %v3212, %v3214
        %v3216 = vrot.slane %v3202, %v3215
        %v3217 = vcombine.high %v3209, 0
        %v3218 = vcombine.high %v3216, 0
        %v3221 = vpack.i.b16 %v3005, %v2971
        %v3222 = vshrl.u32 %v2971, 16
        %v3223 = vshrl.u32 %v3005, 16
        %v3224 = vpack.i.b16 %v3223, %v3222
        %v3227 = vpack.i.b16 %v3013, %v2979
        %v3228 = vshrl.u32 %v2979, 16
        %v3229 = vshrl.u32 %v3013, 16
        %v3230 = vpack.i.b16 %v3229, %v3228
        %v3233 = vpack.i.b16 %v3012, %v2978
        %v3234 = vshrl.u32 %v2978, 16
        %v3235 = vshrl.u32 %v3012, 16
        %v3236 = vpack.i.b16 %v3235, %v3234
        %v3239 = vpack.i.b16 %v3014, %v2980
        %v3240 = vshrl.u32 %v2980, 16
        %v3241 = vshrl.u32 %v3014, 16
        %v3242 = vpack.i.b16 %v3241, %v3240
        %v3245 = vpack.i.b16 %v3141, %v3107
        %v3246 = vshrl.u32 %v3107, 16
        %v3247 = vshrl.u32 %v3141, 16
        %v3248 = vpack.i.b16 %v3247, %v3246
        %v3251 = vpack.i.b16 %v3149, %v3115
        %v3252 = vshrl.u32 %v3115, 16
        %v3253 = vshrl.u32 %v3149, 16
        %v3254 = vpack.i.b16 %v3253, %v3252
        %v3257 = vpack.i.b16 %v3148, %v3114
        %v3258 = vshrl.u32 %v3114, 16
        %v3259 = vshrl.u32 %v3148, 16
        %v3260 = vpack.i.b16 %v3259, %v3258
        %v3263 = vpack.i.b16 %v3150, %v3116
        %v3264 = vshrl.u32 %v3116, 16
        %v3265 = vshrl.u32 %v3150, 16
        %v3266 = vpack.i.b16 %v3265, %v3264
        %v3269 = vpack.i.b16 %v3073, %v3039
        %v3270 = vshrl.u32 %v3039, 16
        %v3271 = vshrl.u32 %v3073, 16
        %v3272 = vpack.i.b16 %v3271, %v3270
        %v3275 = vpack.i.b16 %v3081, %v3047
        %v3276 = vshrl.u32 %v3047, 16
        %v3277 = vshrl.u32 %v3081, 16
        %v3278 = vpack.i.b16 %v3277, %v3276
        %v3281 = vpack.i.b16 %v3080, %v3046
        %v3282 = vshrl.u32 %v3046, 16
        %v3283 = vshrl.u32 %v3080, 16
        %v3284 = vpack.i.b16 %v3283, %v3282
        %v3287 = vpack.i.b16 %v3082, %v3048
        %v3288 = vshrl.u32 %v3048, 16
        %v3289 = vshrl.u32 %v3082, 16
        %v3290 = vpack.i.b16 %v3289, %v3288
        %v3293 = vpack.i.b16 %v3209, %v3175
        %v3294 = vshrl.u32 %v3175, 16
        %v3295 = vshrl.u32 %v3209, 16
        %v3296 = vpack.i.b16 %v3295, %v3294
        %v3299 = vpack.i.b16 %v3217, %v3183
        %v3300 = vshrl.u32 %v3183, 16
        %v3301 = vshrl.u32 %v3217, 16
        %v3302 = vpack.i.b16 %v3301, %v3300
        %v3305 = vpack.i.b16 %v3216, %v3182
        %v3306 = vshrl.u32 %v3182, 16
        %v3307 = vshrl.u32 %v3216, 16
        %v3308 = vpack.i.b16 %v3307, %v3306
        %v3311 = vpack.i.b16 %v3218, %v3184
        %v3312 = vshrl.u32 %v3184, 16
        %v3313 = vshrl.u32 %v3218, 16
        %v3314 = vpack.i.b16 %v3313, %v3312
        %v3315 = vunpack.c.l.b16 %v2485
        %v3316 = vunpack.c.l.b16 %v2533
        %v3317 = vpack.c.b16 %v3316, %v3315
        %v3319 = vunpack.c.l.b16 %v2853
        %v3320 = vunpack.c.l.b16 %v2901
        %v3321 = vpack.c.b16 %v3320, %v3319
        %3323 = vmatprep.subr.bf16.mxu0 0
        %3324 = vmatpush1.bf16.xpose.msra.mxu0 0
        %3325 = vmatprep.subr.bf16.mxu0 0
        %3326 = vmatpush1.bf16.xpose.msra.mxu0 0
        %3327 = vmatprep.subr.bf16.mxu0 0
        %3328 = vmatpush1.bf16.xpose.msra.mxu0 0
        %3329 = vmatprep.subr.bf16.mxu0 0
        %3330 = vmatpush1.bf16.xpose.msra.mxu0 0
        %3331 = vmatprep.subr.bf16.mxu0 0
        %3332 = vmatpush1.bf16.xpose.msra.mxu0 0
        %3333 = vmatprep.subr.bf16.mxu0 0
        %3334 = vmatpush1.bf16.xpose.msra.mxu0 0
        %3335 = vmatprep.subr.bf16.mxu0 0
        %3336 = vmatpush1.bf16.xpose.msra.mxu0 0
        %3337 = vmatprep.subr.bf16.mxu0 0
        %3338 = vmatpush1.bf16.xpose.msra.mxu0 %v3321
        %3339 = vmatprep.subr.bf16.mxu0 0
        %3340 = vmatpush2.bf16.xpose.msra.mxu0 0
        %3341 = vmatprep.subr.bf16.mxu0 0
        %3342 = vmatpush2.bf16.xpose.msra.mxu0 0
        %3343 = vmatprep.subr.bf16.mxu0 0
        %3344 = vmatpush2.bf16.xpose.msra.mxu0 0
        %3345 = vmatprep.subr.bf16.mxu0 0
        %3346 = vmatpush2.bf16.xpose.msra.mxu0 0
        %3347 = vmatprep.subr.bf16.mxu0 0
        %3348 = vmatpush2.bf16.xpose.msra.mxu0 0
        %3349 = vmatprep.subr.bf16.mxu0 0
        %3350 = vmatpush2.bf16.xpose.msra.mxu0 0
        %3351 = vmatprep.subr.bf16.mxu0 0
        %3352 = vmatpush2.bf16.xpose.msra.mxu0 0
        %3353 = vmatprep.subr.bf16.mxu0 0
        %3354 = vmatpush2.bf16.xpose.msra.mxu0 0
        %3355 = vmatprep.mubr.bf16.mxu0 0
        %3356 = vmatmul.mubr.bf16.gmra.mxu0 %v3317
        %v3357 = vpop.f32.mrf.mxu0
        %v3358 = vadd.f32 %v992, %v3357
        %v3359 = vpop.f32.mrf.mxu0
        %v3360 = vpop.f32.mrf.mxu0
        %v3361 = vadd.f32 %v993, %v3360
        %v3362 = vpop.f32.mrf.mxu0
        %3363 = vdwg.mxu0
        %v3364 = vunpack.c.l.b16 %v2488
        %v3365 = vunpack.c.l.b16 %v2536
        %v3366 = vpack.c.b16 %v3365, %v3364
        %v3368 = vunpack.c.l.b16 %v2856
        %v3369 = vunpack.c.l.b16 %v2904
        %v3370 = vpack.c.b16 %v3369, %v3368
        %3372 = vmatprep.subr.bf16.mxu0 0
        %3373 = vmatpush1.bf16.xpose.msra.mxu0 0
        %3374 = vmatprep.subr.bf16.mxu0 0
        %3375 = vmatpush1.bf16.xpose.msra.mxu0 0
        %3376 = vmatprep.subr.bf16.mxu0 0
        %3377 = vmatpush1.bf16.xpose.msra.mxu0 0
        %3378 = vmatprep.subr.bf16.mxu0 0
        %3379 = vmatpush1.bf16.xpose.msra.mxu0 0
        %3380 = vmatprep.subr.bf16.mxu0 0
        %3381 = vmatpush1.bf16.xpose.msra.mxu0 0
        %3382 = vmatprep.subr.bf16.mxu0 0
        %3383 = vmatpush1.bf16.xpose.msra.mxu0 0
        %3384 = vmatprep.subr.bf16.mxu0 0
        %3385 = vmatpush1.bf16.xpose.msra.mxu0 0
        %3386 = vmatprep.subr.bf16.mxu0 0
        %3387 = vmatpush1.bf16.xpose.msra.mxu0 %v3370
        %3388 = vmatprep.subr.bf16.mxu0 0
        %3389 = vmatpush2.bf16.xpose.msra.mxu0 0
        %3390 = vmatprep.subr.bf16.mxu0 0
        %3391 = vmatpush2.bf16.xpose.msra.mxu0 0
        %3392 = vmatprep.subr.bf16.mxu0 0
        %3393 = vmatpush2.bf16.xpose.msra.mxu0 0
        %3394 = vmatprep.subr.bf16.mxu0 0
        %3395 = vmatpush2.bf16.xpose.msra.mxu0 0
        %3396 = vmatprep.subr.bf16.mxu0 0
        %3397 = vmatpush2.bf16.xpose.msra.mxu0 0
        %3398 = vmatprep.subr.bf16.mxu0 0
        %3399 = vmatpush2.bf16.xpose.msra.mxu0 0
        %3400 = vmatprep.subr.bf16.mxu0 0
        %3401 = vmatpush2.bf16.xpose.msra.mxu0 0
        %3402 = vmatprep.subr.bf16.mxu0 0
        %3403 = vmatpush2.bf16.xpose.msra.mxu0 0
        %3404 = vmatprep.mubr.bf16.mxu0 0
        %3405 = vmatmul.mubr.bf16.gmra.mxu0 %v3366
        %v3406 = vpop.f32.mrf.mxu0
        %v3407 = vadd.f32 %v992, %v3406
        %v3408 = vpop.f32.mrf.mxu0
        %v3409 = vpop.f32.mrf.mxu0
        %v3410 = vadd.f32 %v993, %v3409
        %v3411 = vpop.f32.mrf.mxu0
        %3412 = vdwg.mxu0
        %v3413 = vunpack.c.l.b16 %v2491
        %v3414 = vunpack.c.l.b16 %v2539
        %v3415 = vpack.c.b16 %v3414, %v3413
        %v3417 = vunpack.c.l.b16 %v2859
        %v3418 = vunpack.c.l.b16 %v2907
        %v3419 = vpack.c.b16 %v3418, %v3417
        %3421 = vmatprep.subr.bf16.mxu0 0
        %3422 = vmatpush1.bf16.xpose.msra.mxu0 0
        %3423 = vmatprep.subr.bf16.mxu0 0
        %3424 = vmatpush1.bf16.xpose.msra.mxu0 0
        %3425 = vmatprep.subr.bf16.mxu0 0
        %3426 = vmatpush1.bf16.xpose.msra.mxu0 0
        %3427 = vmatprep.subr.bf16.mxu0 0
        %3428 = vmatpush1.bf16.xpose.msra.mxu0 0
        %3429 = vmatprep.subr.bf16.mxu0 0
        %3430 = vmatpush1.bf16.xpose.msra.mxu0 0
        %3431 = vmatprep.subr.bf16.mxu0 0
        %3432 = vmatpush1.bf16.xpose.msra.mxu0 0
        %3433 = vmatprep.subr.bf16.mxu0 0
        %3434 = vmatpush1.bf16.xpose.msra.mxu0 0
        %3435 = vmatprep.subr.bf16.mxu0 0
        %3436 = vmatpush1.bf16.xpose.msra.mxu0 %v3419
        %3437 = vmatprep.subr.bf16.mxu0 0
        %3438 = vmatpush2.bf16.xpose.msra.mxu0 0
        %3439 = vmatprep.subr.bf16.mxu0 0
        %3440 = vmatpush2.bf16.xpose.msra.mxu0 0
        %3441 = vmatprep.subr.bf16.mxu0 0
        %3442 = vmatpush2.bf16.xpose.msra.mxu0 0
        %3443 = vmatprep.subr.bf16.mxu0 0
        %3444 = vmatpush2.bf16.xpose.msra.mxu0 0
        %3445 = vmatprep.subr.bf16.mxu0 0
        %3446 = vmatpush2.bf16.xpose.msra.mxu0 0
        %3447 = vmatprep.subr.bf16.mxu0 0
        %3448 = vmatpush2.bf16.xpose.msra.mxu0 0
        %3449 = vmatprep.subr.bf16.mxu0 0
        %3450 = vmatpush2.bf16.xpose.msra.mxu0 0
        %3451 = vmatprep.subr.bf16.mxu0 0
        %3452 = vmatpush2.bf16.xpose.msra.mxu0 0
        %3453 = vmatprep.mubr.bf16.mxu0 0
        %3454 = vmatmul.mubr.bf16.gmra.mxu0 %v3415
        %v3455 = vpop.f32.mrf.mxu0
        %v3456 = vadd.f32 %v992, %v3455
        %v3457 = vpop.f32.mrf.mxu0
        %v3458 = vpop.f32.mrf.mxu0
        %v3459 = vadd.f32 %v993, %v3458
        %v3460 = vpop.f32.mrf.mxu0
        %3461 = vdwg.mxu0
        %v3462 = vunpack.c.l.b16 %v2494
        %v3463 = vunpack.c.l.b16 %v2542
        %v3464 = vpack.c.b16 %v3463, %v3462
        %v3466 = vunpack.c.l.b16 %v2862
        %v3467 = vunpack.c.l.b16 %v2910
        %v3468 = vpack.c.b16 %v3467, %v3466
        %3470 = vmatprep.subr.bf16.mxu0 0
        %3471 = vmatpush1.bf16.xpose.msra.mxu0 0
        %3472 = vmatprep.subr.bf16.mxu0 0
        %3473 = vmatpush1.bf16.xpose.msra.mxu0 0
        %3474 = vmatprep.subr.bf16.mxu0 0
        %3475 = vmatpush1.bf16.xpose.msra.mxu0 0
        %3476 = vmatprep.subr.bf16.mxu0 0
        %3477 = vmatpush1.bf16.xpose.msra.mxu0 0
        %3478 = vmatprep.subr.bf16.mxu0 0
        %3479 = vmatpush1.bf16.xpose.msra.mxu0 0
        %3480 = vmatprep.subr.bf16.mxu0 0
        %3481 = vmatpush1.bf16.xpose.msra.mxu0 0
        %3482 = vmatprep.subr.bf16.mxu0 0
        %3483 = vmatpush1.bf16.xpose.msra.mxu0 0
        %3484 = vmatprep.subr.bf16.mxu0 0
        %3485 = vmatpush1.bf16.xpose.msra.mxu0 %v3468
        %3486 = vmatprep.subr.bf16.mxu0 0
        %3487 = vmatpush2.bf16.xpose.msra.mxu0 0
        %3488 = vmatprep.subr.bf16.mxu0 0
        %3489 = vmatpush2.bf16.xpose.msra.mxu0 0
        %3490 = vmatprep.subr.bf16.mxu0 0
        %3491 = vmatpush2.bf16.xpose.msra.mxu0 0
        %3492 = vmatprep.subr.bf16.mxu0 0
        %3493 = vmatpush2.bf16.xpose.msra.mxu0 0
        %3494 = vmatprep.subr.bf16.mxu0 0
        %3495 = vmatpush2.bf16.xpose.msra.mxu0 0
        %3496 = vmatprep.subr.bf16.mxu0 0
        %3497 = vmatpush2.bf16.xpose.msra.mxu0 0
        %3498 = vmatprep.subr.bf16.mxu0 0
        %3499 = vmatpush2.bf16.xpose.msra.mxu0 0
        %3500 = vmatprep.subr.bf16.mxu0 0
        %3501 = vmatpush2.bf16.xpose.msra.mxu0 0
        %3502 = vmatprep.mubr.bf16.mxu0 0
        %3503 = vmatmul.mubr.bf16.gmra.mxu0 %v3464
        %v3504 = vpop.f32.mrf.mxu0
        %v3505 = vadd.f32 %v992, %v3504
        %v3506 = vpop.f32.mrf.mxu0
        %v3507 = vpop.f32.mrf.mxu0
        %v3508 = vadd.f32 %v993, %v3507
        %v3509 = vpop.f32.mrf.mxu0
        %3510 = vdwg.mxu0
        %v3511 = vunpack.c.l.b16 %v2497
        %v3512 = vunpack.c.l.b16 %v2545
        %v3513 = vpack.c.b16 %v3512, %v3511
        %v3515 = vunpack.c.l.b16 %v2865
        %v3516 = vunpack.c.l.b16 %v2913
        %v3517 = vpack.c.b16 %v3516, %v3515
        %3519 = vmatprep.subr.bf16.mxu0 0
        %3520 = vmatpush1.bf16.xpose.msra.mxu0 0
        %3521 = vmatprep.subr.bf16.mxu0 0
        %3522 = vmatpush1.bf16.xpose.msra.mxu0 0
        %3523 = vmatprep.subr.bf16.mxu0 0
        %3524 = vmatpush1.bf16.xpose.msra.mxu0 0
        %3525 = vmatprep.subr.bf16.mxu0 0
        %3526 = vmatpush1.bf16.xpose.msra.mxu0 0
        %3527 = vmatprep.subr.bf16.mxu0 0
        %3528 = vmatpush1.bf16.xpose.msra.mxu0 0
        %3529 = vmatprep.subr.bf16.mxu0 0
        %3530 = vmatpush1.bf16.xpose.msra.mxu0 0
        %3531 = vmatprep.subr.bf16.mxu0 0
        %3532 = vmatpush1.bf16.xpose.msra.mxu0 0
        %3533 = vmatprep.subr.bf16.mxu0 0
        %3534 = vmatpush1.bf16.xpose.msra.mxu0 %v3517
        %3535 = vmatprep.subr.bf16.mxu0 0
        %3536 = vmatpush2.bf16.xpose.msra.mxu0 0
        %3537 = vmatprep.subr.bf16.mxu0 0
        %3538 = vmatpush2.bf16.xpose.msra.mxu0 0
        %3539 = vmatprep.subr.bf16.mxu0 0
        %3540 = vmatpush2.bf16.xpose.msra.mxu0 0
        %3541 = vmatprep.subr.bf16.mxu0 0
        %3542 = vmatpush2.bf16.xpose.msra.mxu0 0
        %3543 = vmatprep.subr.bf16.mxu0 0
        %3544 = vmatpush2.bf16.xpose.msra.mxu0 0
        %3545 = vmatprep.subr.bf16.mxu0 0
        %3546 = vmatpush2.bf16.xpose.msra.mxu0 0
        %3547 = vmatprep.subr.bf16.mxu0 0
        %3548 = vmatpush2.bf16.xpose.msra.mxu0 0
        %3549 = vmatprep.subr.bf16.mxu0 0
        %3550 = vmatpush2.bf16.xpose.msra.mxu0 0
        %3551 = vmatprep.mubr.bf16.mxu0 0
        %3552 = vmatmul.mubr.bf16.gmra.mxu0 %v3513
        %v3553 = vpop.f32.mrf.mxu0
        %v3554 = vadd.f32 %v992, %v3553
        %v3555 = vpop.f32.mrf.mxu0
        %v3556 = vpop.f32.mrf.mxu0
        %v3557 = vadd.f32 %v993, %v3556
        %v3558 = vpop.f32.mrf.mxu0
        %3559 = vdwg.mxu0
        %v3560 = vunpack.c.l.b16 %v2500
        %v3561 = vunpack.c.l.b16 %v2548
        %v3562 = vpack.c.b16 %v3561, %v3560
        %v3564 = vunpack.c.l.b16 %v2868
        %v3565 = vunpack.c.l.b16 %v2916
        %v3566 = vpack.c.b16 %v3565, %v3564
        %3568 = vmatprep.subr.bf16.mxu0 0
        %3569 = vmatpush1.bf16.xpose.msra.mxu0 0
        %3570 = vmatprep.subr.bf16.mxu0 0
        %3571 = vmatpush1.bf16.xpose.msra.mxu0 0
        %3572 = vmatprep.subr.bf16.mxu0 0
        %3573 = vmatpush1.bf16.xpose.msra.mxu0 0
        %3574 = vmatprep.subr.bf16.mxu0 0
        %3575 = vmatpush1.bf16.xpose.msra.mxu0 0
        %3576 = vmatprep.subr.bf16.mxu0 0
        %3577 = vmatpush1.bf16.xpose.msra.mxu0 0
        %3578 = vmatprep.subr.bf16.mxu0 0
        %3579 = vmatpush1.bf16.xpose.msra.mxu0 0
        %3580 = vmatprep.subr.bf16.mxu0 0
        %3581 = vmatpush1.bf16.xpose.msra.mxu0 0
        %3582 = vmatprep.subr.bf16.mxu0 0
        %3583 = vmatpush1.bf16.xpose.msra.mxu0 %v3566
        %3584 = vmatprep.subr.bf16.mxu0 0
        %3585 = vmatpush2.bf16.xpose.msra.mxu0 0
        %3586 = vmatprep.subr.bf16.mxu0 0
        %3587 = vmatpush2.bf16.xpose.msra.mxu0 0
        %3588 = vmatprep.subr.bf16.mxu0 0
        %3589 = vmatpush2.bf16.xpose.msra.mxu0 0
        %3590 = vmatprep.subr.bf16.mxu0 0
        %3591 = vmatpush2.bf16.xpose.msra.mxu0 0
        %3592 = vmatprep.subr.bf16.mxu0 0
        %3593 = vmatpush2.bf16.xpose.msra.mxu0 0
        %3594 = vmatprep.subr.bf16.mxu0 0
        %3595 = vmatpush2.bf16.xpose.msra.mxu0 0
        %3596 = vmatprep.subr.bf16.mxu0 0
        %3597 = vmatpush2.bf16.xpose.msra.mxu0 0
        %3598 = vmatprep.subr.bf16.mxu0 0
        %3599 = vmatpush2.bf16.xpose.msra.mxu0 0
        %3600 = vmatprep.mubr.bf16.mxu0 0
        %3601 = vmatmul.mubr.bf16.gmra.mxu0 %v3562
        %v3602 = vpop.f32.mrf.mxu0
        %v3603 = vadd.f32 %v992, %v3602
        %v3604 = vpop.f32.mrf.mxu0
        %v3605 = vpop.f32.mrf.mxu0
        %v3606 = vadd.f32 %v993, %v3605
        %v3607 = vpop.f32.mrf.mxu0
        %3608 = vdwg.mxu0
        %v3609 = vunpack.c.l.b16 %v2503
        %v3610 = vunpack.c.l.b16 %v2551
        %v3611 = vpack.c.b16 %v3610, %v3609
        %v3613 = vunpack.c.l.b16 %v2871
        %v3614 = vunpack.c.l.b16 %v2919
        %v3615 = vpack.c.b16 %v3614, %v3613
        %3617 = vmatprep.subr.bf16.mxu0 0
        %3618 = vmatpush1.bf16.xpose.msra.mxu0 0
        %3619 = vmatprep.subr.bf16.mxu0 0
        %3620 = vmatpush1.bf16.xpose.msra.mxu0 0
        %3621 = vmatprep.subr.bf16.mxu0 0
        %3622 = vmatpush1.bf16.xpose.msra.mxu0 0
        %3623 = vmatprep.subr.bf16.mxu0 0
        %3624 = vmatpush1.bf16.xpose.msra.mxu0 0
        %3625 = vmatprep.subr.bf16.mxu0 0
        %3626 = vmatpush1.bf16.xpose.msra.mxu0 0
        %3627 = vmatprep.subr.bf16.mxu0 0
        %3628 = vmatpush1.bf16.xpose.msra.mxu0 0
        %3629 = vmatprep.subr.bf16.mxu0 0
        %3630 = vmatpush1.bf16.xpose.msra.mxu0 0
        %3631 = vmatprep.subr.bf16.mxu0 0
        %3632 = vmatpush1.bf16.xpose.msra.mxu0 %v3615
        %3633 = vmatprep.subr.bf16.mxu0 0
        %3634 = vmatpush2.bf16.xpose.msra.mxu0 0
        %3635 = vmatprep.subr.bf16.mxu0 0
        %3636 = vmatpush2.bf16.xpose.msra.mxu0 0
        %3637 = vmatprep.subr.bf16.mxu0 0
        %3638 = vmatpush2.bf16.xpose.msra.mxu0 0
        %3639 = vmatprep.subr.bf16.mxu0 0
        %3640 = vmatpush2.bf16.xpose.msra.mxu0 0
        %3641 = vmatprep.subr.bf16.mxu0 0
        %3642 = vmatpush2.bf16.xpose.msra.mxu0 0
        %3643 = vmatprep.subr.bf16.mxu0 0
        %3644 = vmatpush2.bf16.xpose.msra.mxu0 0
        %3645 = vmatprep.subr.bf16.mxu0 0
        %3646 = vmatpush2.bf16.xpose.msra.mxu0 0
        %3647 = vmatprep.subr.bf16.mxu0 0
        %3648 = vmatpush2.bf16.xpose.msra.mxu0 0
        %3649 = vmatprep.mubr.bf16.mxu0 0
        %3650 = vmatmul.mubr.bf16.gmra.mxu0 %v3611
        %v3651 = vpop.f32.mrf.mxu0
        %v3652 = vadd.f32 %v992, %v3651
        %v3653 = vpop.f32.mrf.mxu0
        %v3654 = vpop.f32.mrf.mxu0
        %v3655 = vadd.f32 %v993, %v3654
        %v3656 = vpop.f32.mrf.mxu0
        %3657 = vdwg.mxu0
        %v3658 = vunpack.c.l.b16 %v2506
        %v3659 = vunpack.c.l.b16 %v2554
        %v3660 = vpack.c.b16 %v3659, %v3658
        %v3662 = vunpack.c.l.b16 %v2874
        %v3663 = vunpack.c.l.b16 %v2922
        %v3664 = vpack.c.b16 %v3663, %v3662
        %3666 = vmatprep.subr.bf16.mxu0 0
        %3667 = vmatpush1.bf16.xpose.msra.mxu0 0
        %3668 = vmatprep.subr.bf16.mxu0 0
        %3669 = vmatpush1.bf16.xpose.msra.mxu0 0
        %3670 = vmatprep.subr.bf16.mxu0 0
        %3671 = vmatpush1.bf16.xpose.msra.mxu0 0
        %3672 = vmatprep.subr.bf16.mxu0 0
        %3673 = vmatpush1.bf16.xpose.msra.mxu0 0
        %3674 = vmatprep.subr.bf16.mxu0 0
        %3675 = vmatpush1.bf16.xpose.msra.mxu0 0
        %3676 = vmatprep.subr.bf16.mxu0 0
        %3677 = vmatpush1.bf16.xpose.msra.mxu0 0
        %3678 = vmatprep.subr.bf16.mxu0 0
        %3679 = vmatpush1.bf16.xpose.msra.mxu0 0
        %3680 = vmatprep.subr.bf16.mxu0 0
        %3681 = vmatpush1.bf16.xpose.msra.mxu0 %v3664
        %3682 = vmatprep.subr.bf16.mxu0 0
        %3683 = vmatpush2.bf16.xpose.msra.mxu0 0
        %3684 = vmatprep.subr.bf16.mxu0 0
        %3685 = vmatpush2.bf16.xpose.msra.mxu0 0
        %3686 = vmatprep.subr.bf16.mxu0 0
        %3687 = vmatpush2.bf16.xpose.msra.mxu0 0
        %3688 = vmatprep.subr.bf16.mxu0 0
        %3689 = vmatpush2.bf16.xpose.msra.mxu0 0
        %3690 = vmatprep.subr.bf16.mxu0 0
        %3691 = vmatpush2.bf16.xpose.msra.mxu0 0
        %3692 = vmatprep.subr.bf16.mxu0 0
        %3693 = vmatpush2.bf16.xpose.msra.mxu0 0
        %3694 = vmatprep.subr.bf16.mxu0 0
        %3695 = vmatpush2.bf16.xpose.msra.mxu0 0
        %3696 = vmatprep.subr.bf16.mxu0 0
        %3697 = vmatpush2.bf16.xpose.msra.mxu0 0
        %3698 = vmatprep.mubr.bf16.mxu0 0
        %3699 = vmatmul.mubr.bf16.gmra.mxu0 %v3660
        %v3700 = vpop.f32.mrf.mxu0
        %v3701 = vadd.f32 %v992, %v3700
        %v3702 = vpop.f32.mrf.mxu0
        %v3703 = vpop.f32.mrf.mxu0
        %v3704 = vadd.f32 %v993, %v3703
        %v3705 = vpop.f32.mrf.mxu0
        %3706 = vdwg.mxu0
        %v3707 = vunpack.c.l.b16 %v2509
        %v3708 = vunpack.c.l.b16 %v2557
        %v3709 = vpack.c.b16 %v3708, %v3707
        %v3711 = vunpack.c.l.b16 %v2877
        %v3712 = vunpack.c.l.b16 %v2925
        %v3713 = vpack.c.b16 %v3712, %v3711
        %3715 = vmatprep.subr.bf16.mxu0 0
        %3716 = vmatpush1.bf16.xpose.msra.mxu0 0
        %3717 = vmatprep.subr.bf16.mxu0 0
        %3718 = vmatpush1.bf16.xpose.msra.mxu0 0
        %3719 = vmatprep.subr.bf16.mxu0 0
        %3720 = vmatpush1.bf16.xpose.msra.mxu0 0
        %3721 = vmatprep.subr.bf16.mxu0 0
        %3722 = vmatpush1.bf16.xpose.msra.mxu0 0
        %3723 = vmatprep.subr.bf16.mxu0 0
        %3724 = vmatpush1.bf16.xpose.msra.mxu0 0
        %3725 = vmatprep.subr.bf16.mxu0 0
        %3726 = vmatpush1.bf16.xpose.msra.mxu0 0
        %3727 = vmatprep.subr.bf16.mxu0 0
        %3728 = vmatpush1.bf16.xpose.msra.mxu0 0
        %3729 = vmatprep.subr.bf16.mxu0 0
        %3730 = vmatpush1.bf16.xpose.msra.mxu0 %v3713
        %3731 = vmatprep.subr.bf16.mxu0 0
        %3732 = vmatpush2.bf16.xpose.msra.mxu0 0
        %3733 = vmatprep.subr.bf16.mxu0 0
        %3734 = vmatpush2.bf16.xpose.msra.mxu0 0
        %3735 = vmatprep.subr.bf16.mxu0 0
        %3736 = vmatpush2.bf16.xpose.msra.mxu0 0
        %3737 = vmatprep.subr.bf16.mxu0 0
        %3738 = vmatpush2.bf16.xpose.msra.mxu0 0
        %3739 = vmatprep.subr.bf16.mxu0 0
        %3740 = vmatpush2.bf16.xpose.msra.mxu0 0
        %3741 = vmatprep.subr.bf16.mxu0 0
        %3742 = vmatpush2.bf16.xpose.msra.mxu0 0
        %3743 = vmatprep.subr.bf16.mxu0 0
        %3744 = vmatpush2.bf16.xpose.msra.mxu0 0
        %3745 = vmatprep.subr.bf16.mxu0 0
        %3746 = vmatpush2.bf16.xpose.msra.mxu0 0
        %3747 = vmatprep.mubr.bf16.mxu0 0
        %3748 = vmatmul.mubr.bf16.gmra.mxu0 %v3709
        %v3749 = vpop.f32.mrf.mxu0
        %v3750 = vadd.f32 %v992, %v3749
        %v3751 = vpop.f32.mrf.mxu0
        %v3752 = vpop.f32.mrf.mxu0
        %v3753 = vadd.f32 %v993, %v3752
        %v3754 = vpop.f32.mrf.mxu0
        %3755 = vdwg.mxu0
        %v3756 = vunpack.c.l.b16 %v2512
        %v3757 = vunpack.c.l.b16 %v2560
        %v3758 = vpack.c.b16 %v3757, %v3756
        %v3760 = vunpack.c.l.b16 %v2880
        %v3761 = vunpack.c.l.b16 %v2928
        %v3762 = vpack.c.b16 %v3761, %v3760
        %3764 = vmatprep.subr.bf16.mxu0 0
        %3765 = vmatpush1.bf16.xpose.msra.mxu0 0
        %3766 = vmatprep.subr.bf16.mxu0 0
        %3767 = vmatpush1.bf16.xpose.msra.mxu0 0
        %3768 = vmatprep.subr.bf16.mxu0 0
        %3769 = vmatpush1.bf16.xpose.msra.mxu0 0
        %3770 = vmatprep.subr.bf16.mxu0 0
        %3771 = vmatpush1.bf16.xpose.msra.mxu0 0
        %3772 = vmatprep.subr.bf16.mxu0 0
        %3773 = vmatpush1.bf16.xpose.msra.mxu0 0
        %3774 = vmatprep.subr.bf16.mxu0 0
        %3775 = vmatpush1.bf16.xpose.msra.mxu0 0
        %3776 = vmatprep.subr.bf16.mxu0 0
        %3777 = vmatpush1.bf16.xpose.msra.mxu0 0
        %3778 = vmatprep.subr.bf16.mxu0 0
        %3779 = vmatpush1.bf16.xpose.msra.mxu0 %v3762
        %3780 = vmatprep.subr.bf16.mxu0 0
        %3781 = vmatpush2.bf16.xpose.msra.mxu0 0
        %3782 = vmatprep.subr.bf16.mxu0 0
        %3783 = vmatpush2.bf16.xpose.msra.mxu0 0
        %3784 = vmatprep.subr.bf16.mxu0 0
        %3785 = vmatpush2.bf16.xpose.msra.mxu0 0
        %3786 = vmatprep.subr.bf16.mxu0 0
        %3787 = vmatpush2.bf16.xpose.msra.mxu0 0
        %3788 = vmatprep.subr.bf16.mxu0 0
        %3789 = vmatpush2.bf16.xpose.msra.mxu0 0
        %3790 = vmatprep.subr.bf16.mxu0 0
        %3791 = vmatpush2.bf16.xpose.msra.mxu0 0
        %3792 = vmatprep.subr.bf16.mxu0 0
        %3793 = vmatpush2.bf16.xpose.msra.mxu0 0
        %3794 = vmatprep.subr.bf16.mxu0 0
        %3795 = vmatpush2.bf16.xpose.msra.mxu0 0
        %3796 = vmatprep.mubr.bf16.mxu0 0
        %3797 = vmatmul.mubr.bf16.gmra.mxu0 %v3758
        %v3798 = vpop.f32.mrf.mxu0
        %v3799 = vadd.f32 %v992, %v3798
        %v3800 = vpop.f32.mrf.mxu0
        %v3801 = vpop.f32.mrf.mxu0
        %v3802 = vadd.f32 %v993, %v3801
        %v3803 = vpop.f32.mrf.mxu0
        %3804 = vdwg.mxu0
        %v3805 = vunpack.c.l.b16 %v2515
        %v3806 = vunpack.c.l.b16 %v2563
        %v3807 = vpack.c.b16 %v3806, %v3805
        %v3809 = vunpack.c.l.b16 %v2883
        %v3810 = vunpack.c.l.b16 %v2931
        %v3811 = vpack.c.b16 %v3810, %v3809
        %3813 = vmatprep.subr.bf16.mxu0 0
        %3814 = vmatpush1.bf16.xpose.msra.mxu0 0
        %3815 = vmatprep.subr.bf16.mxu0 0
        %3816 = vmatpush1.bf16.xpose.msra.mxu0 0
        %3817 = vmatprep.subr.bf16.mxu0 0
        %3818 = vmatpush1.bf16.xpose.msra.mxu0 0
        %3819 = vmatprep.subr.bf16.mxu0 0
        %3820 = vmatpush1.bf16.xpose.msra.mxu0 0
        %3821 = vmatprep.subr.bf16.mxu0 0
        %3822 = vmatpush1.bf16.xpose.msra.mxu0 0
        %3823 = vmatprep.subr.bf16.mxu0 0
        %3824 = vmatpush1.bf16.xpose.msra.mxu0 0
        %3825 = vmatprep.subr.bf16.mxu0 0
        %3826 = vmatpush1.bf16.xpose.msra.mxu0 0
        %3827 = vmatprep.subr.bf16.mxu0 0
        %3828 = vmatpush1.bf16.xpose.msra.mxu0 %v3811
        %3829 = vmatprep.subr.bf16.mxu0 0
        %3830 = vmatpush2.bf16.xpose.msra.mxu0 0
        %3831 = vmatprep.subr.bf16.mxu0 0
        %3832 = vmatpush2.bf16.xpose.msra.mxu0 0
        %3833 = vmatprep.subr.bf16.mxu0 0
        %3834 = vmatpush2.bf16.xpose.msra.mxu0 0
        %3835 = vmatprep.subr.bf16.mxu0 0
        %3836 = vmatpush2.bf16.xpose.msra.mxu0 0
        %3837 = vmatprep.subr.bf16.mxu0 0
        %3838 = vmatpush2.bf16.xpose.msra.mxu0 0
        %3839 = vmatprep.subr.bf16.mxu0 0
        %3840 = vmatpush2.bf16.xpose.msra.mxu0 0
        %3841 = vmatprep.subr.bf16.mxu0 0
        %3842 = vmatpush2.bf16.xpose.msra.mxu0 0
        %3843 = vmatprep.subr.bf16.mxu0 0
        %3844 = vmatpush2.bf16.xpose.msra.mxu0 0
        %3845 = vmatprep.mubr.bf16.mxu0 0
        %3846 = vmatmul.mubr.bf16.gmra.mxu0 %v3807
        %v3847 = vpop.f32.mrf.mxu0
        %v3848 = vadd.f32 %v992, %v3847
        %v3849 = vpop.f32.mrf.mxu0
        %v3850 = vpop.f32.mrf.mxu0
        %v3851 = vadd.f32 %v993, %v3850
        %v3852 = vpop.f32.mrf.mxu0
        %3853 = vdwg.mxu0
        %v3854 = vunpack.c.l.b16 %v2518
        %v3855 = vunpack.c.l.b16 %v2566
        %v3856 = vpack.c.b16 %v3855, %v3854
        %v3858 = vunpack.c.l.b16 %v2886
        %v3859 = vunpack.c.l.b16 %v2934
        %v3860 = vpack.c.b16 %v3859, %v3858
        %3862 = vmatprep.subr.bf16.mxu0 0
        %3863 = vmatpush1.bf16.xpose.msra.mxu0 0
        %3864 = vmatprep.subr.bf16.mxu0 0
        %3865 = vmatpush1.bf16.xpose.msra.mxu0 0
        %3866 = vmatprep.subr.bf16.mxu0 0
        %3867 = vmatpush1.bf16.xpose.msra.mxu0 0
        %3868 = vmatprep.subr.bf16.mxu0 0
        %3869 = vmatpush1.bf16.xpose.msra.mxu0 0
        %3870 = vmatprep.subr.bf16.mxu0 0
        %3871 = vmatpush1.bf16.xpose.msra.mxu0 0
        %3872 = vmatprep.subr.bf16.mxu0 0
        %3873 = vmatpush1.bf16.xpose.msra.mxu0 0
        %3874 = vmatprep.subr.bf16.mxu0 0
        %3875 = vmatpush1.bf16.xpose.msra.mxu0 0
        %3876 = vmatprep.subr.bf16.mxu0 0
        %3877 = vmatpush1.bf16.xpose.msra.mxu0 %v3860
        %3878 = vmatprep.subr.bf16.mxu0 0
        %3879 = vmatpush2.bf16.xpose.msra.mxu0 0
        %3880 = vmatprep.subr.bf16.mxu0 0
        %3881 = vmatpush2.bf16.xpose.msra.mxu0 0
        %3882 = vmatprep.subr.bf16.mxu0 0
        %3883 = vmatpush2.bf16.xpose.msra.mxu0 0
        %3884 = vmatprep.subr.bf16.mxu0 0
        %3885 = vmatpush2.bf16.xpose.msra.mxu0 0
        %3886 = vmatprep.subr.bf16.mxu0 0
        %3887 = vmatpush2.bf16.xpose.msra.mxu0 0
        %3888 = vmatprep.subr.bf16.mxu0 0
        %3889 = vmatpush2.bf16.xpose.msra.mxu0 0
        %3890 = vmatprep.subr.bf16.mxu0 0
        %3891 = vmatpush2.bf16.xpose.msra.mxu0 0
        %3892 = vmatprep.subr.bf16.mxu0 0
        %3893 = vmatpush2.bf16.xpose.msra.mxu0 0
        %3894 = vmatprep.mubr.bf16.mxu0 0
        %3895 = vmatmul.mubr.bf16.gmra.mxu0 %v3856
        %v3896 = vpop.f32.mrf.mxu0
        %v3897 = vadd.f32 %v992, %v3896
        %v3898 = vpop.f32.mrf.mxu0
        %v3899 = vpop.f32.mrf.mxu0
        %v3900 = vadd.f32 %v993, %v3899
        %v3901 = vpop.f32.mrf.mxu0
        %3902 = vdwg.mxu0
        %v3903 = vunpack.c.l.b16 %v2521
        %v3904 = vunpack.c.l.b16 %v2569
        %v3905 = vpack.c.b16 %v3904, %v3903
        %v3907 = vunpack.c.l.b16 %v2889
        %v3908 = vunpack.c.l.b16 %v2937
        %v3909 = vpack.c.b16 %v3908, %v3907
        %3911 = vmatprep.subr.bf16.mxu0 0
        %3912 = vmatpush1.bf16.xpose.msra.mxu0 0
        %3913 = vmatprep.subr.bf16.mxu0 0
        %3914 = vmatpush1.bf16.xpose.msra.mxu0 0
        %3915 = vmatprep.subr.bf16.mxu0 0
        %3916 = vmatpush1.bf16.xpose.msra.mxu0 0
        %3917 = vmatprep.subr.bf16.mxu0 0
        %3918 = vmatpush1.bf16.xpose.msra.mxu0 0
        %3919 = vmatprep.subr.bf16.mxu0 0
        %3920 = vmatpush1.bf16.xpose.msra.mxu0 0
        %3921 = vmatprep.subr.bf16.mxu0 0
        %3922 = vmatpush1.bf16.xpose.msra.mxu0 0
        %3923 = vmatprep.subr.bf16.mxu0 0
        %3924 = vmatpush1.bf16.xpose.msra.mxu0 0
        %3925 = vmatprep.subr.bf16.mxu0 0
        %3926 = vmatpush1.bf16.xpose.msra.mxu0 %v3909
        %3927 = vmatprep.subr.bf16.mxu0 0
        %3928 = vmatpush2.bf16.xpose.msra.mxu0 0
        %3929 = vmatprep.subr.bf16.mxu0 0
        %3930 = vmatpush2.bf16.xpose.msra.mxu0 0
        %3931 = vmatprep.subr.bf16.mxu0 0
        %3932 = vmatpush2.bf16.xpose.msra.mxu0 0
        %3933 = vmatprep.subr.bf16.mxu0 0
        %3934 = vmatpush2.bf16.xpose.msra.mxu0 0
        %3935 = vmatprep.subr.bf16.mxu0 0
        %3936 = vmatpush2.bf16.xpose.msra.mxu0 0
        %3937 = vmatprep.subr.bf16.mxu0 0
        %3938 = vmatpush2.bf16.xpose.msra.mxu0 0
        %3939 = vmatprep.subr.bf16.mxu0 0
        %3940 = vmatpush2.bf16.xpose.msra.mxu0 0
        %3941 = vmatprep.subr.bf16.mxu0 0
        %3942 = vmatpush2.bf16.xpose.msra.mxu0 0
        %3943 = vmatprep.mubr.bf16.mxu0 0
        %3944 = vmatmul.mubr.bf16.gmra.mxu0 %v3905
        %v3945 = vpop.f32.mrf.mxu0
        %v3946 = vadd.f32 %v992, %v3945
        %v3947 = vpop.f32.mrf.mxu0
        %v3948 = vpop.f32.mrf.mxu0
        %v3949 = vadd.f32 %v993, %v3948
        %v3950 = vpop.f32.mrf.mxu0
        %3951 = vdwg.mxu0
        %v3952 = vunpack.c.l.b16 %v2524
        %v3953 = vunpack.c.l.b16 %v2572
        %v3954 = vpack.c.b16 %v3953, %v3952
        %v3956 = vunpack.c.l.b16 %v2892
        %v3957 = vunpack.c.l.b16 %v2940
        %v3958 = vpack.c.b16 %v3957, %v3956
        %3960 = vmatprep.subr.bf16.mxu0 0
        %3961 = vmatpush1.bf16.xpose.msra.mxu0 0
        %3962 = vmatprep.subr.bf16.mxu0 0
        %3963 = vmatpush1.bf16.xpose.msra.mxu0 0
        %3964 = vmatprep.subr.bf16.mxu0 0
        %3965 = vmatpush1.bf16.xpose.msra.mxu0 0
        %3966 = vmatprep.subr.bf16.mxu0 0
        %3967 = vmatpush1.bf16.xpose.msra.mxu0 0
        %3968 = vmatprep.subr.bf16.mxu0 0
        %3969 = vmatpush1.bf16.xpose.msra.mxu0 0
        %3970 = vmatprep.subr.bf16.mxu0 0
        %3971 = vmatpush1.bf16.xpose.msra.mxu0 0
        %3972 = vmatprep.subr.bf16.mxu0 0
        %3973 = vmatpush1.bf16.xpose.msra.mxu0 0
        %3974 = vmatprep.subr.bf16.mxu0 0
        %3975 = vmatpush1.bf16.xpose.msra.mxu0 %v3958
        %3976 = vmatprep.subr.bf16.mxu0 0
        %3977 = vmatpush2.bf16.xpose.msra.mxu0 0
        %3978 = vmatprep.subr.bf16.mxu0 0
        %3979 = vmatpush2.bf16.xpose.msra.mxu0 0
        %3980 = vmatprep.subr.bf16.mxu0 0
        %3981 = vmatpush2.bf16.xpose.msra.mxu0 0
        %3982 = vmatprep.subr.bf16.mxu0 0
        %3983 = vmatpush2.bf16.xpose.msra.mxu0 0
        %3984 = vmatprep.subr.bf16.mxu0 0
        %3985 = vmatpush2.bf16.xpose.msra.mxu0 0
        %3986 = vmatprep.subr.bf16.mxu0 0
        %3987 = vmatpush2.bf16.xpose.msra.mxu0 0
        %3988 = vmatprep.subr.bf16.mxu0 0
        %3989 = vmatpush2.bf16.xpose.msra.mxu0 0
        %3990 = vmatprep.subr.bf16.mxu0 0
        %3991 = vmatpush2.bf16.xpose.msra.mxu0 0
        %3992 = vmatprep.mubr.bf16.mxu0 0
        %3993 = vmatmul.mubr.bf16.gmra.mxu0 %v3954
        %v3994 = vpop.f32.mrf.mxu0
        %v3995 = vadd.f32 %v992, %v3994
        %v3996 = vpop.f32.mrf.mxu0
        %v3997 = vpop.f32.mrf.mxu0
        %v3998 = vadd.f32 %v993, %v3997
        %v3999 = vpop.f32.mrf.mxu0
        %4000 = vdwg.mxu0
        %v4001 = vunpack.c.l.b16 %v2527
        %v4002 = vunpack.c.l.b16 %v2575
        %v4003 = vpack.c.b16 %v4002, %v4001
        %v4005 = vunpack.c.l.b16 %v2895
        %v4006 = vunpack.c.l.b16 %v2943
        %v4007 = vpack.c.b16 %v4006, %v4005
        %4009 = vmatprep.subr.bf16.mxu0 0
        %4010 = vmatpush1.bf16.xpose.msra.mxu0 0
        %4011 = vmatprep.subr.bf16.mxu0 0
        %4012 = vmatpush1.bf16.xpose.msra.mxu0 0
        %4013 = vmatprep.subr.bf16.mxu0 0
        %4014 = vmatpush1.bf16.xpose.msra.mxu0 0
        %4015 = vmatprep.subr.bf16.mxu0 0
        %4016 = vmatpush1.bf16.xpose.msra.mxu0 0
        %4017 = vmatprep.subr.bf16.mxu0 0
        %4018 = vmatpush1.bf16.xpose.msra.mxu0 0
        %4019 = vmatprep.subr.bf16.mxu0 0
        %4020 = vmatpush1.bf16.xpose.msra.mxu0 0
        %4021 = vmatprep.subr.bf16.mxu0 0
        %4022 = vmatpush1.bf16.xpose.msra.mxu0 0
        %4023 = vmatprep.subr.bf16.mxu0 0
        %4024 = vmatpush1.bf16.xpose.msra.mxu0 %v4007
        %4025 = vmatprep.subr.bf16.mxu0 0
        %4026 = vmatpush2.bf16.xpose.msra.mxu0 0
        %4027 = vmatprep.subr.bf16.mxu0 0
        %4028 = vmatpush2.bf16.xpose.msra.mxu0 0
        %4029 = vmatprep.subr.bf16.mxu0 0
        %4030 = vmatpush2.bf16.xpose.msra.mxu0 0
        %4031 = vmatprep.subr.bf16.mxu0 0
        %4032 = vmatpush2.bf16.xpose.msra.mxu0 0
        %4033 = vmatprep.subr.bf16.mxu0 0
        %4034 = vmatpush2.bf16.xpose.msra.mxu0 0
        %4035 = vmatprep.subr.bf16.mxu0 0
        %4036 = vmatpush2.bf16.xpose.msra.mxu0 0
        %4037 = vmatprep.subr.bf16.mxu0 0
        %4038 = vmatpush2.bf16.xpose.msra.mxu0 0
        %4039 = vmatprep.subr.bf16.mxu0 0
        %4040 = vmatpush2.bf16.xpose.msra.mxu0 0
        %4041 = vmatprep.mubr.bf16.mxu0 0
        %4042 = vmatmul.mubr.bf16.gmra.mxu0 %v4003
        %v4043 = vpop.f32.mrf.mxu0
        %v4044 = vadd.f32 %v992, %v4043
        %v4045 = vpop.f32.mrf.mxu0
        %v4046 = vpop.f32.mrf.mxu0
        %v4047 = vadd.f32 %v993, %v4046
        %v4048 = vpop.f32.mrf.mxu0
        %4049 = vdwg.mxu0
        %v4050 = vunpack.c.l.b16 %v2530
        %v4051 = vunpack.c.l.b16 %v2578
        %v4052 = vpack.c.b16 %v4051, %v4050
        %v4054 = vunpack.c.l.b16 %v2898
        %v4055 = vunpack.c.l.b16 %v2946
        %v4056 = vpack.c.b16 %v4055, %v4054
        %4058 = vmatprep.subr.bf16.mxu0 0
        %4059 = vmatpush1.bf16.xpose.msra.mxu0 0
        %4060 = vmatprep.subr.bf16.mxu0 0
        %4061 = vmatpush1.bf16.xpose.msra.mxu0 0
        %4062 = vmatprep.subr.bf16.mxu0 0
        %4063 = vmatpush1.bf16.xpose.msra.mxu0 0
        %4064 = vmatprep.subr.bf16.mxu0 0
        %4065 = vmatpush1.bf16.xpose.msra.mxu0 0
        %4066 = vmatprep.subr.bf16.mxu0 0
        %4067 = vmatpush1.bf16.xpose.msra.mxu0 0
        %4068 = vmatprep.subr.bf16.mxu0 0
        %4069 = vmatpush1.bf16.xpose.msra.mxu0 0
        %4070 = vmatprep.subr.bf16.mxu0 0
        %4071 = vmatpush1.bf16.xpose.msra.mxu0 0
        %4072 = vmatprep.subr.bf16.mxu0 0
        %4073 = vmatpush1.bf16.xpose.msra.mxu0 %v4056
        %4074 = vmatprep.subr.bf16.mxu0 0
        %4075 = vmatpush2.bf16.xpose.msra.mxu0 0
        %4076 = vmatprep.subr.bf16.mxu0 0
        %4077 = vmatpush2.bf16.xpose.msra.mxu0 0
        %4078 = vmatprep.subr.bf16.mxu0 0
        %4079 = vmatpush2.bf16.xpose.msra.mxu0 0
        %4080 = vmatprep.subr.bf16.mxu0 0
        %4081 = vmatpush2.bf16.xpose.msra.mxu0 0
        %4082 = vmatprep.subr.bf16.mxu0 0
        %4083 = vmatpush2.bf16.xpose.msra.mxu0 0
        %4084 = vmatprep.subr.bf16.mxu0 0
        %4085 = vmatpush2.bf16.xpose.msra.mxu0 0
        %4086 = vmatprep.subr.bf16.mxu0 0
        %4087 = vmatpush2.bf16.xpose.msra.mxu0 0
        %4088 = vmatprep.subr.bf16.mxu0 0
        %4089 = vmatpush2.bf16.xpose.msra.mxu0 0
        %4090 = vmatprep.mubr.bf16.mxu0 0
        %4091 = vmatmul.mubr.bf16.gmra.mxu0 %v4052
        %v4092 = vpop.f32.mrf.mxu0
        %v4093 = vadd.f32 %v992, %v4092
        %v4094 = vpop.f32.mrf.mxu0
        %v4095 = vpop.f32.mrf.mxu0
        %v4096 = vadd.f32 %v993, %v4095
        %v4097 = vpop.f32.mrf.mxu0
        %4098 = vdwg.mxu0
        %v4099 = vsel %vm1842, %v3358, -inf
        %4100 = vmax.xlane.f32.xlu0 %v4099
        %v4101 = vpop.xlane.xlu0 %4100
        %v4102 = vsel %vm1842, %v3361, -inf
        %4103 = vmax.xlane.f32.xlu0 %v4102
        %v4104 = vpop.xlane.xlu0 %4103
        %v4105 = vsel %vm1842, %v3407, -inf
        %4106 = vmax.xlane.f32.xlu0 %v4105
        %v4107 = vpop.xlane.xlu0 %4106
        %v4108 = vsel %vm1842, %v3410, -inf
        %4109 = vmax.xlane.f32.xlu0 %v4108
        %v4110 = vpop.xlane.xlu0 %4109
        %v4111 = vsel %vm1842, %v3456, -inf
        %4112 = vmax.xlane.f32.xlu0 %v4111
        %v4113 = vpop.xlane.xlu0 %4112
        %v4114 = vsel %vm1842, %v3459, -inf
        %4115 = vmax.xlane.f32.xlu0 %v4114
        %v4116 = vpop.xlane.xlu0 %4115
        %v4117 = vsel %vm1842, %v3505, -inf
        %4118 = vmax.xlane.f32.xlu0 %v4117
        %v4119 = vpop.xlane.xlu0 %4118
        %v4120 = vsel %vm1842, %v3508, -inf
        %4121 = vmax.xlane.f32.xlu0 %v4120
        %v4122 = vpop.xlane.xlu0 %4121
        %v4123 = vsel %vm1842, %v3554, -inf
        %4124 = vmax.xlane.f32.xlu0 %v4123
        %v4125 = vpop.xlane.xlu0 %4124
        %v4126 = vsel %vm1842, %v3557, -inf
        %4127 = vmax.xlane.f32.xlu0 %v4126
        %v4128 = vpop.xlane.xlu0 %4127
        %v4129 = vsel %vm1842, %v3603, -inf
        %4130 = vmax.xlane.f32.xlu0 %v4129
        %v4131 = vpop.xlane.xlu0 %4130
        %v4132 = vsel %vm1842, %v3606, -inf
        %4133 = vmax.xlane.f32.xlu0 %v4132
        %v4134 = vpop.xlane.xlu0 %4133
        %v4135 = vsel %vm1842, %v3652, -inf
        %4136 = vmax.xlane.f32.xlu0 %v4135
        %v4137 = vpop.xlane.xlu0 %4136
        %v4138 = vsel %vm1842, %v3655, -inf
        %4139 = vmax.xlane.f32.xlu0 %v4138
        %v4140 = vpop.xlane.xlu0 %4139
        %v4141 = vsel %vm1842, %v3701, -inf
        %4142 = vmax.xlane.f32.xlu0 %v4141
        %v4143 = vpop.xlane.xlu0 %4142
        %v4144 = vsel %vm1842, %v3704, -inf
        %4145 = vmax.xlane.f32.xlu0 %v4144
        %v4146 = vpop.xlane.xlu0 %4145
        %v4147 = vsel %vm1842, %v3750, -inf
        %4148 = vmax.xlane.f32.xlu0 %v4147
        %v4149 = vpop.xlane.xlu0 %4148
        %v4150 = vsel %vm1842, %v3753, -inf
        %4151 = vmax.xlane.f32.xlu0 %v4150
        %v4152 = vpop.xlane.xlu0 %4151
        %v4153 = vsel %vm1842, %v3799, -inf
        %4154 = vmax.xlane.f32.xlu0 %v4153
        %v4155 = vpop.xlane.xlu0 %4154
        %v4156 = vsel %vm1842, %v3802, -inf
        %4157 = vmax.xlane.f32.xlu0 %v4156
        %v4158 = vpop.xlane.xlu0 %4157
        %v4159 = vsel %vm1842, %v3848, -inf
        %4160 = vmax.xlane.f32.xlu0 %v4159
        %v4161 = vpop.xlane.xlu0 %4160
        %v4162 = vsel %vm1842, %v3851, -inf
        %4163 = vmax.xlane.f32.xlu0 %v4162
        %v4164 = vpop.xlane.xlu0 %4163
        %v4165 = vsel %vm1842, %v3897, -inf
        %4166 = vmax.xlane.f32.xlu0 %v4165
        %v4167 = vpop.xlane.xlu0 %4166
        %v4168 = vsel %vm1842, %v3900, -inf
        %4169 = vmax.xlane.f32.xlu0 %v4168
        %v4170 = vpop.xlane.xlu0 %4169
        %v4171 = vsel %vm1842, %v3946, -inf
        %4172 = vmax.xlane.f32.xlu0 %v4171
        %v4173 = vpop.xlane.xlu0 %4172
        %v4174 = vsel %vm1842, %v3949, -inf
        %4175 = vmax.xlane.f32.xlu0 %v4174
        %v4176 = vpop.xlane.xlu0 %4175
        %v4177 = vsel %vm1842, %v3995, -inf
        %4178 = vmax.xlane.f32.xlu0 %v4177
        %v4179 = vpop.xlane.xlu0 %4178
        %v4180 = vsel %vm1842, %v3998, -inf
        %4181 = vmax.xlane.f32.xlu0 %v4180
        %v4182 = vpop.xlane.xlu0 %4181
        %v4183 = vsel %vm1842, %v4044, -inf
        %4184 = vmax.xlane.f32.xlu0 %v4183
        %v4185 = vpop.xlane.xlu0 %4184
        %v4186 = vsel %vm1842, %v4047, -inf
        %4187 = vmax.xlane.f32.xlu0 %v4186
        %v4188 = vpop.xlane.xlu0 %4187
        %v4189 = vsel %vm1842, %v4093, -inf
        %4190 = vmax.xlane.f32.xlu0 %v4189
        %v4191 = vpop.xlane.xlu0 %4190
        %v4192 = vsel %vm1842, %v4096, -inf
        %4193 = vmax.xlane.f32.xlu0 %v4192
        %v4194 = vpop.xlane.xlu0 %4193
        %v4195 = vsub.f32 %v3358, %v4101
        %v4196 = vsub.f32 %v3361, %v4104
        %v4197 = vsub.f32 %v3407, %v4107
        %v4198 = vsub.f32 %v3410, %v4110
        %v4199 = vsub.f32 %v3456, %v4113
        %v4200 = vsub.f32 %v3459, %v4116
        %v4201 = vsub.f32 %v3505, %v4119
        %v4202 = vsub.f32 %v3508, %v4122
        %v4203 = vsub.f32 %v3554, %v4125
        %v4204 = vsub.f32 %v3557, %v4128
        %v4205 = vsub.f32 %v3603, %v4131
        %v4206 = vsub.f32 %v3606, %v4134
        %v4207 = vsub.f32 %v3652, %v4137
        %v4208 = vsub.f32 %v3655, %v4140
        %v4209 = vsub.f32 %v3701, %v4143
        %v4210 = vsub.f32 %v3704, %v4146
        %v4211 = vsub.f32 %v3750, %v4149
        %v4212 = vsub.f32 %v3753, %v4152
        %v4213 = vsub.f32 %v3799, %v4155
        %v4214 = vsub.f32 %v3802, %v4158
        %v4215 = vsub.f32 %v3848, %v4161
        %v4216 = vsub.f32 %v3851, %v4164
        %v4217 = vsub.f32 %v3897, %v4167
        %v4218 = vsub.f32 %v3900, %v4170
        %v4219 = vsub.f32 %v3946, %v4173
        %v4220 = vsub.f32 %v3949, %v4176
        %v4221 = vsub.f32 %v3995, %v4179
        %v4222 = vsub.f32 %v3998, %v4182
        %v4223 = vsub.f32 %v4044, %v4185
        %v4224 = vsub.f32 %v4047, %v4188
        %v4225 = vsub.f32 %v4093, %v4191
        %v4226 = vsub.f32 %v4096, %v4194
        %v4227 = vmul.f32 %v4195, 1.442695
        %v4228 = vpow.pop %v4227
        %v4229 = vmul.f32 %v4196, 1.442695
        %v4230 = vpow.pop %v4229
        %v4231 = vmul.f32 %v4197, 1.442695
        %v4232 = vpow.pop %v4231
        %v4233 = vmul.f32 %v4198, 1.442695
        %v4234 = vpow.pop %v4233
        %v4235 = vmul.f32 %v4199, 1.442695
        %v4236 = vpow.pop %v4235
        %v4237 = vmul.f32 %v4200, 1.442695
        %v4238 = vpow.pop %v4237
        %v4239 = vmul.f32 %v4201, 1.442695
        %v4240 = vpow.pop %v4239
        %v4241 = vmul.f32 %v4202, 1.442695
        %v4242 = vpow.pop %v4241
        %v4243 = vmul.f32 %v4203, 1.442695
        %v4244 = vpow.pop %v4243
        %v4245 = vmul.f32 %v4204, 1.442695
        %v4246 = vpow.pop %v4245
        %v4247 = vmul.f32 %v4205, 1.442695
        %v4248 = vpow.pop %v4247
        %v4249 = vmul.f32 %v4206, 1.442695
        %v4250 = vpow.pop %v4249
        %v4251 = vmul.f32 %v4207, 1.442695
        %v4252 = vpow.pop %v4251
        %v4253 = vmul.f32 %v4208, 1.442695
        %v4254 = vpow.pop %v4253
        %v4255 = vmul.f32 %v4209, 1.442695
        %v4256 = vpow.pop %v4255
        %v4257 = vmul.f32 %v4210, 1.442695
        %v4258 = vpow.pop %v4257
        %v4259 = vmul.f32 %v4211, 1.442695
        %v4260 = vpow.pop %v4259
        %v4261 = vmul.f32 %v4212, 1.442695
        %v4262 = vpow.pop %v4261
        %v4263 = vmul.f32 %v4213, 1.442695
        %v4264 = vpow.pop %v4263
        %v4265 = vmul.f32 %v4214, 1.442695
        %v4266 = vpow.pop %v4265
        %v4267 = vmul.f32 %v4215, 1.442695
        %v4268 = vpow.pop %v4267
        %v4269 = vmul.f32 %v4216, 1.442695
        %v4270 = vpow.pop %v4269
        %v4271 = vmul.f32 %v4217, 1.442695
        %v4272 = vpow.pop %v4271
        %v4273 = vmul.f32 %v4218, 1.442695
        %v4274 = vpow.pop %v4273
        %v4275 = vmul.f32 %v4219, 1.442695
        %v4276 = vpow.pop %v4275
        %v4277 = vmul.f32 %v4220, 1.442695
        %v4278 = vpow.pop %v4277
        %v4279 = vmul.f32 %v4221, 1.442695
        %v4280 = vpow.pop %v4279
        %v4281 = vmul.f32 %v4222, 1.442695
        %v4282 = vpow.pop %v4281
        %v4283 = vmul.f32 %v4223, 1.442695
        %v4284 = vpow.pop %v4283
        %v4285 = vmul.f32 %v4224, 1.442695
        %v4286 = vpow.pop %v4285
        %v4287 = vmul.f32 %v4225, 1.442695
        %v4288 = vpow.pop %v4287
        %v4289 = vmul.f32 %v4226, 1.442695
        %v4290 = vpow.pop %v4289
        %v4291 = vsel %vm1842, %v4228, 0.0
        %4292 = vadd.xlane.f32.xlu0 %v4291
        %v4293 = vpop.xlane.xlu0 %4292
        %v4294 = vsel %vm1842, %v4230, 0.0
        %4295 = vadd.xlane.f32.xlu0 %v4294
        %v4296 = vpop.xlane.xlu0 %4295
        %v4297 = vsel %vm1842, %v4232, 0.0
        %4298 = vadd.xlane.f32.xlu0 %v4297
        %v4299 = vpop.xlane.xlu0 %4298
        %v4300 = vsel %vm1842, %v4234, 0.0
        %4301 = vadd.xlane.f32.xlu0 %v4300
        %v4302 = vpop.xlane.xlu0 %4301
        %v4303 = vsel %vm1842, %v4236, 0.0
        %4304 = vadd.xlane.f32.xlu0 %v4303
        %v4305 = vpop.xlane.xlu0 %4304
        %v4306 = vsel %vm1842, %v4238, 0.0
        %4307 = vadd.xlane.f32.xlu0 %v4306
        %v4308 = vpop.xlane.xlu0 %4307
        %v4309 = vsel %vm1842, %v4240, 0.0
        %4310 = vadd.xlane.f32.xlu0 %v4309
        %v4311 = vpop.xlane.xlu0 %4310
        %v4312 = vsel %vm1842, %v4242, 0.0
        %4313 = vadd.xlane.f32.xlu0 %v4312
        %v4314 = vpop.xlane.xlu0 %4313
        %v4315 = vsel %vm1842, %v4244, 0.0
        %4316 = vadd.xlane.f32.xlu0 %v4315
        %v4317 = vpop.xlane.xlu0 %4316
        %v4318 = vsel %vm1842, %v4246, 0.0
        %4319 = vadd.xlane.f32.xlu0 %v4318
        %v4320 = vpop.xlane.xlu0 %4319
        %v4321 = vsel %vm1842, %v4248, 0.0
        %4322 = vadd.xlane.f32.xlu0 %v4321
        %v4323 = vpop.xlane.xlu0 %4322
        %v4324 = vsel %vm1842, %v4250, 0.0
        %4325 = vadd.xlane.f32.xlu0 %v4324
        %v4326 = vpop.xlane.xlu0 %4325
        %v4327 = vsel %vm1842, %v4252, 0.0
        %4328 = vadd.xlane.f32.xlu0 %v4327
        %v4329 = vpop.xlane.xlu0 %4328
        %v4330 = vsel %vm1842, %v4254, 0.0
        %4331 = vadd.xlane.f32.xlu0 %v4330
        %v4332 = vpop.xlane.xlu0 %4331
        %v4333 = vsel %vm1842, %v4256, 0.0
        %4334 = vadd.xlane.f32.xlu0 %v4333
        %v4335 = vpop.xlane.xlu0 %4334
        %v4336 = vsel %vm1842, %v4258, 0.0
        %4337 = vadd.xlane.f32.xlu0 %v4336
        %v4338 = vpop.xlane.xlu0 %4337
        %v4339 = vsel %vm1842, %v4260, 0.0
        %4340 = vadd.xlane.f32.xlu0 %v4339
        %v4341 = vpop.xlane.xlu0 %4340
        %v4342 = vsel %vm1842, %v4262, 0.0
        %4343 = vadd.xlane.f32.xlu0 %v4342
        %v4344 = vpop.xlane.xlu0 %4343
        %v4345 = vsel %vm1842, %v4264, 0.0
        %4346 = vadd.xlane.f32.xlu0 %v4345
        %v4347 = vpop.xlane.xlu0 %4346
        %v4348 = vsel %vm1842, %v4266, 0.0
        %4349 = vadd.xlane.f32.xlu0 %v4348
        %v4350 = vpop.xlane.xlu0 %4349
        %v4351 = vsel %vm1842, %v4268, 0.0
        %4352 = vadd.xlane.f32.xlu0 %v4351
        %v4353 = vpop.xlane.xlu0 %4352
        %v4354 = vsel %vm1842, %v4270, 0.0
        %4355 = vadd.xlane.f32.xlu0 %v4354
        %v4356 = vpop.xlane.xlu0 %4355
        %v4357 = vsel %vm1842, %v4272, 0.0
        %4358 = vadd.xlane.f32.xlu0 %v4357
        %v4359 = vpop.xlane.xlu0 %4358
        %v4360 = vsel %vm1842, %v4274, 0.0
        %4361 = vadd.xlane.f32.xlu0 %v4360
        %v4362 = vpop.xlane.xlu0 %4361
        %v4363 = vsel %vm1842, %v4276, 0.0
        %4364 = vadd.xlane.f32.xlu0 %v4363
        %v4365 = vpop.xlane.xlu0 %4364
        %v4366 = vsel %vm1842, %v4278, 0.0
        %4367 = vadd.xlane.f32.xlu0 %v4366
        %v4368 = vpop.xlane.xlu0 %4367
        %v4369 = vsel %vm1842, %v4280, 0.0
        %4370 = vadd.xlane.f32.xlu0 %v4369
        %v4371 = vpop.xlane.xlu0 %4370
        %v4372 = vsel %vm1842, %v4282, 0.0
        %4373 = vadd.xlane.f32.xlu0 %v4372
        %v4374 = vpop.xlane.xlu0 %4373
        %v4375 = vsel %vm1842, %v4284, 0.0
        %4376 = vadd.xlane.f32.xlu0 %v4375
        %v4377 = vpop.xlane.xlu0 %4376
        %v4378 = vsel %vm1842, %v4286, 0.0
        %4379 = vadd.xlane.f32.xlu0 %v4378
        %v4380 = vpop.xlane.xlu0 %4379
        %v4381 = vsel %vm1842, %v4288, 0.0
        %4382 = vadd.xlane.f32.xlu0 %v4381
        %v4383 = vpop.xlane.xlu0 %4382
        %v4384 = vsel %vm1842, %v4290, 0.0
        %4385 = vadd.xlane.f32.xlu0 %v4384
        %v4386 = vpop.xlane.xlu0 %4385
        %v4387 = vrcp.pop %v4293
        %v4388 = vrcp.pop %v4296
        %v4389 = vrcp.pop %v4299
        %v4390 = vrcp.pop %v4302
        %v4391 = vrcp.pop %v4305
        %v4392 = vrcp.pop %v4308
        %v4393 = vrcp.pop %v4311
        %v4394 = vrcp.pop %v4314
        %v4395 = vrcp.pop %v4317
        %v4396 = vrcp.pop %v4320
        %v4397 = vrcp.pop %v4323
        %v4398 = vrcp.pop %v4326
        %v4399 = vrcp.pop %v4329
        %v4400 = vrcp.pop %v4332
        %v4401 = vrcp.pop %v4335
        %v4402 = vrcp.pop %v4338
        %v4403 = vrcp.pop %v4341
        %v4404 = vrcp.pop %v4344
        %v4405 = vrcp.pop %v4347
        %v4406 = vrcp.pop %v4350
        %v4407 = vrcp.pop %v4353
        %v4408 = vrcp.pop %v4356
        %v4409 = vrcp.pop %v4359
        %v4410 = vrcp.pop %v4362
        %v4411 = vrcp.pop %v4365
        %v4412 = vrcp.pop %v4368
        %v4413 = vrcp.pop %v4371
        %v4414 = vrcp.pop %v4374
        %v4415 = vrcp.pop %v4377
        %v4416 = vrcp.pop %v4380
        %v4417 = vrcp.pop %v4383
        %v4418 = vrcp.pop %v4386
        %v4419 = vmul.f32 %v4228, %v4387
        %v4420 = vmul.f32 %v4230, %v4388
        %v4421 = vmul.f32 %v4232, %v4389
        %v4422 = vmul.f32 %v4234, %v4390
        %v4423 = vmul.f32 %v4236, %v4391
        %v4424 = vmul.f32 %v4238, %v4392
        %v4425 = vmul.f32 %v4240, %v4393
        %v4426 = vmul.f32 %v4242, %v4394
        %v4427 = vmul.f32 %v4244, %v4395
        %v4428 = vmul.f32 %v4246, %v4396
        %v4429 = vmul.f32 %v4248, %v4397
        %v4430 = vmul.f32 %v4250, %v4398
        %v4431 = vmul.f32 %v4252, %v4399
        %v4432 = vmul.f32 %v4254, %v4400
        %v4433 = vmul.f32 %v4256, %v4401
        %v4434 = vmul.f32 %v4258, %v4402
        %v4435 = vmul.f32 %v4260, %v4403
        %v4436 = vmul.f32 %v4262, %v4404
        %v4437 = vmul.f32 %v4264, %v4405
        %v4438 = vmul.f32 %v4266, %v4406
        %v4439 = vmul.f32 %v4268, %v4407
        %v4440 = vmul.f32 %v4270, %v4408
        %v4441 = vmul.f32 %v4272, %v4409
        %v4442 = vmul.f32 %v4274, %v4410
        %v4443 = vmul.f32 %v4276, %v4411
        %v4444 = vmul.f32 %v4278, %v4412
        %v4445 = vmul.f32 %v4280, %v4413
        %v4446 = vmul.f32 %v4282, %v4414
        %v4447 = vmul.f32 %v4284, %v4415
        %v4448 = vmul.f32 %v4286, %v4416
        %v4449 = vmul.f32 %v4288, %v4417
        %v4450 = vmul.f32 %v4290, %v4418
        %v4451 = vpack.c.bf16 %v4420, %v4419
        %v4452 = vpack.c.bf16 %v4422, %v4421
        %v4453 = vpack.c.bf16 %v4424, %v4423
        %v4454 = vpack.c.bf16 %v4426, %v4425
        %v4455 = vpack.c.bf16 %v4428, %v4427
        %v4456 = vpack.c.bf16 %v4430, %v4429
        %v4457 = vpack.c.bf16 %v4432, %v4431
        %v4458 = vpack.c.bf16 %v4434, %v4433
        %v4459 = vpack.c.bf16 %v4436, %v4435
        %v4460 = vpack.c.bf16 %v4438, %v4437
        %v4461 = vpack.c.bf16 %v4440, %v4439
        %v4462 = vpack.c.bf16 %v4442, %v4441
        %v4463 = vpack.c.bf16 %v4444, %v4443
        %v4464 = vpack.c.bf16 %v4446, %v4445
        %v4465 = vpack.c.bf16 %v4448, %v4447
        %v4466 = vpack.c.bf16 %v4450, %v4449
        %v4467 = vunpack.c.l.b16 %v3221
        %v4468 = vunpack.c.l.b16 %v3269
        %v4469 = vpack.c.b16 %v4468, %v4467
        %v4472 = vsel %vm1842, %v4451, 0
        %4474 = vmatprep.subr.bf16.mxu0 0
        %4475 = vmatpush1.bf16.msra.mxu0 0
        %4476 = vmatprep.subr.bf16.mxu0 0
        %4477 = vmatpush1.bf16.msra.mxu0 0
        %4478 = vmatprep.subr.bf16.mxu0 0
        %4479 = vmatpush1.bf16.msra.mxu0 0
        %4480 = vmatprep.subr.bf16.mxu0 0
        %4481 = vmatpush1.bf16.msra.mxu0 0
        %4482 = vmatprep.subr.bf16.mxu0 0
        %4483 = vmatpush1.bf16.msra.mxu0 0
        %4484 = vmatprep.subr.bf16.mxu0 0
        %4485 = vmatpush1.bf16.msra.mxu0 0
        %4486 = vmatprep.subr.bf16.mxu0 0
        %4487 = vmatpush1.bf16.msra.mxu0 0
        %4488 = vmatprep.subr.bf16.mxu0 0
        %4489 = vmatpush1.bf16.msra.mxu0 %v4469
        %4490 = vmatprep.subr.bf16.mxu0 0
        %4491 = vmatpush2.bf16.msra.mxu0 0
        %4492 = vmatprep.subr.bf16.mxu0 0
        %4493 = vmatpush2.bf16.msra.mxu0 0
        %4494 = vmatprep.subr.bf16.mxu0 0
        %4495 = vmatpush2.bf16.msra.mxu0 0
        %4496 = vmatprep.subr.bf16.mxu0 0
        %4497 = vmatpush2.bf16.msra.mxu0 0
        %4498 = vmatprep.subr.bf16.mxu0 0
        %4499 = vmatpush2.bf16.msra.mxu0 0
        %4500 = vmatprep.subr.bf16.mxu0 0
        %4501 = vmatpush2.bf16.msra.mxu0 0
        %4502 = vmatprep.subr.bf16.mxu0 0
        %4503 = vmatpush2.bf16.msra.mxu0 0
        %4504 = vmatprep.subr.bf16.mxu0 0
        %4505 = vmatpush2.bf16.msra.mxu0 0
        %4506 = vmatprep.mubr.bf16.mxu0 0
        %4507 = vmatmul.mubr.bf16.gmra.mxu0 %v4472
        %v4508 = vpop.f32.mrf.mxu0
        %v4509 = vadd.f32 0.0, %v4508
        %v4510 = vpop.f32.mrf.mxu0
        %v4511 = vpop.f32.mrf.mxu0
        %v4512 = vadd.f32 0.0, %v4511
        %v4513 = vpop.f32.mrf.mxu0
        %4514 = vdwg.mxu0
        %v4515 = vunpack.c.l.b16 %v3224
        %v4516 = vunpack.c.l.b16 %v3272
        %v4517 = vpack.c.b16 %v4516, %v4515
        %v4520 = vsel %vm1842, %v4452, 0
        %4522 = vmatprep.subr.bf16.mxu0 0
        %4523 = vmatpush1.bf16.msra.mxu0 0
        %4524 = vmatprep.subr.bf16.mxu0 0
        %4525 = vmatpush1.bf16.msra.mxu0 0
        %4526 = vmatprep.subr.bf16.mxu0 0
        %4527 = vmatpush1.bf16.msra.mxu0 0
        %4528 = vmatprep.subr.bf16.mxu0 0
        %4529 = vmatpush1.bf16.msra.mxu0 0
        %4530 = vmatprep.subr.bf16.mxu0 0
        %4531 = vmatpush1.bf16.msra.mxu0 0
        %4532 = vmatprep.subr.bf16.mxu0 0
        %4533 = vmatpush1.bf16.msra.mxu0 0
        %4534 = vmatprep.subr.bf16.mxu0 0
        %4535 = vmatpush1.bf16.msra.mxu0 0
        %4536 = vmatprep.subr.bf16.mxu0 0
        %4537 = vmatpush1.bf16.msra.mxu0 %v4517
        %4538 = vmatprep.subr.bf16.mxu0 0
        %4539 = vmatpush2.bf16.msra.mxu0 0
        %4540 = vmatprep.subr.bf16.mxu0 0
        %4541 = vmatpush2.bf16.msra.mxu0 0
        %4542 = vmatprep.subr.bf16.mxu0 0
        %4543 = vmatpush2.bf16.msra.mxu0 0
        %4544 = vmatprep.subr.bf16.mxu0 0
        %4545 = vmatpush2.bf16.msra.mxu0 0
        %4546 = vmatprep.subr.bf16.mxu0 0
        %4547 = vmatpush2.bf16.msra.mxu0 0
        %4548 = vmatprep.subr.bf16.mxu0 0
        %4549 = vmatpush2.bf16.msra.mxu0 0
        %4550 = vmatprep.subr.bf16.mxu0 0
        %4551 = vmatpush2.bf16.msra.mxu0 0
        %4552 = vmatprep.subr.bf16.mxu0 0
        %4553 = vmatpush2.bf16.msra.mxu0 0
        %4554 = vmatprep.mubr.bf16.mxu0 0
        %4555 = vmatmul.mubr.bf16.gmra.mxu0 %v4520
        %v4556 = vpop.f32.mrf.mxu0
        %v4557 = vadd.f32 0.0, %v4556
        %v4558 = vpop.f32.mrf.mxu0
        %v4559 = vpop.f32.mrf.mxu0
        %v4560 = vadd.f32 0.0, %v4559
        %v4561 = vpop.f32.mrf.mxu0
        %4562 = vdwg.mxu0
        %v4563 = vunpack.c.l.b16 %v3227
        %v4564 = vunpack.c.l.b16 %v3275
        %v4565 = vpack.c.b16 %v4564, %v4563
        %v4568 = vsel %vm1842, %v4453, 0
        %4570 = vmatprep.subr.bf16.mxu0 0
        %4571 = vmatpush1.bf16.msra.mxu0 0
        %4572 = vmatprep.subr.bf16.mxu0 0
        %4573 = vmatpush1.bf16.msra.mxu0 0
        %4574 = vmatprep.subr.bf16.mxu0 0
        %4575 = vmatpush1.bf16.msra.mxu0 0
        %4576 = vmatprep.subr.bf16.mxu0 0
        %4577 = vmatpush1.bf16.msra.mxu0 0
        %4578 = vmatprep.subr.bf16.mxu0 0
        %4579 = vmatpush1.bf16.msra.mxu0 0
        %4580 = vmatprep.subr.bf16.mxu0 0
        %4581 = vmatpush1.bf16.msra.mxu0 0
        %4582 = vmatprep.subr.bf16.mxu0 0
        %4583 = vmatpush1.bf16.msra.mxu0 0
        %4584 = vmatprep.subr.bf16.mxu0 0
        %4585 = vmatpush1.bf16.msra.mxu0 %v4565
        %4586 = vmatprep.subr.bf16.mxu0 0
        %4587 = vmatpush2.bf16.msra.mxu0 0
        %4588 = vmatprep.subr.bf16.mxu0 0
        %4589 = vmatpush2.bf16.msra.mxu0 0
        %4590 = vmatprep.subr.bf16.mxu0 0
        %4591 = vmatpush2.bf16.msra.mxu0 0
        %4592 = vmatprep.subr.bf16.mxu0 0
        %4593 = vmatpush2.bf16.msra.mxu0 0
        %4594 = vmatprep.subr.bf16.mxu0 0
        %4595 = vmatpush2.bf16.msra.mxu0 0
        %4596 = vmatprep.subr.bf16.mxu0 0
        %4597 = vmatpush2.bf16.msra.mxu0 0
        %4598 = vmatprep.subr.bf16.mxu0 0
        %4599 = vmatpush2.bf16.msra.mxu0 0
        %4600 = vmatprep.subr.bf16.mxu0 0
        %4601 = vmatpush2.bf16.msra.mxu0 0
        %4602 = vmatprep.mubr.bf16.mxu0 0
        %4603 = vmatmul.mubr.bf16.gmra.mxu0 %v4568
        %v4604 = vpop.f32.mrf.mxu0
        %v4605 = vadd.f32 0.0, %v4604
        %v4606 = vpop.f32.mrf.mxu0
        %v4607 = vpop.f32.mrf.mxu0
        %v4608 = vadd.f32 0.0, %v4607
        %v4609 = vpop.f32.mrf.mxu0
        %4610 = vdwg.mxu0
        %v4611 = vunpack.c.l.b16 %v3230
        %v4612 = vunpack.c.l.b16 %v3278
        %v4613 = vpack.c.b16 %v4612, %v4611
        %v4616 = vsel %vm1842, %v4454, 0
        %4618 = vmatprep.subr.bf16.mxu0 0
        %4619 = vmatpush1.bf16.msra.mxu0 0
        %4620 = vmatprep.subr.bf16.mxu0 0
        %4621 = vmatpush1.bf16.msra.mxu0 0
        %4622 = vmatprep.subr.bf16.mxu0 0
        %4623 = vmatpush1.bf16.msra.mxu0 0
        %4624 = vmatprep.subr.bf16.mxu0 0
        %4625 = vmatpush1.bf16.msra.mxu0 0
        %4626 = vmatprep.subr.bf16.mxu0 0
        %4627 = vmatpush1.bf16.msra.mxu0 0
        %4628 = vmatprep.subr.bf16.mxu0 0
        %4629 = vmatpush1.bf16.msra.mxu0 0
        %4630 = vmatprep.subr.bf16.mxu0 0
        %4631 = vmatpush1.bf16.msra.mxu0 0
        %4632 = vmatprep.subr.bf16.mxu0 0
        %4633 = vmatpush1.bf16.msra.mxu0 %v4613
        %4634 = vmatprep.subr.bf16.mxu0 0
        %4635 = vmatpush2.bf16.msra.mxu0 0
        %4636 = vmatprep.subr.bf16.mxu0 0
        %4637 = vmatpush2.bf16.msra.mxu0 0
        %4638 = vmatprep.subr.bf16.mxu0 0
        %4639 = vmatpush2.bf16.msra.mxu0 0
        %4640 = vmatprep.subr.bf16.mxu0 0
        %4641 = vmatpush2.bf16.msra.mxu0 0
        %4642 = vmatprep.subr.bf16.mxu0 0
        %4643 = vmatpush2.bf16.msra.mxu0 0
        %4644 = vmatprep.subr.bf16.mxu0 0
        %4645 = vmatpush2.bf16.msra.mxu0 0
        %4646 = vmatprep.subr.bf16.mxu0 0
        %4647 = vmatpush2.bf16.msra.mxu0 0
        %4648 = vmatprep.subr.bf16.mxu0 0
        %4649 = vmatpush2.bf16.msra.mxu0 0
        %4650 = vmatprep.mubr.bf16.mxu0 0
        %4651 = vmatmul.mubr.bf16.gmra.mxu0 %v4616
        %v4652 = vpop.f32.mrf.mxu0
        %v4653 = vadd.f32 0.0, %v4652
        %v4654 = vpop.f32.mrf.mxu0
        %v4655 = vpop.f32.mrf.mxu0
        %v4656 = vadd.f32 0.0, %v4655
        %v4657 = vpop.f32.mrf.mxu0
        %4658 = vdwg.mxu0
        %v4659 = vunpack.c.l.b16 %v3233
        %v4660 = vunpack.c.l.b16 %v3281
        %v4661 = vpack.c.b16 %v4660, %v4659
        %v4664 = vsel %vm1842, %v4455, 0
        %4666 = vmatprep.subr.bf16.mxu0 0
        %4667 = vmatpush1.bf16.msra.mxu0 0
        %4668 = vmatprep.subr.bf16.mxu0 0
        %4669 = vmatpush1.bf16.msra.mxu0 0
        %4670 = vmatprep.subr.bf16.mxu0 0
        %4671 = vmatpush1.bf16.msra.mxu0 0
        %4672 = vmatprep.subr.bf16.mxu0 0
        %4673 = vmatpush1.bf16.msra.mxu0 0
        %4674 = vmatprep.subr.bf16.mxu0 0
        %4675 = vmatpush1.bf16.msra.mxu0 0
        %4676 = vmatprep.subr.bf16.mxu0 0
        %4677 = vmatpush1.bf16.msra.mxu0 0
        %4678 = vmatprep.subr.bf16.mxu0 0
        %4679 = vmatpush1.bf16.msra.mxu0 0
        %4680 = vmatprep.subr.bf16.mxu0 0
        %4681 = vmatpush1.bf16.msra.mxu0 %v4661
        %4682 = vmatprep.subr.bf16.mxu0 0
        %4683 = vmatpush2.bf16.msra.mxu0 0
        %4684 = vmatprep.subr.bf16.mxu0 0
        %4685 = vmatpush2.bf16.msra.mxu0 0
        %4686 = vmatprep.subr.bf16.mxu0 0
        %4687 = vmatpush2.bf16.msra.mxu0 0
        %4688 = vmatprep.subr.bf16.mxu0 0
        %4689 = vmatpush2.bf16.msra.mxu0 0
        %4690 = vmatprep.subr.bf16.mxu0 0
        %4691 = vmatpush2.bf16.msra.mxu0 0
        %4692 = vmatprep.subr.bf16.mxu0 0
        %4693 = vmatpush2.bf16.msra.mxu0 0
        %4694 = vmatprep.subr.bf16.mxu0 0
        %4695 = vmatpush2.bf16.msra.mxu0 0
        %4696 = vmatprep.subr.bf16.mxu0 0
        %4697 = vmatpush2.bf16.msra.mxu0 0
        %4698 = vmatprep.mubr.bf16.mxu0 0
        %4699 = vmatmul.mubr.bf16.gmra.mxu0 %v4664
        %v4700 = vpop.f32.mrf.mxu0
        %v4701 = vadd.f32 0.0, %v4700
        %v4702 = vpop.f32.mrf.mxu0
        %v4703 = vpop.f32.mrf.mxu0
        %v4704 = vadd.f32 0.0, %v4703
        %v4705 = vpop.f32.mrf.mxu0
        %4706 = vdwg.mxu0
        %v4707 = vunpack.c.l.b16 %v3236
        %v4708 = vunpack.c.l.b16 %v3284
        %v4709 = vpack.c.b16 %v4708, %v4707
        %v4712 = vsel %vm1842, %v4456, 0
        %4714 = vmatprep.subr.bf16.mxu0 0
        %4715 = vmatpush1.bf16.msra.mxu0 0
        %4716 = vmatprep.subr.bf16.mxu0 0
        %4717 = vmatpush1.bf16.msra.mxu0 0
        %4718 = vmatprep.subr.bf16.mxu0 0
        %4719 = vmatpush1.bf16.msra.mxu0 0
        %4720 = vmatprep.subr.bf16.mxu0 0
        %4721 = vmatpush1.bf16.msra.mxu0 0
        %4722 = vmatprep.subr.bf16.mxu0 0
        %4723 = vmatpush1.bf16.msra.mxu0 0
        %4724 = vmatprep.subr.bf16.mxu0 0
        %4725 = vmatpush1.bf16.msra.mxu0 0
        %4726 = vmatprep.subr.bf16.mxu0 0
        %4727 = vmatpush1.bf16.msra.mxu0 0
        %4728 = vmatprep.subr.bf16.mxu0 0
        %4729 = vmatpush1.bf16.msra.mxu0 %v4709
        %4730 = vmatprep.subr.bf16.mxu0 0
        %4731 = vmatpush2.bf16.msra.mxu0 0
        %4732 = vmatprep.subr.bf16.mxu0 0
        %4733 = vmatpush2.bf16.msra.mxu0 0
        %4734 = vmatprep.subr.bf16.mxu0 0
        %4735 = vmatpush2.bf16.msra.mxu0 0
        %4736 = vmatprep.subr.bf16.mxu0 0
        %4737 = vmatpush2.bf16.msra.mxu0 0
        %4738 = vmatprep.subr.bf16.mxu0 0
        %4739 = vmatpush2.bf16.msra.mxu0 0
        %4740 = vmatprep.subr.bf16.mxu0 0
        %4741 = vmatpush2.bf16.msra.mxu0 0
        %4742 = vmatprep.subr.bf16.mxu0 0
        %4743 = vmatpush2.bf16.msra.mxu0 0
        %4744 = vmatprep.subr.bf16.mxu0 0
        %4745 = vmatpush2.bf16.msra.mxu0 0
        %4746 = vmatprep.mubr.bf16.mxu0 0
        %4747 = vmatmul.mubr.bf16.gmra.mxu0 %v4712
        %v4748 = vpop.f32.mrf.mxu0
        %v4749 = vadd.f32 0.0, %v4748
        %v4750 = vpop.f32.mrf.mxu0
        %v4751 = vpop.f32.mrf.mxu0
        %v4752 = vadd.f32 0.0, %v4751
        %v4753 = vpop.f32.mrf.mxu0
        %4754 = vdwg.mxu0
        %v4755 = vunpack.c.l.b16 %v3239
        %v4756 = vunpack.c.l.b16 %v3287
        %v4757 = vpack.c.b16 %v4756, %v4755
        %v4760 = vsel %vm1842, %v4457, 0
        %4762 = vmatprep.subr.bf16.mxu0 0
        %4763 = vmatpush1.bf16.msra.mxu0 0
        %4764 = vmatprep.subr.bf16.mxu0 0
        %4765 = vmatpush1.bf16.msra.mxu0 0
        %4766 = vmatprep.subr.bf16.mxu0 0
        %4767 = vmatpush1.bf16.msra.mxu0 0
        %4768 = vmatprep.subr.bf16.mxu0 0
        %4769 = vmatpush1.bf16.msra.mxu0 0
        %4770 = vmatprep.subr.bf16.mxu0 0
        %4771 = vmatpush1.bf16.msra.mxu0 0
        %4772 = vmatprep.subr.bf16.mxu0 0
        %4773 = vmatpush1.bf16.msra.mxu0 0
        %4774 = vmatprep.subr.bf16.mxu0 0
        %4775 = vmatpush1.bf16.msra.mxu0 0
        %4776 = vmatprep.subr.bf16.mxu0 0
        %4777 = vmatpush1.bf16.msra.mxu0 %v4757
        %4778 = vmatprep.subr.bf16.mxu0 0
        %4779 = vmatpush2.bf16.msra.mxu0 0
        %4780 = vmatprep.subr.bf16.mxu0 0
        %4781 = vmatpush2.bf16.msra.mxu0 0
        %4782 = vmatprep.subr.bf16.mxu0 0
        %4783 = vmatpush2.bf16.msra.mxu0 0
        %4784 = vmatprep.subr.bf16.mxu0 0
        %4785 = vmatpush2.bf16.msra.mxu0 0
        %4786 = vmatprep.subr.bf16.mxu0 0
        %4787 = vmatpush2.bf16.msra.mxu0 0
        %4788 = vmatprep.subr.bf16.mxu0 0
        %4789 = vmatpush2.bf16.msra.mxu0 0
        %4790 = vmatprep.subr.bf16.mxu0 0
        %4791 = vmatpush2.bf16.msra.mxu0 0
        %4792 = vmatprep.subr.bf16.mxu0 0
        %4793 = vmatpush2.bf16.msra.mxu0 0
        %4794 = vmatprep.mubr.bf16.mxu0 0
        %4795 = vmatmul.mubr.bf16.gmra.mxu0 %v4760
        %v4796 = vpop.f32.mrf.mxu0
        %v4797 = vadd.f32 0.0, %v4796
        %v4798 = vpop.f32.mrf.mxu0
        %v4799 = vpop.f32.mrf.mxu0
        %v4800 = vadd.f32 0.0, %v4799
        %v4801 = vpop.f32.mrf.mxu0
        %4802 = vdwg.mxu0
        %v4803 = vunpack.c.l.b16 %v3242
        %v4804 = vunpack.c.l.b16 %v3290
        %v4805 = vpack.c.b16 %v4804, %v4803
        %v4808 = vsel %vm1842, %v4458, 0
        %4810 = vmatprep.subr.bf16.mxu0 0
        %4811 = vmatpush1.bf16.msra.mxu0 0
        %4812 = vmatprep.subr.bf16.mxu0 0
        %4813 = vmatpush1.bf16.msra.mxu0 0
        %4814 = vmatprep.subr.bf16.mxu0 0
        %4815 = vmatpush1.bf16.msra.mxu0 0
        %4816 = vmatprep.subr.bf16.mxu0 0
        %4817 = vmatpush1.bf16.msra.mxu0 0
        %4818 = vmatprep.subr.bf16.mxu0 0
        %4819 = vmatpush1.bf16.msra.mxu0 0
        %4820 = vmatprep.subr.bf16.mxu0 0
        %4821 = vmatpush1.bf16.msra.mxu0 0
        %4822 = vmatprep.subr.bf16.mxu0 0
        %4823 = vmatpush1.bf16.msra.mxu0 0
        %4824 = vmatprep.subr.bf16.mxu0 0
        %4825 = vmatpush1.bf16.msra.mxu0 %v4805
        %4826 = vmatprep.subr.bf16.mxu0 0
        %4827 = vmatpush2.bf16.msra.mxu0 0
        %4828 = vmatprep.subr.bf16.mxu0 0
        %4829 = vmatpush2.bf16.msra.mxu0 0
        %4830 = vmatprep.subr.bf16.mxu0 0
        %4831 = vmatpush2.bf16.msra.mxu0 0
        %4832 = vmatprep.subr.bf16.mxu0 0
        %4833 = vmatpush2.bf16.msra.mxu0 0
        %4834 = vmatprep.subr.bf16.mxu0 0
        %4835 = vmatpush2.bf16.msra.mxu0 0
        %4836 = vmatprep.subr.bf16.mxu0 0
        %4837 = vmatpush2.bf16.msra.mxu0 0
        %4838 = vmatprep.subr.bf16.mxu0 0
        %4839 = vmatpush2.bf16.msra.mxu0 0
        %4840 = vmatprep.subr.bf16.mxu0 0
        %4841 = vmatpush2.bf16.msra.mxu0 0
        %4842 = vmatprep.mubr.bf16.mxu0 0
        %4843 = vmatmul.mubr.bf16.gmra.mxu0 %v4808
        %v4844 = vpop.f32.mrf.mxu0
        %v4845 = vadd.f32 0.0, %v4844
        %v4846 = vpop.f32.mrf.mxu0
        %v4847 = vpop.f32.mrf.mxu0
        %v4848 = vadd.f32 0.0, %v4847
        %v4849 = vpop.f32.mrf.mxu0
        %4850 = vdwg.mxu0
        %v4851 = vunpack.c.l.b16 %v3245
        %v4852 = vunpack.c.l.b16 %v3293
        %v4853 = vpack.c.b16 %v4852, %v4851
        %v4856 = vsel %vm1842, %v4459, 0
        %4858 = vmatprep.subr.bf16.mxu0 0
        %4859 = vmatpush1.bf16.msra.mxu0 0
        %4860 = vmatprep.subr.bf16.mxu0 0
        %4861 = vmatpush1.bf16.msra.mxu0 0
        %4862 = vmatprep.subr.bf16.mxu0 0
        %4863 = vmatpush1.bf16.msra.mxu0 0
        %4864 = vmatprep.subr.bf16.mxu0 0
        %4865 = vmatpush1.bf16.msra.mxu0 0
        %4866 = vmatprep.subr.bf16.mxu0 0
        %4867 = vmatpush1.bf16.msra.mxu0 0
        %4868 = vmatprep.subr.bf16.mxu0 0
        %4869 = vmatpush1.bf16.msra.mxu0 0
        %4870 = vmatprep.subr.bf16.mxu0 0
        %4871 = vmatpush1.bf16.msra.mxu0 0
        %4872 = vmatprep.subr.bf16.mxu0 0
        %4873 = vmatpush1.bf16.msra.mxu0 %v4853
        %4874 = vmatprep.subr.bf16.mxu0 0
        %4875 = vmatpush2.bf16.msra.mxu0 0
        %4876 = vmatprep.subr.bf16.mxu0 0
        %4877 = vmatpush2.bf16.msra.mxu0 0
        %4878 = vmatprep.subr.bf16.mxu0 0
        %4879 = vmatpush2.bf16.msra.mxu0 0
        %4880 = vmatprep.subr.bf16.mxu0 0
        %4881 = vmatpush2.bf16.msra.mxu0 0
        %4882 = vmatprep.subr.bf16.mxu0 0
        %4883 = vmatpush2.bf16.msra.mxu0 0
        %4884 = vmatprep.subr.bf16.mxu0 0
        %4885 = vmatpush2.bf16.msra.mxu0 0
        %4886 = vmatprep.subr.bf16.mxu0 0
        %4887 = vmatpush2.bf16.msra.mxu0 0
        %4888 = vmatprep.subr.bf16.mxu0 0
        %4889 = vmatpush2.bf16.msra.mxu0 0
        %4890 = vmatprep.mubr.bf16.mxu0 0
        %4891 = vmatmul.mubr.bf16.gmra.mxu0 %v4856
        %v4892 = vpop.f32.mrf.mxu0
        %v4893 = vadd.f32 0.0, %v4892
        %v4894 = vpop.f32.mrf.mxu0
        %v4895 = vpop.f32.mrf.mxu0
        %v4896 = vadd.f32 0.0, %v4895
        %v4897 = vpop.f32.mrf.mxu0
        %4898 = vdwg.mxu0
        %v4899 = vunpack.c.l.b16 %v3248
        %v4900 = vunpack.c.l.b16 %v3296
        %v4901 = vpack.c.b16 %v4900, %v4899
        %v4904 = vsel %vm1842, %v4460, 0
        %4906 = vmatprep.subr.bf16.mxu0 0
        %4907 = vmatpush1.bf16.msra.mxu0 0
        %4908 = vmatprep.subr.bf16.mxu0 0
        %4909 = vmatpush1.bf16.msra.mxu0 0
        %4910 = vmatprep.subr.bf16.mxu0 0
        %4911 = vmatpush1.bf16.msra.mxu0 0
        %4912 = vmatprep.subr.bf16.mxu0 0
        %4913 = vmatpush1.bf16.msra.mxu0 0
        %4914 = vmatprep.subr.bf16.mxu0 0
        %4915 = vmatpush1.bf16.msra.mxu0 0
        %4916 = vmatprep.subr.bf16.mxu0 0
        %4917 = vmatpush1.bf16.msra.mxu0 0
        %4918 = vmatprep.subr.bf16.mxu0 0
        %4919 = vmatpush1.bf16.msra.mxu0 0
        %4920 = vmatprep.subr.bf16.mxu0 0
        %4921 = vmatpush1.bf16.msra.mxu0 %v4901
        %4922 = vmatprep.subr.bf16.mxu0 0
        %4923 = vmatpush2.bf16.msra.mxu0 0
        %4924 = vmatprep.subr.bf16.mxu0 0
        %4925 = vmatpush2.bf16.msra.mxu0 0
        %4926 = vmatprep.subr.bf16.mxu0 0
        %4927 = vmatpush2.bf16.msra.mxu0 0
        %4928 = vmatprep.subr.bf16.mxu0 0
        %4929 = vmatpush2.bf16.msra.mxu0 0
        %4930 = vmatprep.subr.bf16.mxu0 0
        %4931 = vmatpush2.bf16.msra.mxu0 0
        %4932 = vmatprep.subr.bf16.mxu0 0
        %4933 = vmatpush2.bf16.msra.mxu0 0
        %4934 = vmatprep.subr.bf16.mxu0 0
        %4935 = vmatpush2.bf16.msra.mxu0 0
        %4936 = vmatprep.subr.bf16.mxu0 0
        %4937 = vmatpush2.bf16.msra.mxu0 0
        %4938 = vmatprep.mubr.bf16.mxu0 0
        %4939 = vmatmul.mubr.bf16.gmra.mxu0 %v4904
        %v4940 = vpop.f32.mrf.mxu0
        %v4941 = vadd.f32 0.0, %v4940
        %v4942 = vpop.f32.mrf.mxu0
        %v4943 = vpop.f32.mrf.mxu0
        %v4944 = vadd.f32 0.0, %v4943
        %v4945 = vpop.f32.mrf.mxu0
        %4946 = vdwg.mxu0
        %v4947 = vunpack.c.l.b16 %v3251
        %v4948 = vunpack.c.l.b16 %v3299
        %v4949 = vpack.c.b16 %v4948, %v4947
        %v4952 = vsel %vm1842, %v4461, 0
        %4954 = vmatprep.subr.bf16.mxu0 0
        %4955 = vmatpush1.bf16.msra.mxu0 0
        %4956 = vmatprep.subr.bf16.mxu0 0
        %4957 = vmatpush1.bf16.msra.mxu0 0
        %4958 = vmatprep.subr.bf16.mxu0 0
        %4959 = vmatpush1.bf16.msra.mxu0 0
        %4960 = vmatprep.subr.bf16.mxu0 0
        %4961 = vmatpush1.bf16.msra.mxu0 0
        %4962 = vmatprep.subr.bf16.mxu0 0
        %4963 = vmatpush1.bf16.msra.mxu0 0
        %4964 = vmatprep.subr.bf16.mxu0 0
        %4965 = vmatpush1.bf16.msra.mxu0 0
        %4966 = vmatprep.subr.bf16.mxu0 0
        %4967 = vmatpush1.bf16.msra.mxu0 0
        %4968 = vmatprep.subr.bf16.mxu0 0
        %4969 = vmatpush1.bf16.msra.mxu0 %v4949
        %4970 = vmatprep.subr.bf16.mxu0 0
        %4971 = vmatpush2.bf16.msra.mxu0 0
        %4972 = vmatprep.subr.bf16.mxu0 0
        %4973 = vmatpush2.bf16.msra.mxu0 0
        %4974 = vmatprep.subr.bf16.mxu0 0
        %4975 = vmatpush2.bf16.msra.mxu0 0
        %4976 = vmatprep.subr.bf16.mxu0 0
        %4977 = vmatpush2.bf16.msra.mxu0 0
        %4978 = vmatprep.subr.bf16.mxu0 0
        %4979 = vmatpush2.bf16.msra.mxu0 0
        %4980 = vmatprep.subr.bf16.mxu0 0
        %4981 = vmatpush2.bf16.msra.mxu0 0
        %4982 = vmatprep.subr.bf16.mxu0 0
        %4983 = vmatpush2.bf16.msra.mxu0 0
        %4984 = vmatprep.subr.bf16.mxu0 0
        %4985 = vmatpush2.bf16.msra.mxu0 0
        %4986 = vmatprep.mubr.bf16.mxu0 0
        %4987 = vmatmul.mubr.bf16.gmra.mxu0 %v4952
        %v4988 = vpop.f32.mrf.mxu0
        %v4989 = vadd.f32 0.0, %v4988
        %v4990 = vpop.f32.mrf.mxu0
        %v4991 = vpop.f32.mrf.mxu0
        %v4992 = vadd.f32 0.0, %v4991
        %v4993 = vpop.f32.mrf.mxu0
        %4994 = vdwg.mxu0
        %v4995 = vunpack.c.l.b16 %v3254
        %v4996 = vunpack.c.l.b16 %v3302
        %v4997 = vpack.c.b16 %v4996, %v4995
        %v5000 = vsel %vm1842, %v4462, 0
        %5002 = vmatprep.subr.bf16.mxu0 0
        %5003 = vmatpush1.bf16.msra.mxu0 0
        %5004 = vmatprep.subr.bf16.mxu0 0
        %5005 = vmatpush1.bf16.msra.mxu0 0
        %5006 = vmatprep.subr.bf16.mxu0 0
        %5007 = vmatpush1.bf16.msra.mxu0 0
        %5008 = vmatprep.subr.bf16.mxu0 0
        %5009 = vmatpush1.bf16.msra.mxu0 0
        %5010 = vmatprep.subr.bf16.mxu0 0
        %5011 = vmatpush1.bf16.msra.mxu0 0
        %5012 = vmatprep.subr.bf16.mxu0 0
        %5013 = vmatpush1.bf16.msra.mxu0 0
        %5014 = vmatprep.subr.bf16.mxu0 0
        %5015 = vmatpush1.bf16.msra.mxu0 0
        %5016 = vmatprep.subr.bf16.mxu0 0
        %5017 = vmatpush1.bf16.msra.mxu0 %v4997
        %5018 = vmatprep.subr.bf16.mxu0 0
        %5019 = vmatpush2.bf16.msra.mxu0 0
        %5020 = vmatprep.subr.bf16.mxu0 0
        %5021 = vmatpush2.bf16.msra.mxu0 0
        %5022 = vmatprep.subr.bf16.mxu0 0
        %5023 = vmatpush2.bf16.msra.mxu0 0
        %5024 = vmatprep.subr.bf16.mxu0 0
        %5025 = vmatpush2.bf16.msra.mxu0 0
        %5026 = vmatprep.subr.bf16.mxu0 0
        %5027 = vmatpush2.bf16.msra.mxu0 0
        %5028 = vmatprep.subr.bf16.mxu0 0
        %5029 = vmatpush2.bf16.msra.mxu0 0
        %5030 = vmatprep.subr.bf16.mxu0 0
        %5031 = vmatpush2.bf16.msra.mxu0 0
        %5032 = vmatprep.subr.bf16.mxu0 0
        %5033 = vmatpush2.bf16.msra.mxu0 0
        %5034 = vmatprep.mubr.bf16.mxu0 0
        %5035 = vmatmul.mubr.bf16.gmra.mxu0 %v5000
        %v5036 = vpop.f32.mrf.mxu0
        %v5037 = vadd.f32 0.0, %v5036
        %v5038 = vpop.f32.mrf.mxu0
        %v5039 = vpop.f32.mrf.mxu0
        %v5040 = vadd.f32 0.0, %v5039
        %v5041 = vpop.f32.mrf.mxu0
        %5042 = vdwg.mxu0
        %v5043 = vunpack.c.l.b16 %v3257
        %v5044 = vunpack.c.l.b16 %v3305
        %v5045 = vpack.c.b16 %v5044, %v5043
        %v5048 = vsel %vm1842, %v4463, 0
        %5050 = vmatprep.subr.bf16.mxu0 0
        %5051 = vmatpush1.bf16.msra.mxu0 0
        %5052 = vmatprep.subr.bf16.mxu0 0
        %5053 = vmatpush1.bf16.msra.mxu0 0
        %5054 = vmatprep.subr.bf16.mxu0 0
        %5055 = vmatpush1.bf16.msra.mxu0 0
        %5056 = vmatprep.subr.bf16.mxu0 0
        %5057 = vmatpush1.bf16.msra.mxu0 0
        %5058 = vmatprep.subr.bf16.mxu0 0
        %5059 = vmatpush1.bf16.msra.mxu0 0
        %5060 = vmatprep.subr.bf16.mxu0 0
        %5061 = vmatpush1.bf16.msra.mxu0 0
        %5062 = vmatprep.subr.bf16.mxu0 0
        %5063 = vmatpush1.bf16.msra.mxu0 0
        %5064 = vmatprep.subr.bf16.mxu0 0
        %5065 = vmatpush1.bf16.msra.mxu0 %v5045
        %5066 = vmatprep.subr.bf16.mxu0 0
        %5067 = vmatpush2.bf16.msra.mxu0 0
        %5068 = vmatprep.subr.bf16.mxu0 0
        %5069 = vmatpush2.bf16.msra.mxu0 0
        %5070 = vmatprep.subr.bf16.mxu0 0
        %5071 = vmatpush2.bf16.msra.mxu0 0
        %5072 = vmatprep.subr.bf16.mxu0 0
        %5073 = vmatpush2.bf16.msra.mxu0 0
        %5074 = vmatprep.subr.bf16.mxu0 0
        %5075 = vmatpush2.bf16.msra.mxu0 0
        %5076 = vmatprep.subr.bf16.mxu0 0
        %5077 = vmatpush2.bf16.msra.mxu0 0
        %5078 = vmatprep.subr.bf16.mxu0 0
        %5079 = vmatpush2.bf16.msra.mxu0 0
        %5080 = vmatprep.subr.bf16.mxu0 0
        %5081 = vmatpush2.bf16.msra.mxu0 0
        %5082 = vmatprep.mubr.bf16.mxu0 0
        %5083 = vmatmul.mubr.bf16.gmra.mxu0 %v5048
        %v5084 = vpop.f32.mrf.mxu0
        %v5085 = vadd.f32 0.0, %v5084
        %v5086 = vpop.f32.mrf.mxu0
        %v5087 = vpop.f32.mrf.mxu0
        %v5088 = vadd.f32 0.0, %v5087
        %v5089 = vpop.f32.mrf.mxu0
        %5090 = vdwg.mxu0
        %v5091 = vunpack.c.l.b16 %v3260
        %v5092 = vunpack.c.l.b16 %v3308
        %v5093 = vpack.c.b16 %v5092, %v5091
        %v5096 = vsel %vm1842, %v4464, 0
        %5098 = vmatprep.subr.bf16.mxu0 0
        %5099 = vmatpush1.bf16.msra.mxu0 0
        %5100 = vmatprep.subr.bf16.mxu0 0
        %5101 = vmatpush1.bf16.msra.mxu0 0
        %5102 = vmatprep.subr.bf16.mxu0 0
        %5103 = vmatpush1.bf16.msra.mxu0 0
        %5104 = vmatprep.subr.bf16.mxu0 0
        %5105 = vmatpush1.bf16.msra.mxu0 0
        %5106 = vmatprep.subr.bf16.mxu0 0
        %5107 = vmatpush1.bf16.msra.mxu0 0
        %5108 = vmatprep.subr.bf16.mxu0 0
        %5109 = vmatpush1.bf16.msra.mxu0 0
        %5110 = vmatprep.subr.bf16.mxu0 0
        %5111 = vmatpush1.bf16.msra.mxu0 0
        %5112 = vmatprep.subr.bf16.mxu0 0
        %5113 = vmatpush1.bf16.msra.mxu0 %v5093
        %5114 = vmatprep.subr.bf16.mxu0 0
        %5115 = vmatpush2.bf16.msra.mxu0 0
        %5116 = vmatprep.subr.bf16.mxu0 0
        %5117 = vmatpush2.bf16.msra.mxu0 0
        %5118 = vmatprep.subr.bf16.mxu0 0
        %5119 = vmatpush2.bf16.msra.mxu0 0
        %5120 = vmatprep.subr.bf16.mxu0 0
        %5121 = vmatpush2.bf16.msra.mxu0 0
        %5122 = vmatprep.subr.bf16.mxu0 0
        %5123 = vmatpush2.bf16.msra.mxu0 0
        %5124 = vmatprep.subr.bf16.mxu0 0
        %5125 = vmatpush2.bf16.msra.mxu0 0
        %5126 = vmatprep.subr.bf16.mxu0 0
        %5127 = vmatpush2.bf16.msra.mxu0 0
        %5128 = vmatprep.subr.bf16.mxu0 0
        %5129 = vmatpush2.bf16.msra.mxu0 0
        %5130 = vmatprep.mubr.bf16.mxu0 0
        %5131 = vmatmul.mubr.bf16.gmra.mxu0 %v5096
        %v5132 = vpop.f32.mrf.mxu0
        %v5133 = vadd.f32 0.0, %v5132
        %v5134 = vpop.f32.mrf.mxu0
        %v5135 = vpop.f32.mrf.mxu0
        %v5136 = vadd.f32 0.0, %v5135
        %v5137 = vpop.f32.mrf.mxu0
        %5138 = vdwg.mxu0
        %v5139 = vunpack.c.l.b16 %v3263
        %v5140 = vunpack.c.l.b16 %v3311
        %v5141 = vpack.c.b16 %v5140, %v5139
        %v5144 = vsel %vm1842, %v4465, 0
        %5146 = vmatprep.subr.bf16.mxu0 0
        %5147 = vmatpush1.bf16.msra.mxu0 0
        %5148 = vmatprep.subr.bf16.mxu0 0
        %5149 = vmatpush1.bf16.msra.mxu0 0
        %5150 = vmatprep.subr.bf16.mxu0 0
        %5151 = vmatpush1.bf16.msra.mxu0 0
        %5152 = vmatprep.subr.bf16.mxu0 0
        %5153 = vmatpush1.bf16.msra.mxu0 0
        %5154 = vmatprep.subr.bf16.mxu0 0
        %5155 = vmatpush1.bf16.msra.mxu0 0
        %5156 = vmatprep.subr.bf16.mxu0 0
        %5157 = vmatpush1.bf16.msra.mxu0 0
        %5158 = vmatprep.subr.bf16.mxu0 0
        %5159 = vmatpush1.bf16.msra.mxu0 0
        %5160 = vmatprep.subr.bf16.mxu0 0
        %5161 = vmatpush1.bf16.msra.mxu0 %v5141
        %5162 = vmatprep.subr.bf16.mxu0 0
        %5163 = vmatpush2.bf16.msra.mxu0 0
        %5164 = vmatprep.subr.bf16.mxu0 0
        %5165 = vmatpush2.bf16.msra.mxu0 0
        %5166 = vmatprep.subr.bf16.mxu0 0
        %5167 = vmatpush2.bf16.msra.mxu0 0
        %5168 = vmatprep.subr.bf16.mxu0 0
        %5169 = vmatpush2.bf16.msra.mxu0 0
        %5170 = vmatprep.subr.bf16.mxu0 0
        %5171 = vmatpush2.bf16.msra.mxu0 0
        %5172 = vmatprep.subr.bf16.mxu0 0
        %5173 = vmatpush2.bf16.msra.mxu0 0
        %5174 = vmatprep.subr.bf16.mxu0 0
        %5175 = vmatpush2.bf16.msra.mxu0 0
        %5176 = vmatprep.subr.bf16.mxu0 0
        %5177 = vmatpush2.bf16.msra.mxu0 0
        %5178 = vmatprep.mubr.bf16.mxu0 0
        %5179 = vmatmul.mubr.bf16.gmra.mxu0 %v5144
        %v5180 = vpop.f32.mrf.mxu0
        %v5181 = vadd.f32 0.0, %v5180
        %v5182 = vpop.f32.mrf.mxu0
        %v5183 = vpop.f32.mrf.mxu0
        %v5184 = vadd.f32 0.0, %v5183
        %v5185 = vpop.f32.mrf.mxu0
        %5186 = vdwg.mxu0
        %v5187 = vunpack.c.l.b16 %v3266
        %v5188 = vunpack.c.l.b16 %v3314
        %v5189 = vpack.c.b16 %v5188, %v5187
        %v5192 = vsel %vm1842, %v4466, 0
        %5194 = vmatprep.subr.bf16.mxu0 0
        %5195 = vmatpush1.bf16.msra.mxu0 0
        %5196 = vmatprep.subr.bf16.mxu0 0
        %5197 = vmatpush1.bf16.msra.mxu0 0
        %5198 = vmatprep.subr.bf16.mxu0 0
        %5199 = vmatpush1.bf16.msra.mxu0 0
        %5200 = vmatprep.subr.bf16.mxu0 0
        %5201 = vmatpush1.bf16.msra.mxu0 0
        %5202 = vmatprep.subr.bf16.mxu0 0
        %5203 = vmatpush1.bf16.msra.mxu0 0
        %5204 = vmatprep.subr.bf16.mxu0 0
        %5205 = vmatpush1.bf16.msra.mxu0 0
        %5206 = vmatprep.subr.bf16.mxu0 0
        %5207 = vmatpush1.bf16.msra.mxu0 0
        %5208 = vmatprep.subr.bf16.mxu0 0
        %5209 = vmatpush1.bf16.msra.mxu0 %v5189
        %5210 = vmatprep.subr.bf16.mxu0 0
        %5211 = vmatpush2.bf16.msra.mxu0 0
        %5212 = vmatprep.subr.bf16.mxu0 0
        %5213 = vmatpush2.bf16.msra.mxu0 0
        %5214 = vmatprep.subr.bf16.mxu0 0
        %5215 = vmatpush2.bf16.msra.mxu0 0
        %5216 = vmatprep.subr.bf16.mxu0 0
        %5217 = vmatpush2.bf16.msra.mxu0 0
        %5218 = vmatprep.subr.bf16.mxu0 0
        %5219 = vmatpush2.bf16.msra.mxu0 0
        %5220 = vmatprep.subr.bf16.mxu0 0
        %5221 = vmatpush2.bf16.msra.mxu0 0
        %5222 = vmatprep.subr.bf16.mxu0 0
        %5223 = vmatpush2.bf16.msra.mxu0 0
        %5224 = vmatprep.subr.bf16.mxu0 0
        %5225 = vmatpush2.bf16.msra.mxu0 0
        %5226 = vmatprep.mubr.bf16.mxu0 0
        %5227 = vmatmul.mubr.bf16.gmra.mxu0 %v5192
        %v5228 = vpop.f32.mrf.mxu0
        %v5229 = vadd.f32 0.0, %v5228
        %v5230 = vpop.f32.mrf.mxu0
        %v5231 = vpop.f32.mrf.mxu0
        %v5232 = vadd.f32 0.0, %v5231
        %v5233 = vpop.f32.mrf.mxu0
        %5234 = vdwg.mxu0
        %v5235 = vcombine.low %v4509, %v4605
        %v5236 = vcombine.high %v4509, %v4605
        %v5238 = vunpack.c.l.s4 1983009808
        %v5239 = vunpack.c.0.s8 %v5238
        %v5240 = vlaneseq
        %v5241 = vshrl.u32 %v5240, 7
        %v5242 = vsub.s32 %v5239, %v5241
        %v5243 = vrot.slane %v5235, %v5242
        %v5245 = vunpack.c.l.s4 1983009808
        %v5246 = vunpack.c.0.s8 %v5245
        %v5247 = vlaneseq
        %v5248 = vshrl.u32 %v5247, 7
        %v5249 = vsub.s32 %v5246, %v5248
        %v5250 = vrot.slane %v5236, %v5249
        %v5251 = vcombine.low %v4557, %v4653
        %v5252 = vcombine.high %v4557, %v4653
        %v5254 = vunpack.c.l.s4 1983009808
        %v5255 = vunpack.c.0.s8 %v5254
        %v5256 = vlaneseq
        %v5257 = vshrl.u32 %v5256, 7
        %v5258 = vsub.s32 %v5255, %v5257
        %v5259 = vrot.slane %v5251, %v5258
        %v5261 = vunpack.c.l.s4 1983009808
        %v5262 = vunpack.c.0.s8 %v5261
        %v5263 = vlaneseq
        %v5264 = vshrl.u32 %v5263, 7
        %v5265 = vsub.s32 %v5262, %v5264
        %v5266 = vrot.slane %v5252, %v5265
        %v5267 = vcombine.low %v4701, %v4797
        %v5268 = vcombine.high %v4701, %v4797
        %v5270 = vunpack.c.l.s4 1983009808
        %v5271 = vunpack.c.0.s8 %v5270
        %v5272 = vlaneseq
        %v5273 = vshrl.u32 %v5272, 7
        %v5274 = vsub.s32 %v5271, %v5273
        %v5275 = vrot.slane %v5267, %v5274
        %v5277 = vunpack.c.l.s4 1983009808
        %v5278 = vunpack.c.0.s8 %v5277
        %v5279 = vlaneseq
        %v5280 = vshrl.u32 %v5279, 7
        %v5281 = vsub.s32 %v5278, %v5280
        %v5282 = vrot.slane %v5268, %v5281
        %v5283 = vcombine.low %v4749, %v4845
        %v5284 = vcombine.high %v4749, %v4845
        %v5286 = vunpack.c.l.s4 1983009808
        %v5287 = vunpack.c.0.s8 %v5286
        %v5288 = vlaneseq
        %v5289 = vshrl.u32 %v5288, 7
        %v5290 = vsub.s32 %v5287, %v5289
        %v5291 = vrot.slane %v5283, %v5290
        %v5293 = vunpack.c.l.s4 1983009808
        %v5294 = vunpack.c.0.s8 %v5293
        %v5295 = vlaneseq
        %v5296 = vshrl.u32 %v5295, 7
        %v5297 = vsub.s32 %v5294, %v5296
        %v5298 = vrot.slane %v5284, %v5297
        %v5299 = vcombine.low %v5243, %v5259
        %v5300 = vcombine.high %v5243, %v5259
        %v5302 = vunpack.c.l.s4 1934713408
        %v5303 = vunpack.c.0.s8 %v5302
        %v5304 = vlaneseq
        %v5305 = vshrl.u32 %v5304, 7
        %v5306 = vsub.s32 %v5303, %v5305
        %v5307 = vrot.slane %v5299, %v5306
        %v5309 = vunpack.c.l.s4 1934713408
        %v5310 = vunpack.c.0.s8 %v5309
        %v5311 = vlaneseq
        %v5312 = vshrl.u32 %v5311, 7
        %v5313 = vsub.s32 %v5310, %v5312
        %v5314 = vrot.slane %v5300, %v5313
        %v5315 = vcombine.low %v5250, %v5266
        %v5316 = vcombine.high %v5250, %v5266
        %v5318 = vunpack.c.l.s4 1934713408
        %v5319 = vunpack.c.0.s8 %v5318
        %v5320 = vlaneseq
        %v5321 = vshrl.u32 %v5320, 7
        %v5322 = vsub.s32 %v5319, %v5321
        %v5323 = vrot.slane %v5315, %v5322
        %v5325 = vunpack.c.l.s4 1934713408
        %v5326 = vunpack.c.0.s8 %v5325
        %v5327 = vlaneseq
        %v5328 = vshrl.u32 %v5327, 7
        %v5329 = vsub.s32 %v5326, %v5328
        %v5330 = vrot.slane %v5316, %v5329
        %v5331 = vcombine.low %v5275, %v5291
        %v5332 = vcombine.high %v5275, %v5291
        %v5334 = vunpack.c.l.s4 1934713408
        %v5335 = vunpack.c.0.s8 %v5334
        %v5336 = vlaneseq
        %v5337 = vshrl.u32 %v5336, 7
        %v5338 = vsub.s32 %v5335, %v5337
        %v5339 = vrot.slane %v5331, %v5338
        %v5341 = vunpack.c.l.s4 1934713408
        %v5342 = vunpack.c.0.s8 %v5341
        %v5343 = vlaneseq
        %v5344 = vshrl.u32 %v5343, 7
        %v5345 = vsub.s32 %v5342, %v5344
        %v5346 = vrot.slane %v5332, %v5345
        %v5347 = vcombine.low %v5282, %v5298
        %v5348 = vcombine.high %v5282, %v5298
        %v5350 = vunpack.c.l.s4 1934713408
        %v5351 = vunpack.c.0.s8 %v5350
        %v5352 = vlaneseq
        %v5353 = vshrl.u32 %v5352, 7
        %v5354 = vsub.s32 %v5351, %v5353
        %v5355 = vrot.slane %v5347, %v5354
        %v5357 = vunpack.c.l.s4 1934713408
        %v5358 = vunpack.c.0.s8 %v5357
        %v5359 = vlaneseq
        %v5360 = vshrl.u32 %v5359, 7
        %v5361 = vsub.s32 %v5358, %v5360
        %v5362 = vrot.slane %v5348, %v5361
        %v5363 = vcombine.low %v5307, %v5339
        %v5364 = vcombine.high %v5307, %v5339
        %v5365 = vcombine.low %v5314, %v5346
        %v5366 = vcombine.high %v5314, %v5346
        %v5367 = vcombine.low %v5323, %v5355
        %v5368 = vcombine.high %v5323, %v5355
        %v5369 = vcombine.low %v5330, %v5362
        %v5370 = vcombine.high %v5330, %v5362
        %v5371 = vcombine.low %v4893, %v4989
        %v5372 = vcombine.high %v4893, %v4989
        %v5374 = vunpack.c.l.s4 1983009808
        %v5375 = vunpack.c.0.s8 %v5374
        %v5376 = vlaneseq
        %v5377 = vshrl.u32 %v5376, 7
        %v5378 = vsub.s32 %v5375, %v5377
        %v5379 = vrot.slane %v5371, %v5378
        %v5381 = vunpack.c.l.s4 1983009808
        %v5382 = vunpack.c.0.s8 %v5381
        %v5383 = vlaneseq
        %v5384 = vshrl.u32 %v5383, 7
        %v5385 = vsub.s32 %v5382, %v5384
        %v5386 = vrot.slane %v5372, %v5385
        %v5387 = vcombine.low %v4941, %v5037
        %v5388 = vcombine.high %v4941, %v5037
        %v5390 = vunpack.c.l.s4 1983009808
        %v5391 = vunpack.c.0.s8 %v5390
        %v5392 = vlaneseq
        %v5393 = vshrl.u32 %v5392, 7
        %v5394 = vsub.s32 %v5391, %v5393
        %v5395 = vrot.slane %v5387, %v5394
        %v5397 = vunpack.c.l.s4 1983009808
        %v5398 = vunpack.c.0.s8 %v5397
        %v5399 = vlaneseq
        %v5400 = vshrl.u32 %v5399, 7
        %v5401 = vsub.s32 %v5398, %v5400
        %v5402 = vrot.slane %v5388, %v5401
        %v5403 = vcombine.low %v5085, %v5181
        %v5404 = vcombine.high %v5085, %v5181
        %v5406 = vunpack.c.l.s4 1983009808
        %v5407 = vunpack.c.0.s8 %v5406
        %v5408 = vlaneseq
        %v5409 = vshrl.u32 %v5408, 7
        %v5410 = vsub.s32 %v5407, %v5409
        %v5411 = vrot.slane %v5403, %v5410
        %v5413 = vunpack.c.l.s4 1983009808
        %v5414 = vunpack.c.0.s8 %v5413
        %v5415 = vlaneseq
        %v5416 = vshrl.u32 %v5415, 7
        %v5417 = vsub.s32 %v5414, %v5416
        %v5418 = vrot.slane %v5404, %v5417
        %v5419 = vcombine.low %v5133, %v5229
        %v5420 = vcombine.high %v5133, %v5229
        %v5422 = vunpack.c.l.s4 1983009808
        %v5423 = vunpack.c.0.s8 %v5422
        %v5424 = vlaneseq
        %v5425 = vshrl.u32 %v5424, 7
        %v5426 = vsub.s32 %v5423, %v5425
        %v5427 = vrot.slane %v5419, %v5426
        %v5429 = vunpack.c.l.s4 1983009808
        %v5430 = vunpack.c.0.s8 %v5429
        %v5431 = vlaneseq
        %v5432 = vshrl.u32 %v5431, 7
        %v5433 = vsub.s32 %v5430, %v5432
        %v5434 = vrot.slane %v5420, %v5433
        %v5435 = vcombine.low %v5379, %v5395
        %v5436 = vcombine.high %v5379, %v5395
        %v5438 = vunpack.c.l.s4 1934713408
        %v5439 = vunpack.c.0.s8 %v5438
        %v5440 = vlaneseq
        %v5441 = vshrl.u32 %v5440, 7
        %v5442 = vsub.s32 %v5439, %v5441
        %v5443 = vrot.slane %v5435, %v5442
        %v5445 = vunpack.c.l.s4 1934713408
        %v5446 = vunpack.c.0.s8 %v5445
        %v5447 = vlaneseq
        %v5448 = vshrl.u32 %v5447, 7
        %v5449 = vsub.s32 %v5446, %v5448
        %v5450 = vrot.slane %v5436, %v5449
        %v5451 = vcombine.low %v5386, %v5402
        %v5452 = vcombine.high %v5386, %v5402
        %v5454 = vunpack.c.l.s4 1934713408
        %v5455 = vunpack.c.0.s8 %v5454
        %v5456 = vlaneseq
        %v5457 = vshrl.u32 %v5456, 7
        %v5458 = vsub.s32 %v5455, %v5457
        %v5459 = vrot.slane %v5451, %v5458
        %v5461 = vunpack.c.l.s4 1934713408
        %v5462 = vunpack.c.0.s8 %v5461
        %v5463 = vlaneseq
        %v5464 = vshrl.u32 %v5463, 7
        %v5465 = vsub.s32 %v5462, %v5464
        %v5466 = vrot.slane %v5452, %v5465
        %v5467 = vcombine.low %v5411, %v5427
        %v5468 = vcombine.high %v5411, %v5427
        %v5470 = vunpack.c.l.s4 1934713408
        %v5471 = vunpack.c.0.s8 %v5470
        %v5472 = vlaneseq
        %v5473 = vshrl.u32 %v5472, 7
        %v5474 = vsub.s32 %v5471, %v5473
        %v5475 = vrot.slane %v5467, %v5474
        %v5477 = vunpack.c.l.s4 1934713408
        %v5478 = vunpack.c.0.s8 %v5477
        %v5479 = vlaneseq
        %v5480 = vshrl.u32 %v5479, 7
        %v5481 = vsub.s32 %v5478, %v5480
        %v5482 = vrot.slane %v5468, %v5481
        %v5483 = vcombine.low %v5418, %v5434
        %v5484 = vcombine.high %v5418, %v5434
        %v5486 = vunpack.c.l.s4 1934713408
        %v5487 = vunpack.c.0.s8 %v5486
        %v5488 = vlaneseq
        %v5489 = vshrl.u32 %v5488, 7
        %v5490 = vsub.s32 %v5487, %v5489
        %v5491 = vrot.slane %v5483, %v5490
        %v5493 = vunpack.c.l.s4 1934713408
        %v5494 = vunpack.c.0.s8 %v5493
        %v5495 = vlaneseq
        %v5496 = vshrl.u32 %v5495, 7
        %v5497 = vsub.s32 %v5494, %v5496
        %v5498 = vrot.slane %v5484, %v5497
        %v5499 = vcombine.low %v5443, %v5475
        %v5500 = vcombine.high %v5443, %v5475
        %v5501 = vcombine.low %v5450, %v5482
        %v5502 = vcombine.high %v5450, %v5482
        %v5503 = vcombine.low %v5459, %v5491
        %v5504 = vcombine.high %v5459, %v5491
        %v5505 = vcombine.low %v5466, %v5498
        %v5506 = vcombine.high %v5466, %v5498
        %v5507 = vcombine.low %v4512, %v4608
        %v5508 = vcombine.high %v4512, %v4608
        %v5510 = vunpack.c.l.s4 1983009808
        %v5511 = vunpack.c.0.s8 %v5510
        %v5512 = vlaneseq
        %v5513 = vshrl.u32 %v5512, 7
        %v5514 = vsub.s32 %v5511, %v5513
        %v5515 = vrot.slane %v5507, %v5514
        %v5517 = vunpack.c.l.s4 1983009808
        %v5518 = vunpack.c.0.s8 %v5517
        %v5519 = vlaneseq
        %v5520 = vshrl.u32 %v5519, 7
        %v5521 = vsub.s32 %v5518, %v5520
        %v5522 = vrot.slane %v5508, %v5521
        %v5523 = vcombine.low %v4560, %v4656
        %v5524 = vcombine.high %v4560, %v4656
        %v5526 = vunpack.c.l.s4 1983009808
        %v5527 = vunpack.c.0.s8 %v5526
        %v5528 = vlaneseq
        %v5529 = vshrl.u32 %v5528, 7
        %v5530 = vsub.s32 %v5527, %v5529
        %v5531 = vrot.slane %v5523, %v5530
        %v5533 = vunpack.c.l.s4 1983009808
        %v5534 = vunpack.c.0.s8 %v5533
        %v5535 = vlaneseq
        %v5536 = vshrl.u32 %v5535, 7
        %v5537 = vsub.s32 %v5534, %v5536
        %v5538 = vrot.slane %v5524, %v5537
        %v5539 = vcombine.low %v4704, %v4800
        %v5540 = vcombine.high %v4704, %v4800
        %v5542 = vunpack.c.l.s4 1983009808
        %v5543 = vunpack.c.0.s8 %v5542
        %v5544 = vlaneseq
        %v5545 = vshrl.u32 %v5544, 7
        %v5546 = vsub.s32 %v5543, %v5545
        %v5547 = vrot.slane %v5539, %v5546
        %v5549 = vunpack.c.l.s4 1983009808
        %v5550 = vunpack.c.0.s8 %v5549
        %v5551 = vlaneseq
        %v5552 = vshrl.u32 %v5551, 7
        %v5553 = vsub.s32 %v5550, %v5552
        %v5554 = vrot.slane %v5540, %v5553
        %v5555 = vcombine.low %v4752, %v4848
        %v5556 = vcombine.high %v4752, %v4848
        %v5558 = vunpack.c.l.s4 1983009808
        %v5559 = vunpack.c.0.s8 %v5558
        %v5560 = vlaneseq
        %v5561 = vshrl.u32 %v5560, 7
        %v5562 = vsub.s32 %v5559, %v5561
        %v5563 = vrot.slane %v5555, %v5562
        %v5565 = vunpack.c.l.s4 1983009808
        %v5566 = vunpack.c.0.s8 %v5565
        %v5567 = vlaneseq
        %v5568 = vshrl.u32 %v5567, 7
        %v5569 = vsub.s32 %v5566, %v5568
        %v5570 = vrot.slane %v5556, %v5569
        %v5571 = vcombine.low %v5515, %v5531
        %v5572 = vcombine.high %v5515, %v5531
        %v5574 = vunpack.c.l.s4 1934713408
        %v5575 = vunpack.c.0.s8 %v5574
        %v5576 = vlaneseq
        %v5577 = vshrl.u32 %v5576, 7
        %v5578 = vsub.s32 %v5575, %v5577
        %v5579 = vrot.slane %v5571, %v5578
        %v5581 = vunpack.c.l.s4 1934713408
        %v5582 = vunpack.c.0.s8 %v5581
        %v5583 = vlaneseq
        %v5584 = vshrl.u32 %v5583, 7
        %v5585 = vsub.s32 %v5582, %v5584
        %v5586 = vrot.slane %v5572, %v5585
        %v5587 = vcombine.low %v5522, %v5538
        %v5588 = vcombine.high %v5522, %v5538
        %v5590 = vunpack.c.l.s4 1934713408
        %v5591 = vunpack.c.0.s8 %v5590
        %v5592 = vlaneseq
        %v5593 = vshrl.u32 %v5592, 7
        %v5594 = vsub.s32 %v5591, %v5593
        %v5595 = vrot.slane %v5587, %v5594
        %v5597 = vunpack.c.l.s4 1934713408
        %v5598 = vunpack.c.0.s8 %v5597
        %v5599 = vlaneseq
        %v5600 = vshrl.u32 %v5599, 7
        %v5601 = vsub.s32 %v5598, %v5600
        %v5602 = vrot.slane %v5588, %v5601
        %v5603 = vcombine.low %v5547, %v5563
        %v5604 = vcombine.high %v5547, %v5563
        %v5606 = vunpack.c.l.s4 1934713408
        %v5607 = vunpack.c.0.s8 %v5606
        %v5608 = vlaneseq
        %v5609 = vshrl.u32 %v5608, 7
        %v5610 = vsub.s32 %v5607, %v5609
        %v5611 = vrot.slane %v5603, %v5610
        %v5613 = vunpack.c.l.s4 1934713408
        %v5614 = vunpack.c.0.s8 %v5613
        %v5615 = vlaneseq
        %v5616 = vshrl.u32 %v5615, 7
        %v5617 = vsub.s32 %v5614, %v5616
        %v5618 = vrot.slane %v5604, %v5617
        %v5619 = vcombine.low %v5554, %v5570
        %v5620 = vcombine.high %v5554, %v5570
        %v5622 = vunpack.c.l.s4 1934713408
        %v5623 = vunpack.c.0.s8 %v5622
        %v5624 = vlaneseq
        %v5625 = vshrl.u32 %v5624, 7
        %v5626 = vsub.s32 %v5623, %v5625
        %v5627 = vrot.slane %v5619, %v5626
        %v5629 = vunpack.c.l.s4 1934713408
        %v5630 = vunpack.c.0.s8 %v5629
        %v5631 = vlaneseq
        %v5632 = vshrl.u32 %v5631, 7
        %v5633 = vsub.s32 %v5630, %v5632
        %v5634 = vrot.slane %v5620, %v5633
        %v5635 = vcombine.low %v5579, %v5611
        %v5636 = vcombine.high %v5579, %v5611
        %v5637 = vcombine.low %v5586, %v5618
        %v5638 = vcombine.high %v5586, %v5618
        %v5639 = vcombine.low %v5595, %v5627
        %v5640 = vcombine.high %v5595, %v5627
        %v5641 = vcombine.low %v5602, %v5634
        %v5642 = vcombine.high %v5602, %v5634
        %v5643 = vcombine.low %v4896, %v4992
        %v5644 = vcombine.high %v4896, %v4992
        %v5646 = vunpack.c.l.s4 1983009808
        %v5647 = vunpack.c.0.s8 %v5646
        %v5648 = vlaneseq
        %v5649 = vshrl.u32 %v5648, 7
        %v5650 = vsub.s32 %v5647, %v5649
        %v5651 = vrot.slane %v5643, %v5650
        %v5653 = vunpack.c.l.s4 1983009808
        %v5654 = vunpack.c.0.s8 %v5653
        %v5655 = vlaneseq
        %v5656 = vshrl.u32 %v5655, 7
        %v5657 = vsub.s32 %v5654, %v5656
        %v5658 = vrot.slane %v5644, %v5657
        %v5659 = vcombine.low %v4944, %v5040
        %v5660 = vcombine.high %v4944, %v5040
        %v5662 = vunpack.c.l.s4 1983009808
        %v5663 = vunpack.c.0.s8 %v5662
        %v5664 = vlaneseq
        %v5665 = vshrl.u32 %v5664, 7
        %v5666 = vsub.s32 %v5663, %v5665
        %v5667 = vrot.slane %v5659, %v5666
        %v5669 = vunpack.c.l.s4 1983009808
        %v5670 = vunpack.c.0.s8 %v5669
        %v5671 = vlaneseq
        %v5672 = vshrl.u32 %v5671, 7
        %v5673 = vsub.s32 %v5670, %v5672
        %v5674 = vrot.slane %v5660, %v5673
        %v5675 = vcombine.low %v5088, %v5184
        %v5676 = vcombine.high %v5088, %v5184
        %v5678 = vunpack.c.l.s4 1983009808
        %v5679 = vunpack.c.0.s8 %v5678
        %v5680 = vlaneseq
        %v5681 = vshrl.u32 %v5680, 7
        %v5682 = vsub.s32 %v5679, %v5681
        %v5683 = vrot.slane %v5675, %v5682
        %v5685 = vunpack.c.l.s4 1983009808
        %v5686 = vunpack.c.0.s8 %v5685
        %v5687 = vlaneseq
        %v5688 = vshrl.u32 %v5687, 7
        %v5689 = vsub.s32 %v5686, %v5688
        %v5690 = vrot.slane %v5676, %v5689
        %v5691 = vcombine.low %v5136, %v5232
        %v5692 = vcombine.high %v5136, %v5232
        %v5694 = vunpack.c.l.s4 1983009808
        %v5695 = vunpack.c.0.s8 %v5694
        %v5696 = vlaneseq
        %v5697 = vshrl.u32 %v5696, 7
        %v5698 = vsub.s32 %v5695, %v5697
        %v5699 = vrot.slane %v5691, %v5698
        %v5701 = vunpack.c.l.s4 1983009808
        %v5702 = vunpack.c.0.s8 %v5701
        %v5703 = vlaneseq
        %v5704 = vshrl.u32 %v5703, 7
        %v5705 = vsub.s32 %v5702, %v5704
        %v5706 = vrot.slane %v5692, %v5705
        %v5707 = vcombine.low %v5651, %v5667
        %v5708 = vcombine.high %v5651, %v5667
        %v5710 = vunpack.c.l.s4 1934713408
        %v5711 = vunpack.c.0.s8 %v5710
        %v5712 = vlaneseq
        %v5713 = vshrl.u32 %v5712, 7
        %v5714 = vsub.s32 %v5711, %v5713
        %v5715 = vrot.slane %v5707, %v5714
        %v5717 = vunpack.c.l.s4 1934713408
        %v5718 = vunpack.c.0.s8 %v5717
        %v5719 = vlaneseq
        %v5720 = vshrl.u32 %v5719, 7
        %v5721 = vsub.s32 %v5718, %v5720
        %v5722 = vrot.slane %v5708, %v5721
        %v5723 = vcombine.low %v5658, %v5674
        %v5724 = vcombine.high %v5658, %v5674
        %v5726 = vunpack.c.l.s4 1934713408
        %v5727 = vunpack.c.0.s8 %v5726
        %v5728 = vlaneseq
        %v5729 = vshrl.u32 %v5728, 7
        %v5730 = vsub.s32 %v5727, %v5729
        %v5731 = vrot.slane %v5723, %v5730
        %v5733 = vunpack.c.l.s4 1934713408
        %v5734 = vunpack.c.0.s8 %v5733
        %v5735 = vlaneseq
        %v5736 = vshrl.u32 %v5735, 7
        %v5737 = vsub.s32 %v5734, %v5736
        %v5738 = vrot.slane %v5724, %v5737
        %v5739 = vcombine.low %v5683, %v5699
        %v5740 = vcombine.high %v5683, %v5699
        %v5742 = vunpack.c.l.s4 1934713408
        %v5743 = vunpack.c.0.s8 %v5742
        %v5744 = vlaneseq
        %v5745 = vshrl.u32 %v5744, 7
        %v5746 = vsub.s32 %v5743, %v5745
        %v5747 = vrot.slane %v5739, %v5746
        %v5749 = vunpack.c.l.s4 1934713408
        %v5750 = vunpack.c.0.s8 %v5749
        %v5751 = vlaneseq
        %v5752 = vshrl.u32 %v5751, 7
        %v5753 = vsub.s32 %v5750, %v5752
        %v5754 = vrot.slane %v5740, %v5753
        %v5755 = vcombine.low %v5690, %v5706
        %v5756 = vcombine.high %v5690, %v5706
        %v5758 = vunpack.c.l.s4 1934713408
        %v5759 = vunpack.c.0.s8 %v5758
        %v5760 = vlaneseq
        %v5761 = vshrl.u32 %v5760, 7
        %v5762 = vsub.s32 %v5759, %v5761
        %v5763 = vrot.slane %v5755, %v5762
        %v5765 = vunpack.c.l.s4 1934713408
        %v5766 = vunpack.c.0.s8 %v5765
        %v5767 = vlaneseq
        %v5768 = vshrl.u32 %v5767, 7
        %v5769 = vsub.s32 %v5766, %v5768
        %v5770 = vrot.slane %v5756, %v5769
        %v5771 = vcombine.low %v5715, %v5747
        %v5772 = vcombine.high %v5715, %v5747
        %v5773 = vcombine.low %v5722, %v5754
        %v5774 = vcombine.high %v5722, %v5754
        %v5775 = vcombine.low %v5731, %v5763
        %v5776 = vcombine.high %v5731, %v5763
        %v5777 = vcombine.low %v5738, %v5770
        %v5778 = vcombine.high %v5738, %v5770
        %v5781 = vunpack.c.l.b16 %v953
        %v5782 = vunpack.c.l.b16 %v954
        %v5783 = vpack.c.b16 %v5782, %v5781
        %v5786 = vsel %vm1842, %v2195, 0
        %5788 = vmatprep.subr.bf16.mxu0 0
        %5789 = vmatpush1.bf16.msra.mxu0 0
        %5790 = vmatprep.subr.bf16.mxu0 0
        %5791 = vmatpush1.bf16.msra.mxu0 0
        %5792 = vmatprep.subr.bf16.mxu0 0
        %5793 = vmatpush1.bf16.msra.mxu0 0
        %5794 = vmatprep.subr.bf16.mxu0 0
        %5795 = vmatpush1.bf16.msra.mxu0 0
        %5796 = vmatprep.subr.bf16.mxu0 0
        %5797 = vmatpush1.bf16.msra.mxu0 0
        %5798 = vmatprep.subr.bf16.mxu0 0
        %5799 = vmatpush1.bf16.msra.mxu0 0
        %5800 = vmatprep.subr.bf16.mxu0 0
        %5801 = vmatpush1.bf16.msra.mxu0 0
        %5802 = vmatprep.subr.bf16.mxu0 0
        %5803 = vmatpush1.bf16.msra.mxu0 %v5783
        %5804 = vmatprep.subr.bf16.mxu0 0
        %5805 = vmatpush2.bf16.msra.mxu0 0
        %5806 = vmatprep.subr.bf16.mxu0 0
        %5807 = vmatpush2.bf16.msra.mxu0 0
        %5808 = vmatprep.subr.bf16.mxu0 0
        %5809 = vmatpush2.bf16.msra.mxu0 0
        %5810 = vmatprep.subr.bf16.mxu0 0
        %5811 = vmatpush2.bf16.msra.mxu0 0
        %5812 = vmatprep.subr.bf16.mxu0 0
        %5813 = vmatpush2.bf16.msra.mxu0 0
        %5814 = vmatprep.subr.bf16.mxu0 0
        %5815 = vmatpush2.bf16.msra.mxu0 0
        %5816 = vmatprep.subr.bf16.mxu0 0
        %5817 = vmatpush2.bf16.msra.mxu0 0
        %5818 = vmatprep.subr.bf16.mxu0 0
        %5819 = vmatpush2.bf16.msra.mxu0 0
        %5820 = vmatprep.mubr.bf16.mxu0 0
        %5821 = vmatmul.mubr.bf16.gmra.mxu0 %v5786
        %v5822 = vpop.f32.mrf.mxu0
        %v5823 = vadd.f32 %v5363, %v5822
        %v5824 = vpop.f32.mrf.mxu0
        %v5825 = vpop.f32.mrf.mxu0
        %v5826 = vadd.f32 %v5499, %v5825
        %v5827 = vpop.f32.mrf.mxu0
        %5828 = vdwg.mxu0
        %v5831 = vunpack.c.l.b16 %v955
        %v5832 = vunpack.c.l.b16 %v956
        %v5833 = vpack.c.b16 %v5832, %v5831
        %v5836 = vsel %vm1842, %v2196, 0
        %5838 = vmatprep.subr.bf16.mxu0 0
        %5839 = vmatpush1.bf16.msra.mxu0 0
        %5840 = vmatprep.subr.bf16.mxu0 0
        %5841 = vmatpush1.bf16.msra.mxu0 0
        %5842 = vmatprep.subr.bf16.mxu0 0
        %5843 = vmatpush1.bf16.msra.mxu0 0
        %5844 = vmatprep.subr.bf16.mxu0 0
        %5845 = vmatpush1.bf16.msra.mxu0 0
        %5846 = vmatprep.subr.bf16.mxu0 0
        %5847 = vmatpush1.bf16.msra.mxu0 0
        %5848 = vmatprep.subr.bf16.mxu0 0
        %5849 = vmatpush1.bf16.msra.mxu0 0
        %5850 = vmatprep.subr.bf16.mxu0 0
        %5851 = vmatpush1.bf16.msra.mxu0 0
        %5852 = vmatprep.subr.bf16.mxu0 0
        %5853 = vmatpush1.bf16.msra.mxu0 %v5833
        %5854 = vmatprep.subr.bf16.mxu0 0
        %5855 = vmatpush2.bf16.msra.mxu0 0
        %5856 = vmatprep.subr.bf16.mxu0 0
        %5857 = vmatpush2.bf16.msra.mxu0 0
        %5858 = vmatprep.subr.bf16.mxu0 0
        %5859 = vmatpush2.bf16.msra.mxu0 0
        %5860 = vmatprep.subr.bf16.mxu0 0
        %5861 = vmatpush2.bf16.msra.mxu0 0
        %5862 = vmatprep.subr.bf16.mxu0 0
        %5863 = vmatpush2.bf16.msra.mxu0 0
        %5864 = vmatprep.subr.bf16.mxu0 0
        %5865 = vmatpush2.bf16.msra.mxu0 0
        %5866 = vmatprep.subr.bf16.mxu0 0
        %5867 = vmatpush2.bf16.msra.mxu0 0
        %5868 = vmatprep.subr.bf16.mxu0 0
        %5869 = vmatpush2.bf16.msra.mxu0 0
        %5870 = vmatprep.mubr.bf16.mxu0 0
        %5871 = vmatmul.mubr.bf16.gmra.mxu0 %v5836
        %v5872 = vpop.f32.mrf.mxu0
        %v5873 = vadd.f32 %v5364, %v5872
        %v5874 = vpop.f32.mrf.mxu0
        %v5875 = vpop.f32.mrf.mxu0
        %v5876 = vadd.f32 %v5500, %v5875
        %v5877 = vpop.f32.mrf.mxu0
        %5878 = vdwg.mxu0
        %v5881 = vunpack.c.l.b16 %v957
        %v5882 = vunpack.c.l.b16 %v958
        %v5883 = vpack.c.b16 %v5882, %v5881
        %v5886 = vsel %vm1842, %v2197, 0
        %5888 = vmatprep.subr.bf16.mxu0 0
        %5889 = vmatpush1.bf16.msra.mxu0 0
        %5890 = vmatprep.subr.bf16.mxu0 0
        %5891 = vmatpush1.bf16.msra.mxu0 0
        %5892 = vmatprep.subr.bf16.mxu0 0
        %5893 = vmatpush1.bf16.msra.mxu0 0
        %5894 = vmatprep.subr.bf16.mxu0 0
        %5895 = vmatpush1.bf16.msra.mxu0 0
        %5896 = vmatprep.subr.bf16.mxu0 0
        %5897 = vmatpush1.bf16.msra.mxu0 0
        %5898 = vmatprep.subr.bf16.mxu0 0
        %5899 = vmatpush1.bf16.msra.mxu0 0
        %5900 = vmatprep.subr.bf16.mxu0 0
        %5901 = vmatpush1.bf16.msra.mxu0 0
        %5902 = vmatprep.subr.bf16.mxu0 0
        %5903 = vmatpush1.bf16.msra.mxu0 %v5883
        %5904 = vmatprep.subr.bf16.mxu0 0
        %5905 = vmatpush2.bf16.msra.mxu0 0
        %5906 = vmatprep.subr.bf16.mxu0 0
        %5907 = vmatpush2.bf16.msra.mxu0 0
        %5908 = vmatprep.subr.bf16.mxu0 0
        %5909 = vmatpush2.bf16.msra.mxu0 0
        %5910 = vmatprep.subr.bf16.mxu0 0
        %5911 = vmatpush2.bf16.msra.mxu0 0
        %5912 = vmatprep.subr.bf16.mxu0 0
        %5913 = vmatpush2.bf16.msra.mxu0 0
        %5914 = vmatprep.subr.bf16.mxu0 0
        %5915 = vmatpush2.bf16.msra.mxu0 0
        %5916 = vmatprep.subr.bf16.mxu0 0
        %5917 = vmatpush2.bf16.msra.mxu0 0
        %5918 = vmatprep.subr.bf16.mxu0 0
        %5919 = vmatpush2.bf16.msra.mxu0 0
        %5920 = vmatprep.mubr.bf16.mxu0 0
        %5921 = vmatmul.mubr.bf16.gmra.mxu0 %v5886
        %v5922 = vpop.f32.mrf.mxu0
        %v5923 = vadd.f32 %v5365, %v5922
        %v5924 = vpop.f32.mrf.mxu0
        %v5925 = vpop.f32.mrf.mxu0
        %v5926 = vadd.f32 %v5501, %v5925
        %v5927 = vpop.f32.mrf.mxu0
        %5928 = vdwg.mxu0
        %v5931 = vunpack.c.l.b16 %v959
        %v5932 = vunpack.c.l.b16 %v960
        %v5933 = vpack.c.b16 %v5932, %v5931
        %v5936 = vsel %vm1842, %v2198, 0
        %5938 = vmatprep.subr.bf16.mxu0 0
        %5939 = vmatpush1.bf16.msra.mxu0 0
        %5940 = vmatprep.subr.bf16.mxu0 0
        %5941 = vmatpush1.bf16.msra.mxu0 0
        %5942 = vmatprep.subr.bf16.mxu0 0
        %5943 = vmatpush1.bf16.msra.mxu0 0
        %5944 = vmatprep.subr.bf16.mxu0 0
        %5945 = vmatpush1.bf16.msra.mxu0 0
        %5946 = vmatprep.subr.bf16.mxu0 0
        %5947 = vmatpush1.bf16.msra.mxu0 0
        %5948 = vmatprep.subr.bf16.mxu0 0
        %5949 = vmatpush1.bf16.msra.mxu0 0
        %5950 = vmatprep.subr.bf16.mxu0 0
        %5951 = vmatpush1.bf16.msra.mxu0 0
        %5952 = vmatprep.subr.bf16.mxu0 0
        %5953 = vmatpush1.bf16.msra.mxu0 %v5933
        %5954 = vmatprep.subr.bf16.mxu0 0
        %5955 = vmatpush2.bf16.msra.mxu0 0
        %5956 = vmatprep.subr.bf16.mxu0 0
        %5957 = vmatpush2.bf16.msra.mxu0 0
        %5958 = vmatprep.subr.bf16.mxu0 0
        %5959 = vmatpush2.bf16.msra.mxu0 0
        %5960 = vmatprep.subr.bf16.mxu0 0
        %5961 = vmatpush2.bf16.msra.mxu0 0
        %5962 = vmatprep.subr.bf16.mxu0 0
        %5963 = vmatpush2.bf16.msra.mxu0 0
        %5964 = vmatprep.subr.bf16.mxu0 0
        %5965 = vmatpush2.bf16.msra.mxu0 0
        %5966 = vmatprep.subr.bf16.mxu0 0
        %5967 = vmatpush2.bf16.msra.mxu0 0
        %5968 = vmatprep.subr.bf16.mxu0 0
        %5969 = vmatpush2.bf16.msra.mxu0 0
        %5970 = vmatprep.mubr.bf16.mxu0 0
        %5971 = vmatmul.mubr.bf16.gmra.mxu0 %v5936
        %v5972 = vpop.f32.mrf.mxu0
        %v5973 = vadd.f32 %v5366, %v5972
        %v5974 = vpop.f32.mrf.mxu0
        %v5975 = vpop.f32.mrf.mxu0
        %v5976 = vadd.f32 %v5502, %v5975
        %v5977 = vpop.f32.mrf.mxu0
        %5978 = vdwg.mxu0
        %v5981 = vunpack.c.l.b16 %v961
        %v5982 = vunpack.c.l.b16 %v962
        %v5983 = vpack.c.b16 %v5982, %v5981
        %v5986 = vsel %vm1842, %v2199, 0
        %5988 = vmatprep.subr.bf16.mxu0 0
        %5989 = vmatpush1.bf16.msra.mxu0 0
        %5990 = vmatprep.subr.bf16.mxu0 0
        %5991 = vmatpush1.bf16.msra.mxu0 0
        %5992 = vmatprep.subr.bf16.mxu0 0
        %5993 = vmatpush1.bf16.msra.mxu0 0
        %5994 = vmatprep.subr.bf16.mxu0 0
        %5995 = vmatpush1.bf16.msra.mxu0 0
        %5996 = vmatprep.subr.bf16.mxu0 0
        %5997 = vmatpush1.bf16.msra.mxu0 0
        %5998 = vmatprep.subr.bf16.mxu0 0
        %5999 = vmatpush1.bf16.msra.mxu0 0
        %6000 = vmatprep.subr.bf16.mxu0 0
        %6001 = vmatpush1.bf16.msra.mxu0 0
        %6002 = vmatprep.subr.bf16.mxu0 0
        %6003 = vmatpush1.bf16.msra.mxu0 %v5983
        %6004 = vmatprep.subr.bf16.mxu0 0
        %6005 = vmatpush2.bf16.msra.mxu0 0
        %6006 = vmatprep.subr.bf16.mxu0 0
        %6007 = vmatpush2.bf16.msra.mxu0 0
        %6008 = vmatprep.subr.bf16.mxu0 0
        %6009 = vmatpush2.bf16.msra.mxu0 0
        %6010 = vmatprep.subr.bf16.mxu0 0
        %6011 = vmatpush2.bf16.msra.mxu0 0
        %6012 = vmatprep.subr.bf16.mxu0 0
        %6013 = vmatpush2.bf16.msra.mxu0 0
        %6014 = vmatprep.subr.bf16.mxu0 0
        %6015 = vmatpush2.bf16.msra.mxu0 0
        %6016 = vmatprep.subr.bf16.mxu0 0
        %6017 = vmatpush2.bf16.msra.mxu0 0
        %6018 = vmatprep.subr.bf16.mxu0 0
        %6019 = vmatpush2.bf16.msra.mxu0 0
        %6020 = vmatprep.mubr.bf16.mxu0 0
        %6021 = vmatmul.mubr.bf16.gmra.mxu0 %v5986
        %v6022 = vpop.f32.mrf.mxu0
        %v6023 = vadd.f32 %v5367, %v6022
        %v6024 = vpop.f32.mrf.mxu0
        %v6025 = vpop.f32.mrf.mxu0
        %v6026 = vadd.f32 %v5503, %v6025
        %v6027 = vpop.f32.mrf.mxu0
        %6028 = vdwg.mxu0
        %v6031 = vunpack.c.l.b16 %v963
        %v6032 = vunpack.c.l.b16 %v964
        %v6033 = vpack.c.b16 %v6032, %v6031
        %v6036 = vsel %vm1842, %v2200, 0
        %6038 = vmatprep.subr.bf16.mxu0 0
        %6039 = vmatpush1.bf16.msra.mxu0 0
        %6040 = vmatprep.subr.bf16.mxu0 0
        %6041 = vmatpush1.bf16.msra.mxu0 0
        %6042 = vmatprep.subr.bf16.mxu0 0
        %6043 = vmatpush1.bf16.msra.mxu0 0
        %6044 = vmatprep.subr.bf16.mxu0 0
        %6045 = vmatpush1.bf16.msra.mxu0 0
        %6046 = vmatprep.subr.bf16.mxu0 0
        %6047 = vmatpush1.bf16.msra.mxu0 0
        %6048 = vmatprep.subr.bf16.mxu0 0
        %6049 = vmatpush1.bf16.msra.mxu0 0
        %6050 = vmatprep.subr.bf16.mxu0 0
        %6051 = vmatpush1.bf16.msra.mxu0 0
        %6052 = vmatprep.subr.bf16.mxu0 0
        %6053 = vmatpush1.bf16.msra.mxu0 %v6033
        %6054 = vmatprep.subr.bf16.mxu0 0
        %6055 = vmatpush2.bf16.msra.mxu0 0
        %6056 = vmatprep.subr.bf16.mxu0 0
        %6057 = vmatpush2.bf16.msra.mxu0 0
        %6058 = vmatprep.subr.bf16.mxu0 0
        %6059 = vmatpush2.bf16.msra.mxu0 0
        %6060 = vmatprep.subr.bf16.mxu0 0
        %6061 = vmatpush2.bf16.msra.mxu0 0
        %6062 = vmatprep.subr.bf16.mxu0 0
        %6063 = vmatpush2.bf16.msra.mxu0 0
        %6064 = vmatprep.subr.bf16.mxu0 0
        %6065 = vmatpush2.bf16.msra.mxu0 0
        %6066 = vmatprep.subr.bf16.mxu0 0
        %6067 = vmatpush2.bf16.msra.mxu0 0
        %6068 = vmatprep.subr.bf16.mxu0 0
        %6069 = vmatpush2.bf16.msra.mxu0 0
        %6070 = vmatprep.mubr.bf16.mxu0 0
        %6071 = vmatmul.mubr.bf16.gmra.mxu0 %v6036
        %v6072 = vpop.f32.mrf.mxu0
        %v6073 = vadd.f32 %v5368, %v6072
        %v6074 = vpop.f32.mrf.mxu0
        %v6075 = vpop.f32.mrf.mxu0
        %v6076 = vadd.f32 %v5504, %v6075
        %v6077 = vpop.f32.mrf.mxu0
        %6078 = vdwg.mxu0
        %v6081 = vunpack.c.l.b16 %v965
        %v6082 = vunpack.c.l.b16 %v966
        %v6083 = vpack.c.b16 %v6082, %v6081
        %v6086 = vsel %vm1842, %v2201, 0
        %6088 = vmatprep.subr.bf16.mxu0 0
        %6089 = vmatpush1.bf16.msra.mxu0 0
        %6090 = vmatprep.subr.bf16.mxu0 0
        %6091 = vmatpush1.bf16.msra.mxu0 0
        %6092 = vmatprep.subr.bf16.mxu0 0
        %6093 = vmatpush1.bf16.msra.mxu0 0
        %6094 = vmatprep.subr.bf16.mxu0 0
        %6095 = vmatpush1.bf16.msra.mxu0 0
        %6096 = vmatprep.subr.bf16.mxu0 0
        %6097 = vmatpush1.bf16.msra.mxu0 0
        %6098 = vmatprep.subr.bf16.mxu0 0
        %6099 = vmatpush1.bf16.msra.mxu0 0
        %6100 = vmatprep.subr.bf16.mxu0 0
        %6101 = vmatpush1.bf16.msra.mxu0 0
        %6102 = vmatprep.subr.bf16.mxu0 0
        %6103 = vmatpush1.bf16.msra.mxu0 %v6083
        %6104 = vmatprep.subr.bf16.mxu0 0
        %6105 = vmatpush2.bf16.msra.mxu0 0
        %6106 = vmatprep.subr.bf16.mxu0 0
        %6107 = vmatpush2.bf16.msra.mxu0 0
        %6108 = vmatprep.subr.bf16.mxu0 0
        %6109 = vmatpush2.bf16.msra.mxu0 0
        %6110 = vmatprep.subr.bf16.mxu0 0
        %6111 = vmatpush2.bf16.msra.mxu0 0
        %6112 = vmatprep.subr.bf16.mxu0 0
        %6113 = vmatpush2.bf16.msra.mxu0 0
        %6114 = vmatprep.subr.bf16.mxu0 0
        %6115 = vmatpush2.bf16.msra.mxu0 0
        %6116 = vmatprep.subr.bf16.mxu0 0
        %6117 = vmatpush2.bf16.msra.mxu0 0
        %6118 = vmatprep.subr.bf16.mxu0 0
        %6119 = vmatpush2.bf16.msra.mxu0 0
        %6120 = vmatprep.mubr.bf16.mxu0 0
        %6121 = vmatmul.mubr.bf16.gmra.mxu0 %v6086
        %v6122 = vpop.f32.mrf.mxu0
        %v6123 = vadd.f32 %v5369, %v6122
        %v6124 = vpop.f32.mrf.mxu0
        %v6125 = vpop.f32.mrf.mxu0
        %v6126 = vadd.f32 %v5505, %v6125
        %v6127 = vpop.f32.mrf.mxu0
        %6128 = vdwg.mxu0
        %v6131 = vunpack.c.l.b16 %v967
        %v6132 = vunpack.c.l.b16 %v968
        %v6133 = vpack.c.b16 %v6132, %v6131
        %v6136 = vsel %vm1842, %v2202, 0
        %6138 = vmatprep.subr.bf16.mxu0 0
        %6139 = vmatpush1.bf16.msra.mxu0 0
        %6140 = vmatprep.subr.bf16.mxu0 0
        %6141 = vmatpush1.bf16.msra.mxu0 0
        %6142 = vmatprep.subr.bf16.mxu0 0
        %6143 = vmatpush1.bf16.msra.mxu0 0
        %6144 = vmatprep.subr.bf16.mxu0 0
        %6145 = vmatpush1.bf16.msra.mxu0 0
        %6146 = vmatprep.subr.bf16.mxu0 0
        %6147 = vmatpush1.bf16.msra.mxu0 0
        %6148 = vmatprep.subr.bf16.mxu0 0
        %6149 = vmatpush1.bf16.msra.mxu0 0
        %6150 = vmatprep.subr.bf16.mxu0 0
        %6151 = vmatpush1.bf16.msra.mxu0 0
        %6152 = vmatprep.subr.bf16.mxu0 0
        %6153 = vmatpush1.bf16.msra.mxu0 %v6133
        %6154 = vmatprep.subr.bf16.mxu0 0
        %6155 = vmatpush2.bf16.msra.mxu0 0
        %6156 = vmatprep.subr.bf16.mxu0 0
        %6157 = vmatpush2.bf16.msra.mxu0 0
        %6158 = vmatprep.subr.bf16.mxu0 0
        %6159 = vmatpush2.bf16.msra.mxu0 0
        %6160 = vmatprep.subr.bf16.mxu0 0
        %6161 = vmatpush2.bf16.msra.mxu0 0
        %6162 = vmatprep.subr.bf16.mxu0 0
        %6163 = vmatpush2.bf16.msra.mxu0 0
        %6164 = vmatprep.subr.bf16.mxu0 0
        %6165 = vmatpush2.bf16.msra.mxu0 0
        %6166 = vmatprep.subr.bf16.mxu0 0
        %6167 = vmatpush2.bf16.msra.mxu0 0
        %6168 = vmatprep.subr.bf16.mxu0 0
        %6169 = vmatpush2.bf16.msra.mxu0 0
        %6170 = vmatprep.mubr.bf16.mxu0 0
        %6171 = vmatmul.mubr.bf16.gmra.mxu0 %v6136
        %v6172 = vpop.f32.mrf.mxu0
        %v6173 = vadd.f32 %v5370, %v6172
        %v6174 = vpop.f32.mrf.mxu0
        %v6175 = vpop.f32.mrf.mxu0
        %v6176 = vadd.f32 %v5506, %v6175
        %v6177 = vpop.f32.mrf.mxu0
        %6178 = vdwg.mxu0
        %v6181 = vunpack.c.l.b16 %v969
        %v6182 = vunpack.c.l.b16 %v970
        %v6183 = vpack.c.b16 %v6182, %v6181
        %v6186 = vsel %vm1842, %v2203, 0
        %6188 = vmatprep.subr.bf16.mxu0 0
        %6189 = vmatpush1.bf16.msra.mxu0 0
        %6190 = vmatprep.subr.bf16.mxu0 0
        %6191 = vmatpush1.bf16.msra.mxu0 0
        %6192 = vmatprep.subr.bf16.mxu0 0
        %6193 = vmatpush1.bf16.msra.mxu0 0
        %6194 = vmatprep.subr.bf16.mxu0 0
        %6195 = vmatpush1.bf16.msra.mxu0 0
        %6196 = vmatprep.subr.bf16.mxu0 0
        %6197 = vmatpush1.bf16.msra.mxu0 0
        %6198 = vmatprep.subr.bf16.mxu0 0
        %6199 = vmatpush1.bf16.msra.mxu0 0
        %6200 = vmatprep.subr.bf16.mxu0 0
        %6201 = vmatpush1.bf16.msra.mxu0 0
        %6202 = vmatprep.subr.bf16.mxu0 0
        %6203 = vmatpush1.bf16.msra.mxu0 %v6183
        %6204 = vmatprep.subr.bf16.mxu0 0
        %6205 = vmatpush2.bf16.msra.mxu0 0
        %6206 = vmatprep.subr.bf16.mxu0 0
        %6207 = vmatpush2.bf16.msra.mxu0 0
        %6208 = vmatprep.subr.bf16.mxu0 0
        %6209 = vmatpush2.bf16.msra.mxu0 0
        %6210 = vmatprep.subr.bf16.mxu0 0
        %6211 = vmatpush2.bf16.msra.mxu0 0
        %6212 = vmatprep.subr.bf16.mxu0 0
        %6213 = vmatpush2.bf16.msra.mxu0 0
        %6214 = vmatprep.subr.bf16.mxu0 0
        %6215 = vmatpush2.bf16.msra.mxu0 0
        %6216 = vmatprep.subr.bf16.mxu0 0
        %6217 = vmatpush2.bf16.msra.mxu0 0
        %6218 = vmatprep.subr.bf16.mxu0 0
        %6219 = vmatpush2.bf16.msra.mxu0 0
        %6220 = vmatprep.mubr.bf16.mxu0 0
        %6221 = vmatmul.mubr.bf16.gmra.mxu0 %v6186
        %v6222 = vpop.f32.mrf.mxu0
        %v6223 = vadd.f32 %v5635, %v6222
        %v6224 = vpop.f32.mrf.mxu0
        %v6225 = vpop.f32.mrf.mxu0
        %v6226 = vadd.f32 %v5771, %v6225
        %v6227 = vpop.f32.mrf.mxu0
        %6228 = vdwg.mxu0
        %v6231 = vunpack.c.l.b16 %v971
        %v6232 = vunpack.c.l.b16 %v972
        %v6233 = vpack.c.b16 %v6232, %v6231
        %v6236 = vsel %vm1842, %v2204, 0
        %6238 = vmatprep.subr.bf16.mxu0 0
        %6239 = vmatpush1.bf16.msra.mxu0 0
        %6240 = vmatprep.subr.bf16.mxu0 0
        %6241 = vmatpush1.bf16.msra.mxu0 0
        %6242 = vmatprep.subr.bf16.mxu0 0
        %6243 = vmatpush1.bf16.msra.mxu0 0
        %6244 = vmatprep.subr.bf16.mxu0 0
        %6245 = vmatpush1.bf16.msra.mxu0 0
        %6246 = vmatprep.subr.bf16.mxu0 0
        %6247 = vmatpush1.bf16.msra.mxu0 0
        %6248 = vmatprep.subr.bf16.mxu0 0
        %6249 = vmatpush1.bf16.msra.mxu0 0
        %6250 = vmatprep.subr.bf16.mxu0 0
        %6251 = vmatpush1.bf16.msra.mxu0 0
        %6252 = vmatprep.subr.bf16.mxu0 0
        %6253 = vmatpush1.bf16.msra.mxu0 %v6233
        %6254 = vmatprep.subr.bf16.mxu0 0
        %6255 = vmatpush2.bf16.msra.mxu0 0
        %6256 = vmatprep.subr.bf16.mxu0 0
        %6257 = vmatpush2.bf16.msra.mxu0 0
        %6258 = vmatprep.subr.bf16.mxu0 0
        %6259 = vmatpush2.bf16.msra.mxu0 0
        %6260 = vmatprep.subr.bf16.mxu0 0
        %6261 = vmatpush2.bf16.msra.mxu0 0
        %6262 = vmatprep.subr.bf16.mxu0 0
        %6263 = vmatpush2.bf16.msra.mxu0 0
        %6264 = vmatprep.subr.bf16.mxu0 0
        %6265 = vmatpush2.bf16.msra.mxu0 0
        %6266 = vmatprep.subr.bf16.mxu0 0
        %6267 = vmatpush2.bf16.msra.mxu0 0
        %6268 = vmatprep.subr.bf16.mxu0 0
        %6269 = vmatpush2.bf16.msra.mxu0 0
        %6270 = vmatprep.mubr.bf16.mxu0 0
        %6271 = vmatmul.mubr.bf16.gmra.mxu0 %v6236
        %v6272 = vpop.f32.mrf.mxu0
        %v6273 = vadd.f32 %v5636, %v6272
        %v6274 = vpop.f32.mrf.mxu0
        %v6275 = vpop.f32.mrf.mxu0
        %v6276 = vadd.f32 %v5772, %v6275
        %v6277 = vpop.f32.mrf.mxu0
        %6278 = vdwg.mxu0
        %v6281 = vunpack.c.l.b16 %v973
        %v6282 = vunpack.c.l.b16 %v974
        %v6283 = vpack.c.b16 %v6282, %v6281
        %v6286 = vsel %vm1842, %v2205, 0
        %6288 = vmatprep.subr.bf16.mxu0 0
        %6289 = vmatpush1.bf16.msra.mxu0 0
        %6290 = vmatprep.subr.bf16.mxu0 0
        %6291 = vmatpush1.bf16.msra.mxu0 0
        %6292 = vmatprep.subr.bf16.mxu0 0
        %6293 = vmatpush1.bf16.msra.mxu0 0
        %6294 = vmatprep.subr.bf16.mxu0 0
        %6295 = vmatpush1.bf16.msra.mxu0 0
        %6296 = vmatprep.subr.bf16.mxu0 0
        %6297 = vmatpush1.bf16.msra.mxu0 0
        %6298 = vmatprep.subr.bf16.mxu0 0
        %6299 = vmatpush1.bf16.msra.mxu0 0
        %6300 = vmatprep.subr.bf16.mxu0 0
        %6301 = vmatpush1.bf16.msra.mxu0 0
        %6302 = vmatprep.subr.bf16.mxu0 0
        %6303 = vmatpush1.bf16.msra.mxu0 %v6283
        %6304 = vmatprep.subr.bf16.mxu0 0
        %6305 = vmatpush2.bf16.msra.mxu0 0
        %6306 = vmatprep.subr.bf16.mxu0 0
        %6307 = vmatpush2.bf16.msra.mxu0 0
        %6308 = vmatprep.subr.bf16.mxu0 0
        %6309 = vmatpush2.bf16.msra.mxu0 0
        %6310 = vmatprep.subr.bf16.mxu0 0
        %6311 = vmatpush2.bf16.msra.mxu0 0
        %6312 = vmatprep.subr.bf16.mxu0 0
        %6313 = vmatpush2.bf16.msra.mxu0 0
        %6314 = vmatprep.subr.bf16.mxu0 0
        %6315 = vmatpush2.bf16.msra.mxu0 0
        %6316 = vmatprep.subr.bf16.mxu0 0
        %6317 = vmatpush2.bf16.msra.mxu0 0
        %6318 = vmatprep.subr.bf16.mxu0 0
        %6319 = vmatpush2.bf16.msra.mxu0 0
        %6320 = vmatprep.mubr.bf16.mxu0 0
        %6321 = vmatmul.mubr.bf16.gmra.mxu0 %v6286
        %v6322 = vpop.f32.mrf.mxu0
        %v6323 = vadd.f32 %v5637, %v6322
        %v6324 = vpop.f32.mrf.mxu0
        %v6325 = vpop.f32.mrf.mxu0
        %v6326 = vadd.f32 %v5773, %v6325
        %v6327 = vpop.f32.mrf.mxu0
        %6328 = vdwg.mxu0
        %v6331 = vunpack.c.l.b16 %v975
        %v6332 = vunpack.c.l.b16 %v976
        %v6333 = vpack.c.b16 %v6332, %v6331
        %v6336 = vsel %vm1842, %v2206, 0
        %6338 = vmatprep.subr.bf16.mxu0 0
        %6339 = vmatpush1.bf16.msra.mxu0 0
        %6340 = vmatprep.subr.bf16.mxu0 0
        %6341 = vmatpush1.bf16.msra.mxu0 0
        %6342 = vmatprep.subr.bf16.mxu0 0
        %6343 = vmatpush1.bf16.msra.mxu0 0
        %6344 = vmatprep.subr.bf16.mxu0 0
        %6345 = vmatpush1.bf16.msra.mxu0 0
        %6346 = vmatprep.subr.bf16.mxu0 0
        %6347 = vmatpush1.bf16.msra.mxu0 0
        %6348 = vmatprep.subr.bf16.mxu0 0
        %6349 = vmatpush1.bf16.msra.mxu0 0
        %6350 = vmatprep.subr.bf16.mxu0 0
        %6351 = vmatpush1.bf16.msra.mxu0 0
        %6352 = vmatprep.subr.bf16.mxu0 0
        %6353 = vmatpush1.bf16.msra.mxu0 %v6333
        %6354 = vmatprep.subr.bf16.mxu0 0
        %6355 = vmatpush2.bf16.msra.mxu0 0
        %6356 = vmatprep.subr.bf16.mxu0 0
        %6357 = vmatpush2.bf16.msra.mxu0 0
        %6358 = vmatprep.subr.bf16.mxu0 0
        %6359 = vmatpush2.bf16.msra.mxu0 0
        %6360 = vmatprep.subr.bf16.mxu0 0
        %6361 = vmatpush2.bf16.msra.mxu0 0
        %6362 = vmatprep.subr.bf16.mxu0 0
        %6363 = vmatpush2.bf16.msra.mxu0 0
        %6364 = vmatprep.subr.bf16.mxu0 0
        %6365 = vmatpush2.bf16.msra.mxu0 0
        %6366 = vmatprep.subr.bf16.mxu0 0
        %6367 = vmatpush2.bf16.msra.mxu0 0
        %6368 = vmatprep.subr.bf16.mxu0 0
        %6369 = vmatpush2.bf16.msra.mxu0 0
        %6370 = vmatprep.mubr.bf16.mxu0 0
        %6371 = vmatmul.mubr.bf16.gmra.mxu0 %v6336
        %v6372 = vpop.f32.mrf.mxu0
        %v6373 = vadd.f32 %v5638, %v6372
        %v6374 = vpop.f32.mrf.mxu0
        %v6375 = vpop.f32.mrf.mxu0
        %v6376 = vadd.f32 %v5774, %v6375
        %v6377 = vpop.f32.mrf.mxu0
        %6378 = vdwg.mxu0
        %v6381 = vunpack.c.l.b16 %v977
        %v6382 = vunpack.c.l.b16 %v978
        %v6383 = vpack.c.b16 %v6382, %v6381
        %v6386 = vsel %vm1842, %v2207, 0
        %6388 = vmatprep.subr.bf16.mxu0 0
        %6389 = vmatpush1.bf16.msra.mxu0 0
        %6390 = vmatprep.subr.bf16.mxu0 0
        %6391 = vmatpush1.bf16.msra.mxu0 0
        %6392 = vmatprep.subr.bf16.mxu0 0
        %6393 = vmatpush1.bf16.msra.mxu0 0
        %6394 = vmatprep.subr.bf16.mxu0 0
        %6395 = vmatpush1.bf16.msra.mxu0 0
        %6396 = vmatprep.subr.bf16.mxu0 0
        %6397 = vmatpush1.bf16.msra.mxu0 0
        %6398 = vmatprep.subr.bf16.mxu0 0
        %6399 = vmatpush1.bf16.msra.mxu0 0
        %6400 = vmatprep.subr.bf16.mxu0 0
        %6401 = vmatpush1.bf16.msra.mxu0 0
        %6402 = vmatprep.subr.bf16.mxu0 0
        %6403 = vmatpush1.bf16.msra.mxu0 %v6383
        %6404 = vmatprep.subr.bf16.mxu0 0
        %6405 = vmatpush2.bf16.msra.mxu0 0
        %6406 = vmatprep.subr.bf16.mxu0 0
        %6407 = vmatpush2.bf16.msra.mxu0 0
        %6408 = vmatprep.subr.bf16.mxu0 0
        %6409 = vmatpush2.bf16.msra.mxu0 0
        %6410 = vmatprep.subr.bf16.mxu0 0
        %6411 = vmatpush2.bf16.msra.mxu0 0
        %6412 = vmatprep.subr.bf16.mxu0 0
        %6413 = vmatpush2.bf16.msra.mxu0 0
        %6414 = vmatprep.subr.bf16.mxu0 0
        %6415 = vmatpush2.bf16.msra.mxu0 0
        %6416 = vmatprep.subr.bf16.mxu0 0
        %6417 = vmatpush2.bf16.msra.mxu0 0
        %6418 = vmatprep.subr.bf16.mxu0 0
        %6419 = vmatpush2.bf16.msra.mxu0 0
        %6420 = vmatprep.mubr.bf16.mxu0 0
        %6421 = vmatmul.mubr.bf16.gmra.mxu0 %v6386
        %v6422 = vpop.f32.mrf.mxu0
        %v6423 = vadd.f32 %v5639, %v6422
        %v6424 = vpop.f32.mrf.mxu0
        %v6425 = vpop.f32.mrf.mxu0
        %v6426 = vadd.f32 %v5775, %v6425
        %v6427 = vpop.f32.mrf.mxu0
        %6428 = vdwg.mxu0
        %v6431 = vunpack.c.l.b16 %v979
        %v6432 = vunpack.c.l.b16 %v980
        %v6433 = vpack.c.b16 %v6432, %v6431
        %v6436 = vsel %vm1842, %v2208, 0
        %6438 = vmatprep.subr.bf16.mxu0 0
        %6439 = vmatpush1.bf16.msra.mxu0 0
        %6440 = vmatprep.subr.bf16.mxu0 0
        %6441 = vmatpush1.bf16.msra.mxu0 0
        %6442 = vmatprep.subr.bf16.mxu0 0
        %6443 = vmatpush1.bf16.msra.mxu0 0
        %6444 = vmatprep.subr.bf16.mxu0 0
        %6445 = vmatpush1.bf16.msra.mxu0 0
        %6446 = vmatprep.subr.bf16.mxu0 0
        %6447 = vmatpush1.bf16.msra.mxu0 0
        %6448 = vmatprep.subr.bf16.mxu0 0
        %6449 = vmatpush1.bf16.msra.mxu0 0
        %6450 = vmatprep.subr.bf16.mxu0 0
        %6451 = vmatpush1.bf16.msra.mxu0 0
        %6452 = vmatprep.subr.bf16.mxu0 0
        %6453 = vmatpush1.bf16.msra.mxu0 %v6433
        %6454 = vmatprep.subr.bf16.mxu0 0
        %6455 = vmatpush2.bf16.msra.mxu0 0
        %6456 = vmatprep.subr.bf16.mxu0 0
        %6457 = vmatpush2.bf16.msra.mxu0 0
        %6458 = vmatprep.subr.bf16.mxu0 0
        %6459 = vmatpush2.bf16.msra.mxu0 0
        %6460 = vmatprep.subr.bf16.mxu0 0
        %6461 = vmatpush2.bf16.msra.mxu0 0
        %6462 = vmatprep.subr.bf16.mxu0 0
        %6463 = vmatpush2.bf16.msra.mxu0 0
        %6464 = vmatprep.subr.bf16.mxu0 0
        %6465 = vmatpush2.bf16.msra.mxu0 0
        %6466 = vmatprep.subr.bf16.mxu0 0
        %6467 = vmatpush2.bf16.msra.mxu0 0
        %6468 = vmatprep.subr.bf16.mxu0 0
        %6469 = vmatpush2.bf16.msra.mxu0 0
        %6470 = vmatprep.mubr.bf16.mxu0 0
        %6471 = vmatmul.mubr.bf16.gmra.mxu0 %v6436
        %v6472 = vpop.f32.mrf.mxu0
        %v6473 = vadd.f32 %v5640, %v6472
        %v6474 = vpop.f32.mrf.mxu0
        %v6475 = vpop.f32.mrf.mxu0
        %v6476 = vadd.f32 %v5776, %v6475
        %v6477 = vpop.f32.mrf.mxu0
        %6478 = vdwg.mxu0
        %v6481 = vunpack.c.l.b16 %v981
        %v6482 = vunpack.c.l.b16 %v982
        %v6483 = vpack.c.b16 %v6482, %v6481
        %v6486 = vsel %vm1842, %v2209, 0
        %6488 = vmatprep.subr.bf16.mxu0 0
        %6489 = vmatpush1.bf16.msra.mxu0 0
        %6490 = vmatprep.subr.bf16.mxu0 0
        %6491 = vmatpush1.bf16.msra.mxu0 0
        %6492 = vmatprep.subr.bf16.mxu0 0
        %6493 = vmatpush1.bf16.msra.mxu0 0
        %6494 = vmatprep.subr.bf16.mxu0 0
        %6495 = vmatpush1.bf16.msra.mxu0 0
        %6496 = vmatprep.subr.bf16.mxu0 0
        %6497 = vmatpush1.bf16.msra.mxu0 0
        %6498 = vmatprep.subr.bf16.mxu0 0
        %6499 = vmatpush1.bf16.msra.mxu0 0
        %6500 = vmatprep.subr.bf16.mxu0 0
        %6501 = vmatpush1.bf16.msra.mxu0 0
        %6502 = vmatprep.subr.bf16.mxu0 0
        %6503 = vmatpush1.bf16.msra.mxu0 %v6483
        %6504 = vmatprep.subr.bf16.mxu0 0
        %6505 = vmatpush2.bf16.msra.mxu0 0
        %6506 = vmatprep.subr.bf16.mxu0 0
        %6507 = vmatpush2.bf16.msra.mxu0 0
        %6508 = vmatprep.subr.bf16.mxu0 0
        %6509 = vmatpush2.bf16.msra.mxu0 0
        %6510 = vmatprep.subr.bf16.mxu0 0
        %6511 = vmatpush2.bf16.msra.mxu0 0
        %6512 = vmatprep.subr.bf16.mxu0 0
        %6513 = vmatpush2.bf16.msra.mxu0 0
        %6514 = vmatprep.subr.bf16.mxu0 0
        %6515 = vmatpush2.bf16.msra.mxu0 0
        %6516 = vmatprep.subr.bf16.mxu0 0
        %6517 = vmatpush2.bf16.msra.mxu0 0
        %6518 = vmatprep.subr.bf16.mxu0 0
        %6519 = vmatpush2.bf16.msra.mxu0 0
        %6520 = vmatprep.mubr.bf16.mxu0 0
        %6521 = vmatmul.mubr.bf16.gmra.mxu0 %v6486
        %v6522 = vpop.f32.mrf.mxu0
        %v6523 = vadd.f32 %v5641, %v6522
        %v6524 = vpop.f32.mrf.mxu0
        %v6525 = vpop.f32.mrf.mxu0
        %v6526 = vadd.f32 %v5777, %v6525
        %v6527 = vpop.f32.mrf.mxu0
        %6528 = vdwg.mxu0
        %v6531 = vunpack.c.l.b16 %v983
        %v6532 = vunpack.c.l.b16 %v984
        %v6533 = vpack.c.b16 %v6532, %v6531
        %v6536 = vsel %vm1842, %v2210, 0
        %6538 = vmatprep.subr.bf16.mxu0 0
        %6539 = vmatpush1.bf16.msra.mxu0 0
        %6540 = vmatprep.subr.bf16.mxu0 0
        %6541 = vmatpush1.bf16.msra.mxu0 0
        %6542 = vmatprep.subr.bf16.mxu0 0
        %6543 = vmatpush1.bf16.msra.mxu0 0
        %6544 = vmatprep.subr.bf16.mxu0 0
        %6545 = vmatpush1.bf16.msra.mxu0 0
        %6546 = vmatprep.subr.bf16.mxu0 0
        %6547 = vmatpush1.bf16.msra.mxu0 0
        %6548 = vmatprep.subr.bf16.mxu0 0
        %6549 = vmatpush1.bf16.msra.mxu0 0
        %6550 = vmatprep.subr.bf16.mxu0 0
        %6551 = vmatpush1.bf16.msra.mxu0 0
        %6552 = vmatprep.subr.bf16.mxu0 0
        %6553 = vmatpush1.bf16.msra.mxu0 %v6533
        %6554 = vmatprep.subr.bf16.mxu0 0
        %6555 = vmatpush2.bf16.msra.mxu0 0
        %6556 = vmatprep.subr.bf16.mxu0 0
        %6557 = vmatpush2.bf16.msra.mxu0 0
        %6558 = vmatprep.subr.bf16.mxu0 0
        %6559 = vmatpush2.bf16.msra.mxu0 0
        %6560 = vmatprep.subr.bf16.mxu0 0
        %6561 = vmatpush2.bf16.msra.mxu0 0
        %6562 = vmatprep.subr.bf16.mxu0 0
        %6563 = vmatpush2.bf16.msra.mxu0 0
        %6564 = vmatprep.subr.bf16.mxu0 0
        %6565 = vmatpush2.bf16.msra.mxu0 0
        %6566 = vmatprep.subr.bf16.mxu0 0
        %6567 = vmatpush2.bf16.msra.mxu0 0
        %6568 = vmatprep.subr.bf16.mxu0 0
        %6569 = vmatpush2.bf16.msra.mxu0 0
        %6570 = vmatprep.mubr.bf16.mxu0 0
        %6571 = vmatmul.mubr.bf16.gmra.mxu0 %v6536
        %v6572 = vpop.f32.mrf.mxu0
        %v6573 = vadd.f32 %v5642, %v6572
        %v6574 = vpop.f32.mrf.mxu0
        %v6575 = vpop.f32.mrf.mxu0
        %v6576 = vadd.f32 %v5778, %v6575
        %v6577 = vpop.f32.mrf.mxu0
        %6578 = vdwg.mxu0
        %s6579 = sld [smem:[#allocation3]]
        %v6580 = vstv %s6579
        %v6581 = vmul.f32 %v6580, %v5823
        %v6582 = vmul.f32 %v6580, %v5826
        %v6583 = vmul.f32 %v6580, %v5873
        %v6584 = vmul.f32 %v6580, %v5876
        %v6585 = vmul.f32 %v6580, %v5923
        %v6586 = vmul.f32 %v6580, %v5926
        %v6587 = vmul.f32 %v6580, %v5973
        %v6588 = vmul.f32 %v6580, %v5976
        %v6589 = vmul.f32 %v6580, %v6023
        %v6590 = vmul.f32 %v6580, %v6026
        %v6591 = vmul.f32 %v6580, %v6073
        %v6592 = vmul.f32 %v6580, %v6076
        %v6593 = vmul.f32 %v6580, %v6123
        %v6594 = vmul.f32 %v6580, %v6126
        %v6595 = vmul.f32 %v6580, %v6173
        %v6596 = vmul.f32 %v6580, %v6176
        %v6597 = vmul.f32 %v6580, %v6223
        %v6598 = vmul.f32 %v6580, %v6226
        %v6599 = vmul.f32 %v6580, %v6273
        %v6600 = vmul.f32 %v6580, %v6276
        %v6601 = vmul.f32 %v6580, %v6323
        %v6602 = vmul.f32 %v6580, %v6326
        %v6603 = vmul.f32 %v6580, %v6373
        %v6604 = vmul.f32 %v6580, %v6376
        %v6605 = vmul.f32 %v6580, %v6423
        %v6606 = vmul.f32 %v6580, %v6426
        %v6607 = vmul.f32 %v6580, %v6473
        %v6608 = vmul.f32 %v6580, %v6476
        %v6609 = vmul.f32 %v6580, %v6523
        %v6610 = vmul.f32 %v6580, %v6526
        %v6611 = vmul.f32 %v6580, %v6573
        %v6612 = vmul.f32 %v6580, %v6576
        %v6613 = vld [vmem:[%s203] sm:$0xf]
        %v6614 = vld [vmem:[%s203 + $0x4] sm:$0xf]
        %v6615 = vld [vmem:[%s203 + $0x8] sm:$0xf]
        %v6616 = vld [vmem:[%s203 + $0xc] sm:$0xf]
        %v6617 = vld [vmem:[%s203 + $0x10] sm:$0xf]
        %v6618 = vld [vmem:[%s203 + $0x14] sm:$0xf]
        %v6619 = vld [vmem:[%s203 + $0x18] sm:$0xf]
        %v6620 = vld [vmem:[%s203 + $0x1c] sm:$0xf]
        %v6621 = vld [vmem:[%s203 + $0x20] sm:$0xf]
        %v6622 = vld [vmem:[%s203 + $0x24] sm:$0xf]
        %v6623 = vld [vmem:[%s203 + $0x28] sm:$0xf]
        %v6624 = vld [vmem:[%s203 + $0x2c] sm:$0xf]
        %v6625 = vld [vmem:[%s203 + $0x30] sm:$0xf]
        %v6626 = vld [vmem:[%s203 + $0x34] sm:$0xf]
        %v6627 = vld [vmem:[%s203 + $0x38] sm:$0xf]
        %v6628 = vld [vmem:[%s203 + $0x3c] sm:$0xf]
        %v6629 = vld [vmem:[%s203 + $0x40] sm:$0xf]
        %v6630 = vld [vmem:[%s203 + $0x44] sm:$0xf]
        %v6631 = vld [vmem:[%s203 + $0x48] sm:$0xf]
        %v6632 = vld [vmem:[%s203 + $0x4c] sm:$0xf]
        %v6633 = vld [vmem:[%s203 + $0x50] sm:$0xf]
        %v6634 = vld [vmem:[%s203 + $0x54] sm:$0xf]
        %v6635 = vld [vmem:[%s203 + $0x58] sm:$0xf]
        %v6636 = vld [vmem:[%s203 + $0x5c] sm:$0xf]
        %v6637 = vld [vmem:[%s203 + $0x60] sm:$0xf]
        %v6638 = vld [vmem:[%s203 + $0x64] sm:$0xf]
        %v6639 = vld [vmem:[%s203 + $0x68] sm:$0xf]
        %v6640 = vld [vmem:[%s203 + $0x6c] sm:$0xf]
        %v6641 = vld [vmem:[%s203 + $0x70] sm:$0xf]
        %v6642 = vld [vmem:[%s203 + $0x74] sm:$0xf]
        %v6643 = vld [vmem:[%s203 + $0x78] sm:$0xf]
        %v6644 = vld [vmem:[%s203 + $0x7c] sm:$0xf]
        %v6645 = vunpack.c.l.bf16 %v6613
        %v6646 = vunpack.c.l.bf16 %v6614
        %v6647 = vunpack.c.l.bf16 %v6615
        %v6648 = vunpack.c.l.bf16 %v6616
        %v6649 = vunpack.c.l.bf16 %v6617
        %v6650 = vunpack.c.l.bf16 %v6618
        %v6651 = vunpack.c.l.bf16 %v6619
        %v6652 = vunpack.c.l.bf16 %v6620
        %v6653 = vunpack.c.l.bf16 %v6621
        %v6654 = vunpack.c.l.bf16 %v6622
        %v6655 = vunpack.c.l.bf16 %v6623
        %v6656 = vunpack.c.l.bf16 %v6624
        %v6657 = vunpack.c.l.bf16 %v6625
        %v6658 = vunpack.c.l.bf16 %v6626
        %v6659 = vunpack.c.l.bf16 %v6627
        %v6660 = vunpack.c.l.bf16 %v6628
        %v6661 = vunpack.c.l.bf16 %v6629
        %v6662 = vunpack.c.l.bf16 %v6630
        %v6663 = vunpack.c.l.bf16 %v6631
        %v6664 = vunpack.c.l.bf16 %v6632
        %v6665 = vunpack.c.l.bf16 %v6633
        %v6666 = vunpack.c.l.bf16 %v6634
        %v6667 = vunpack.c.l.bf16 %v6635
        %v6668 = vunpack.c.l.bf16 %v6636
        %v6669 = vunpack.c.l.bf16 %v6637
        %v6670 = vunpack.c.l.bf16 %v6638
        %v6671 = vunpack.c.l.bf16 %v6639
        %v6672 = vunpack.c.l.bf16 %v6640
        %v6673 = vunpack.c.l.bf16 %v6641
        %v6674 = vunpack.c.l.bf16 %v6642
        %v6675 = vunpack.c.l.bf16 %v6643
        %v6676 = vunpack.c.l.bf16 %v6644
        %v6677 = vadd.f32 %v6581, %v6645
        %v6678 = vadd.f32 %v6582, %v6646
        %v6679 = vadd.f32 %v6583, %v6647
        %v6680 = vadd.f32 %v6584, %v6648
        %v6681 = vadd.f32 %v6585, %v6649
        %v6682 = vadd.f32 %v6586, %v6650
        %v6683 = vadd.f32 %v6587, %v6651
        %v6684 = vadd.f32 %v6588, %v6652
        %v6685 = vadd.f32 %v6589, %v6653
        %v6686 = vadd.f32 %v6590, %v6654
        %v6687 = vadd.f32 %v6591, %v6655
        %v6688 = vadd.f32 %v6592, %v6656
        %v6689 = vadd.f32 %v6593, %v6657
        %v6690 = vadd.f32 %v6594, %v6658
        %v6691 = vadd.f32 %v6595, %v6659
        %v6692 = vadd.f32 %v6596, %v6660
        %v6693 = vadd.f32 %v6597, %v6661
        %v6694 = vadd.f32 %v6598, %v6662
        %v6695 = vadd.f32 %v6599, %v6663
        %v6696 = vadd.f32 %v6600, %v6664
        %v6697 = vadd.f32 %v6601, %v6665
        %v6698 = vadd.f32 %v6602, %v6666
        %v6699 = vadd.f32 %v6603, %v6667
        %v6700 = vadd.f32 %v6604, %v6668
        %v6701 = vadd.f32 %v6605, %v6669
        %v6702 = vadd.f32 %v6606, %v6670
        %v6703 = vadd.f32 %v6607, %v6671
        %v6704 = vadd.f32 %v6608, %v6672
        %v6705 = vadd.f32 %v6609, %v6673
        %v6706 = vadd.f32 %v6610, %v6674
        %v6707 = vadd.f32 %v6611, %v6675
        %v6708 = vadd.f32 %v6612, %v6676
        %6709 = vst [vmem:[%s231] sm:$0xff] %v6677
        %6710 = vst [vmem:[%s231 + $0x8] sm:$0xff] %v6678
        %6711 = vst [vmem:[%s231 + $0x10] sm:$0xff] %v6679
        %6712 = vst [vmem:[%s231 + $0x18] sm:$0xff] %v6680
        %6713 = vst [vmem:[%s231 + $0x20] sm:$0xff] %v6681
        %6714 = vst [vmem:[%s231 + $0x28] sm:$0xff] %v6682
        %6715 = vst [vmem:[%s231 + $0x30] sm:$0xff] %v6683
        %6716 = vst [vmem:[%s231 + $0x38] sm:$0xff] %v6684
        %6717 = vst [vmem:[%s231 + $0x40] sm:$0xff] %v6685
        %6718 = vst [vmem:[%s231 + $0x48] sm:$0xff] %v6686
        %6719 = vst [vmem:[%s231 + $0x50] sm:$0xff] %v6687
        %6720 = vst [vmem:[%s231 + $0x58] sm:$0xff] %v6688
        %6721 = vst [vmem:[%s231 + $0x60] sm:$0xff] %v6689
        %6722 = vst [vmem:[%s231 + $0x68] sm:$0xff] %v6690
        %6723 = vst [vmem:[%s231 + $0x70] sm:$0xff] %v6691
        %6724 = vst [vmem:[%s231 + $0x78] sm:$0xff] %v6692
        %6725 = vst [vmem:[%s231 + $0x80] sm:$0xff] %v6693
        %6726 = vst [vmem:[%s231 + $0x88] sm:$0xff] %v6694
        %6727 = vst [vmem:[%s231 + $0x90] sm:$0xff] %v6695
        %6728 = vst [vmem:[%s231 + $0x98] sm:$0xff] %v6696
        %6729 = vst [vmem:[%s231 + $0xa0] sm:$0xff] %v6697
        %6730 = vst [vmem:[%s231 + $0xa8] sm:$0xff] %v6698
        %6731 = vst [vmem:[%s231 + $0xb0] sm:$0xff] %v6699
        %6732 = vst [vmem:[%s231 + $0xb8] sm:$0xff] %v6700
        %6733 = vst [vmem:[%s231 + $0xc0] sm:$0xff] %v6701
        %6734 = vst [vmem:[%s231 + $0xc8] sm:$0xff] %v6702
        %6735 = vst [vmem:[%s231 + $0xd0] sm:$0xff] %v6703
        %6736 = vst [vmem:[%s231 + $0xd8] sm:$0xff] %v6704
        %6737 = vst [vmem:[%s231 + $0xe0] sm:$0xff] %v6705
        %6738 = vst [vmem:[%s231 + $0xe8] sm:$0xff] %v6706
        %6739 = vst [vmem:[%s231 + $0xf0] sm:$0xff] %v6707
        %6740 = vst [vmem:[%s231 + $0xf8] sm:$0xff] %v6708
        %s6741 = sand.u32 %s120, 1
        %s6742 = scalar_lea.sflag [#allocation6], %s6741
        %s6743 = sand.u32 %s120, 1
        %s6744 = smul.addr %s6743, 256
        %s6745 = scalar_lea.vmem [#allocation9], %s6744
        // Predicated region
        $region52: #{tpu_custom_call.1} parent=35 // pred_check
          %p6746 = pneg %p130
        $region53: #{tpu_custom_call.1} parent=35 // pred_check_branch
          %6748 = sbr.rel (%p6746) target = $region55
        $region54: #{tpu_custom_call.1} parent=35 // pred_region
          %s6750 = ssub.s32 4096, 4096
          %6751 = vsyncadd %s6742, %s6750
          %s6752 = smul.addr %s23, 32
          %s6753 = smul.addr %s6752, 128
          %s6754 = scalar_lea.hbm %s4, %s6753
          %s6755 = sshll.u32 %s6745, 4
          %s6756 = int_to_ptr.vmem [resolvable:$true] %s6755
          %6761 = dma.vmem_to_hbm [thread:$0]  %s6756, 4096, %s6754, %s6742, 128, 128, 8
        $region55: #{tpu_custom_call.1} parent=35 // pred_fallthru
          _
      $region36: #{tpu_custom_call.1} parent=5 // pred_fallthru
        _
      %p6762 = scmp.le.s32.totalorder 2, %s18
      // Predicated region
      $region56: #{tpu_custom_call.1} parent=5 // pred_check
        %p6763 = pneg %p6762
      $region57: #{tpu_custom_call.1} parent=5 // pred_check_branch
        %6765 = sbr.rel (%p6763) target = $region59
      $region58: #{tpu_custom_call.1} parent=5 // pred_region
        %s6766 = ssub.s32 %s18, 2
        // Predicated region
        $region60: #{tpu_custom_call.1} parent=58 // pred_check
          %p6767 = pneg %p136
        $region61: #{tpu_custom_call.1} parent=58 // pred_check_branch
          %6769 = sbr.rel (%p6767) target = $region63
        $region62: #{tpu_custom_call.1} parent=58 // pred_region
          %s6770 = sand.u32 %s121, 1
          %s6771 = scalar_lea.sflag [#allocation6], %s6770
          %s6772 = sand.u32 %s121, 1
          %s6773 = smul.addr %s6772, 256
          %s6774 = scalar_lea.vmem [#allocation9], %s6773
          %6775 = dma.done %s6771, 4096
        $region63: #{tpu_custom_call.1} parent=58 // pred_fallthru
          _
      $region59: #{tpu_custom_call.1} parent=5 // pred_fallthru
        _
    $region6: #{tpu_custom_call.1} parent=1 // loop_footer
      %s22 = sadd.s32 1, %s18
    $region7: #{tpu_custom_call.1} parent=1 // loop_footer_branch
      %17 = sbr.rel target = $region3
    $region8: #{tpu_custom_call.1} parent=1 // loop_exit
      _
    %6776 = vsyncpa [#allocation5], 1
    %s6777 = scalar_lea.sflag [#allocation5], 1
    %6778 = vsyncpa %s6777, 1
    %6779 = vsyncpa [#allocation8], 1
    %6780 = vsyncpa [#allocation6], 1
    %s6781 = scalar_lea.sflag [#allocation6], 1
    %6782 = vsyncpa %s6781, 1

</llo_original>
